<compile_context>
chip_gen: v7x
topology: tpu7x:2x2x1
jax: 0.10.0
libtpu: 0.0.40
codegen_flags: <defaults>
</compile_context>

<pallas_src>
import functools
import math

import jax
import jax.numpy as jnp
from jax.experimental import pallas as pl
from jax.experimental.pallas import tpu as pltpu

MODEL_DIM = 32
NUM_HEADS = 2
HEAD_DIM = MODEL_DIM // NUM_HEADS
DFF = 64
EPS = 1e-5          # PyTorch LayerNorm default eps
FC_PAD = 128        # lane-dense padded fc_out width
MAX_LEN = 64


def _round_up(x, m):
    return (x + m - 1) // m * m


# ------------------------- in-kernel building blocks -------------------------

def _ln(z, gamma, beta):
    mu = jnp.mean(z, axis=-1, keepdims=True)
    var = jnp.mean(jnp.square(z - mu), axis=-1, keepdims=True)
    return (z - mu) * jax.lax.rsqrt(var + EPS) * gamma + beta


def _embed(ids_ref, table_ref, pe_ref, batch, seq):
    """Embedding gather (one-hot matmul) + sinusoidal positional encoding."""
    m = batch * seq
    vp = table_ref.shape[0]
    ids = ids_ref[...]                                            # (M, 1) int32
    iota = jax.lax.broadcasted_iota(jnp.int32, (m, vp), 1)
    onehot = (ids == iota).astype(jnp.float32)                    # (M, Vp)
    emb = jnp.dot(onehot, table_ref[...], preferred_element_type=jnp.float32)
    pe = pe_ref[0:seq, :]                                         # (S, D) static slice
    return emb + jnp.concatenate([pe] * batch, axis=0)


def _mha_ln(xq, xkv, batch, sq, sk, num_heads, ap, g_ref, b_ref):
    """LayerNorm(xq + MultiheadAttention(xq, xkv)) on full [B*S, D] slabs."""
    d = xq.shape[-1]
    hd = d // num_heads
    scale = 1.0 / math.sqrt(hd)

    q = jnp.dot(xq, ap["wq"][...], preferred_element_type=jnp.float32) + ap["bq"][...]
    kv = jnp.dot(xkv, ap["wkv"][...], preferred_element_type=jnp.float32) + ap["bkv"][...]
    k, v = kv[:, :d], kv[:, d:]

    rows = []
    for b in range(batch):                        # static unroll (tiny B)
        q_b = q[b * sq:(b + 1) * sq, :]
        k_b = k[b * sk:(b + 1) * sk, :]
        v_b = v[b * sk:(b + 1) * sk, :]
        heads = []
        for h in range(num_heads):                # static unroll (tiny H)
            c0, c1 = h * hd, (h + 1) * hd
            s = jax.lax.dot_general(q_b[:, c0:c1], k_b[:, c0:c1],
                                    (((1,), (1,)), ((), ())),
                                    preferred_element_type=jnp.float32) * scale
            mrow = jnp.max(s, axis=-1, keepdims=True)
            e = jnp.exp(s - mrow)
            rinv = pl.reciprocal(jnp.sum(e, axis=-1, keepdims=True), approx=True)
            heads.append(jnp.dot(e, v_b[:, c0:c1],
                                 preferred_element_type=jnp.float32) * rinv)
        rows.append(jnp.concatenate(heads, axis=-1))
    attn = jnp.concatenate(rows, axis=0)          # (B*sq, D)

    # Single output-projection matmul for all batches/heads.
    y = jnp.dot(attn, ap["wo"][...], preferred_element_type=jnp.float32) + ap["bo"][...]
    return _ln(xq + y, g_ref[...], b_ref[...])


def _ffn_ln(x, w1_ref, b1_ref, w2_ref, b2_ref, g_ref, b_ref):
    h = jnp.maximum(
        jnp.dot(x, w1_ref[...], preferred_element_type=jnp.float32) + b1_ref[...], 0.0)
    f = jnp.dot(h, w2_ref[...], preferred_element_type=jnp.float32) + b2_ref[...]
    return _ln(x + f, g_ref[...], b_ref[...])


# ----------------------------- fused kernel -----------------------------

def _fused_kernel(*refs, treedef, batch, s_src, s_tgt, num_heads):
    o_ref = refs[-1]
    p = jax.tree_util.tree_unflatten(treedef, refs[:-1])

    # ----- encoder -----
    mem = _embed(p["src_ids"], p["src_embed"], p["pe"], batch, s_src)
    for lp in p["enc_layers"]:
        mem = _mha_ln(mem, mem, batch, s_src, s_src, num_heads,
                      lp["self_attn"], lp["ln1_g"], lp["ln1_b"])
        mem = _ffn_ln(mem, lp["w1"], lp["b1"], lp["w2"], lp["b2"],
                      lp["ln2_g"], lp["ln2_b"])
    mem = _ln(mem, p["enc_norm_g"][...], p["enc_norm_b"][...])

    # ----- decoder -----
    x = _embed(p["tgt_ids"], p["tgt_embed"], p["pe"], batch, s_tgt)
    for lp in p["dec_layers"]:
        # TODO(synk): reference forward calls nn.Transformer with no tgt_mask,
        # so decoder self-attention is (intentionally) unmasked here.
        x = _mha_ln(x, x, batch, s_tgt, s_tgt, num_heads,
                    lp["self_attn"], lp["ln1_g"], lp["ln1_b"])
        x = _mha_ln(x, mem, batch, s_tgt, s_src, num_heads,
                    lp["cross_attn"], lp["ln2_g"], lp["ln2_b"])
        x = _ffn_ln(x, lp["w1"], lp["b1"], lp["w2"], lp["b2"],
                    lp["ln3_g"], lp["ln3_b"])

    # ----- final decoder LayerNorm fused with fc_out (single lane-dense store) -----
    xn = _ln(x, p["dec_norm_g"][...], p["dec_norm_b"][...])
    o_ref[...] = (jnp.dot(xn, p["fc_w_pad"][...], preferred_element_type=jnp.float32)
                  + p["fc_b_pad"][...])


# ----------------------------- wrapper -----------------------------

def _full_spec(shape):
    nd = len(shape)

    def idx(i):
        return (0,) * nd

    return pl.BlockSpec(shape, idx)


def _rough_cost(params, batch, s_src, s_tgt, leaves):
    d, f = MODEL_DIM, DFF
    ms, mt = batch * s_src, batch * s_tgt
    mm = lambda m, k, n: 2 * m * k * n

    def mha(mq, mk, sq, sk):
        return (mm(mq, d, d) + mm(mk, d, 2 * d) + mm(mq, d, d)
                + batch * NUM_HEADS * (mm(sq, HEAD_DIM, sk) + mm(sq, sk, HEAD_DIM)))

    n_enc, n_dec = len(params["enc_layers"]), len(params["dec_layers"])
    flops = mm(ms, params["src_embed"].shape[0], d) + mm(mt, params["tgt_embed"].shape[0], d)
    flops += n_enc * (mha(ms, ms, s_src, s_src) + mm(ms, d, f) + mm(ms, f, d))
    flops += n_dec * (mha(mt, mt, s_tgt, s_tgt) + mha(mt, ms, s_tgt, s_src)
                      + mm(mt, d, f) + mm(mt, f, d))
    flops += mm(mt, d, FC_PAD)
    trans = (n_enc * batch * NUM_HEADS * s_src * s_src
             + n_dec * batch * NUM_HEADS * (s_tgt * s_tgt + s_tgt * s_src)
             + 4 * (ms + mt))
    byts = 4 * (sum(int(l.size) for l in leaves) + mt * FC_PAD)
    return pl.CostEstimate(flops=int(flops), transcendentals=int(trans),
                           bytes_accessed=int(byts))


def transformer_forward(params, src_ids, tgt_ids, out_dim):
    batch, s_src = src_ids.shape
    _, s_tgt = tgt_ids.shape
    mt = batch * s_tgt

    inputs = dict(params)
    inputs["src_ids"] = src_ids.reshape(batch * s_src, 1).astype(jnp.int32)
    inputs["tgt_ids"] = tgt_ids.reshape(mt, 1).astype(jnp.int32)
    leaves, treedef = jax.tree_util.tree_flatten(inputs)

    kern = functools.partial(_fused_kernel, treedef=treedef, batch=batch,
                             s_src=s_src, s_tgt=s_tgt, num_heads=NUM_HEADS)
    out_pad = pl.pallas_call(
        kern,
        out_shape=jax.ShapeDtypeStruct((mt, FC_PAD), jnp.float32),
        grid=(1,),
        in_specs=[_full_spec(tuple(l.shape)) for l in leaves],
        out_specs=_full_spec((mt, FC_PAD)),
        cost_estimate=_rough_cost(params, batch, s_src, s_tgt, leaves),
        compiler_params=pltpu.CompilerParams(
            dimension_semantics=("arbitrary",),
            vmem_limit_bytes=32 * 1024 * 1024),
    )(*leaves)

    # Padded slab sliced exactly once, at the very end.
    return out_pad[:, :out_dim].reshape(batch, s_tgt, out_dim)


# ----------------------------- parameter init -----------------------------

def make_positional_encoding(max_len, d_model):
    position = jnp.arange(max_len, dtype=jnp.float32)[:, None]
    div_term = jnp.exp(jnp.arange(0, d_model, 2, dtype=jnp.float32)
                       * (-math.log(10000.0) / d_model))
    pe = jnp.zeros((max_len, d_model), jnp.float32)
    pe = pe.at[:, 0::2].set(jnp.sin(position * div_term))
    pe = pe.at[:, 1::2].set(jnp.cos(position * div_term))
    return pe


def init_params(key, vocab_in, vocab_out, num_enc=1, num_dec=1, max_len=MAX_LEN):
    keys = iter(jax.random.split(key, 128))

    def dense(shape):
        return 0.02 * jax.random.normal(next(keys), shape, jnp.float32)

    def padded_table(vocab):
        vp = _round_up(vocab, 8)
        return jnp.zeros((vp, MODEL_DIM), jnp.float32).at[:vocab].set(
            dense((vocab, MODEL_DIM)))

    def attn_params():
        # Q separate (so the same block serves self- and cross-attention), K/V packed.
        return dict(
            wq=dense((MODEL_DIM, MODEL_DIM)), bq=jnp.zeros((1, MODEL_DIM), jnp.float32),
            wkv=dense((MODEL_DIM, 2 * MODEL_DIM)),
            bkv=jnp.zeros((1, 2 * MODEL_DIM), jnp.float32),
            wo=dense((MODEL_DIM, MODEL_DIM)), bo=jnp.zeros((1, MODEL_DIM), jnp.float32),
        )

    ones = lambda: jnp.ones((1, MODEL_DIM), jnp.float32)
    zeros = lambda: jnp.zeros((1, MODEL_DIM), jnp.float32)

    def enc_layer_params():
        return dict(
            self_attn=attn_params(),
            w1=dense((MODEL_DIM, DFF)), b1=jnp.zeros((1, DFF), jnp.float32),
            w2=dense((DFF, MODEL_DIM)), b2=zeros(),
            ln1_g=ones(), ln1_b=zeros(), ln2_g=ones(), ln2_b=zeros(),
        )

    def dec_layer_params():
        return dict(
            self_attn=attn_params(), cross_attn=attn_params(),
            w1=dense((MODEL_DIM, DFF)), b1=jnp.zeros((1, DFF), jnp.float32),
            w2=dense((DFF, MODEL_DIM)), b2=zeros(),
            ln1_g=ones(), ln1_b=zeros(), ln2_g=ones(), ln2_b=zeros(),
            ln3_g=ones(), ln3_b=zeros(),
        )

    # fc_out pre-padded to a lane-dense 128-wide slab (built ONCE, not per forward).
    fc_w_pad = jnp.zeros((MODEL_DIM, FC_PAD), jnp.float32).at[:, :vocab_out].set(
        dense((MODEL_DIM, vocab_out)))
    fc_b_pad = jnp.zeros((1, FC_PAD), jnp.float32)

    return dict(
        src_embed=padded_table(vocab_in),
        tgt_embed=padded_table(vocab_out),
        pe=make_positional_encoding(max_len, MODEL_DIM),
        enc_layers=[enc_layer_params() for _ in range(num_enc)],
        dec_layers=[dec_layer_params() for _ in range(num_dec)],
        enc_norm_g=ones(), enc_norm_b=zeros(),
        dec_norm_g=ones(), dec_norm_b=zeros(),
        fc_w_pad=fc_w_pad, fc_b_pad=fc_b_pad,
    )


# ----------------------------- main -----------------------------

if __name__ == "__main__":
    VOCAB_IN = 10    # input_dim
    VOCAB_OUT = 10   # output_dim (defaults to input_dim)
    B, S_SRC, S_TGT = 2, 8, 8

    key = jax.random.PRNGKey(0)
    k_param, k_src, k_tgt = jax.random.split(key, 3)

    params = init_params(k_param, VOCAB_IN, VOCAB_OUT, num_enc=1, num_dec=1)
    src_ids = jax.random.randint(k_src, (B, S_SRC), 0, VOCAB_IN, dtype=jnp.int32)
    tgt_ids = jax.random.randint(k_tgt, (B, S_TGT), 0, VOCAB_OUT, dtype=jnp.int32)

    fwd = jax.jit(functools.partial(transformer_forward, out_dim=VOCAB_OUT))
    out = jax.block_until_ready(fwd(params, src_ids, tgt_ids))

    assert out.shape == (B, S_TGT, VOCAB_OUT), out.shape
    assert bool(jnp.all(jnp.isfinite(out)))
    print("KERNEL_OK")
</pallas_src>

<mosaic_0001>
module attributes {stable_mosaic.version = 11 : i64} {
  func.func @_fused_kernel(%arg0: i32, %arg1: memref<1x64xf32, #tpu.memory_space<vmem>>, %arg2: memref<1x32xf32, #tpu.memory_space<vmem>>, %arg3: memref<1x64xf32, #tpu.memory_space<vmem>>, %arg4: memref<1x32xf32, #tpu.memory_space<vmem>>, %arg5: memref<1x32xf32, #tpu.memory_space<vmem>>, %arg6: memref<32x64xf32, #tpu.memory_space<vmem>>, %arg7: memref<32x32xf32, #tpu.memory_space<vmem>>, %arg8: memref<32x32xf32, #tpu.memory_space<vmem>>, %arg9: memref<1x32xf32, #tpu.memory_space<vmem>>, %arg10: memref<1x32xf32, #tpu.memory_space<vmem>>, %arg11: memref<1x32xf32, #tpu.memory_space<vmem>>, %arg12: memref<1x32xf32, #tpu.memory_space<vmem>>, %arg13: memref<1x32xf32, #tpu.memory_space<vmem>>, %arg14: memref<1x32xf32, #tpu.memory_space<vmem>>, %arg15: memref<1x64xf32, #tpu.memory_space<vmem>>, %arg16: memref<1x32xf32, #tpu.memory_space<vmem>>, %arg17: memref<1x32xf32, #tpu.memory_space<vmem>>, %arg18: memref<32x64xf32, #tpu.memory_space<vmem>>, %arg19: memref<32x32xf32, #tpu.memory_space<vmem>>, %arg20: memref<32x32xf32, #tpu.memory_space<vmem>>, %arg21: memref<32x64xf32, #tpu.memory_space<vmem>>, %arg22: memref<64x32xf32, #tpu.memory_space<vmem>>, %arg23: memref<1x32xf32, #tpu.memory_space<vmem>>, %arg24: memref<1x32xf32, #tpu.memory_space<vmem>>, %arg25: memref<1x64xf32, #tpu.memory_space<vmem>>, %arg26: memref<1x32xf32, #tpu.memory_space<vmem>>, %arg27: memref<1x32xf32, #tpu.memory_space<vmem>>, %arg28: memref<1x32xf32, #tpu.memory_space<vmem>>, %arg29: memref<1x32xf32, #tpu.memory_space<vmem>>, %arg30: memref<1x32xf32, #tpu.memory_space<vmem>>, %arg31: memref<1x64xf32, #tpu.memory_space<vmem>>, %arg32: memref<1x32xf32, #tpu.memory_space<vmem>>, %arg33: memref<1x32xf32, #tpu.memory_space<vmem>>, %arg34: memref<32x64xf32, #tpu.memory_space<vmem>>, %arg35: memref<32x32xf32, #tpu.memory_space<vmem>>, %arg36: memref<32x32xf32, #tpu.memory_space<vmem>>, %arg37: memref<32x64xf32, #tpu.memory_space<vmem>>, %arg38: memref<64x32xf32, #tpu.memory_space<vmem>>, %arg39: memref<1x32xf32, #tpu.memory_space<vmem>>, %arg40: memref<1x32xf32, #tpu.memory_space<vmem>>, %arg41: memref<1x128xf32, #tpu.memory_space<vmem>>, %arg42: memref<32x128xf32, #tpu.memory_space<vmem>>, %arg43: memref<64x32xf32, #tpu.memory_space<vmem>>, %arg44: memref<16x32xf32, #tpu.memory_space<vmem>>, %arg45: memref<16x1xi32, #tpu.memory_space<vmem>>, %arg46: memref<16x32xf32, #tpu.memory_space<vmem>>, %arg47: memref<16x1xi32, #tpu.memory_space<vmem>>, %arg48: memref<16x128xf32, #tpu.memory_space<vmem>>) attributes {dimension_semantics = [#tpu.dimension_semantics<arbitrary>], iteration_bounds = array<i64: 1>, scalar_prefetch = 0 : i64, scratch_operands = 0 : i64, tpu.core_type = #tpu.core_type<tc>, window_params = [{pipeline_mode = #tpu.pipeline_mode<synchronous>, transform_indices = @transform_0, window_bounds = array<i64: 1, 64>}, {pipeline_mode = #tpu.pipeline_mode<synchronous>, transform_indices = @transform_1, window_bounds = array<i64: 1, 32>}, {pipeline_mode = #tpu.pipeline_mode<synchronous>, transform_indices = @transform_2, window_bounds = array<i64: 1, 64>}, {pipeline_mode = #tpu.pipeline_mode<synchronous>, transform_indices = @transform_3, window_bounds = array<i64: 1, 32>}, {pipeline_mode = #tpu.pipeline_mode<synchronous>, transform_indices = @transform_4, window_bounds = array<i64: 1, 32>}, {pipeline_mode = #tpu.pipeline_mode<synchronous>, transform_indices = @transform_5, window_bounds = array<i64: 32, 64>}, {pipeline_mode = #tpu.pipeline_mode<synchronous>, transform_indices = @transform_6, window_bounds = array<i64: 32, 32>}, {pipeline_mode = #tpu.pipeline_mode<synchronous>, transform_indices = @transform_7, window_bounds = array<i64: 32, 32>}, {pipeline_mode = #tpu.pipeline_mode<synchronous>, transform_indices = @transform_8, window_bounds = array<i64: 1, 32>}, {pipeline_mode = #tpu.pipeline_mode<synchronous>, transform_indices = @transform_9, window_bounds = array<i64: 1, 32>}, {pipeline_mode = #tpu.pipeline_mode<synchronous>, transform_indices = @transform_10, window_bounds = array<i64: 1, 32>}, {pipeline_mode = #tpu.pipeline_mode<synchronous>, transform_indices = @transform_11, window_bounds = array<i64: 1, 32>}, {pipeline_mode = #tpu.pipeline_mode<synchronous>, transform_indices = @transform_12, window_bounds = array<i64: 1, 32>}, {pipeline_mode = #tpu.pipeline_mode<synchronous>, transform_indices = @transform_13, window_bounds = array<i64: 1, 32>}, {pipeline_mode = #tpu.pipeline_mode<synchronous>, transform_indices = @transform_14, window_bounds = array<i64: 1, 64>}, {pipeline_mode = #tpu.pipeline_mode<synchronous>, transform_indices = @transform_15, window_bounds = array<i64: 1, 32>}, {pipeline_mode = #tpu.pipeline_mode<synchronous>, transform_indices = @transform_16, window_bounds = array<i64: 1, 32>}, {pipeline_mode = #tpu.pipeline_mode<synchronous>, transform_indices = @transform_17, window_bounds = array<i64: 32, 64>}, {pipeline_mode = #tpu.pipeline_mode<synchronous>, transform_indices = @transform_18, window_bounds = array<i64: 32, 32>}, {pipeline_mode = #tpu.pipeline_mode<synchronous>, transform_indices = @transform_19, window_bounds = array<i64: 32, 32>}, {pipeline_mode = #tpu.pipeline_mode<synchronous>, transform_indices = @transform_20, window_bounds = array<i64: 32, 64>}, {pipeline_mode = #tpu.pipeline_mode<synchronous>, transform_indices = @transform_21, window_bounds = array<i64: 64, 32>}, {pipeline_mode = #tpu.pipeline_mode<synchronous>, transform_indices = @transform_22, window_bounds = array<i64: 1, 32>}, {pipeline_mode = #tpu.pipeline_mode<synchronous>, transform_indices = @transform_23, window_bounds = array<i64: 1, 32>}, {pipeline_mode = #tpu.pipeline_mode<synchronous>, transform_indices = @transform_24, window_bounds = array<i64: 1, 64>}, {pipeline_mode = #tpu.pipeline_mode<synchronous>, transform_indices = @transform_25, window_bounds = array<i64: 1, 32>}, {pipeline_mode = #tpu.pipeline_mode<synchronous>, transform_indices = @transform_26, window_bounds = array<i64: 1, 32>}, {pipeline_mode = #tpu.pipeline_mode<synchronous>, transform_indices = @transform_27, window_bounds = array<i64: 1, 32>}, {pipeline_mode = #tpu.pipeline_mode<synchronous>, transform_indices = @transform_28, window_bounds = array<i64: 1, 32>}, {pipeline_mode = #tpu.pipeline_mode<synchronous>, transform_indices = @transform_29, window_bounds = array<i64: 1, 32>}, {pipeline_mode = #tpu.pipeline_mode<synchronous>, transform_indices = @transform_30, window_bounds = array<i64: 1, 64>}, {pipeline_mode = #tpu.pipeline_mode<synchronous>, transform_indices = @transform_31, window_bounds = array<i64: 1, 32>}, {pipeline_mode = #tpu.pipeline_mode<synchronous>, transform_indices = @transform_32, window_bounds = array<i64: 1, 32>}, {pipeline_mode = #tpu.pipeline_mode<synchronous>, transform_indices = @transform_33, window_bounds = array<i64: 32, 64>}, {pipeline_mode = #tpu.pipeline_mode<synchronous>, transform_indices = @transform_34, window_bounds = array<i64: 32, 32>}, {pipeline_mode = #tpu.pipeline_mode<synchronous>, transform_indices = @transform_35, window_bounds = array<i64: 32, 32>}, {pipeline_mode = #tpu.pipeline_mode<synchronous>, transform_indices = @transform_36, window_bounds = array<i64: 32, 64>}, {pipeline_mode = #tpu.pipeline_mode<synchronous>, transform_indices = @transform_37, window_bounds = array<i64: 64, 32>}, {pipeline_mode = #tpu.pipeline_mode<synchronous>, transform_indices = @transform_38, window_bounds = array<i64: 1, 32>}, {pipeline_mode = #tpu.pipeline_mode<synchronous>, transform_indices = @transform_39, window_bounds = array<i64: 1, 32>}, {pipeline_mode = #tpu.pipeline_mode<synchronous>, transform_indices = @transform_40, window_bounds = array<i64: 1, 128>}, {pipeline_mode = #tpu.pipeline_mode<synchronous>, transform_indices = @transform_41, window_bounds = array<i64: 32, 128>}, {pipeline_mode = #tpu.pipeline_mode<synchronous>, transform_indices = @transform_42, window_bounds = array<i64: 64, 32>}, {pipeline_mode = #tpu.pipeline_mode<synchronous>, transform_indices = @transform_43, window_bounds = array<i64: 16, 32>}, {pipeline_mode = #tpu.pipeline_mode<synchronous>, transform_indices = @transform_44, window_bounds = array<i64: 16, 1>}, {pipeline_mode = #tpu.pipeline_mode<synchronous>, transform_indices = @transform_45, window_bounds = array<i64: 16, 32>}, {pipeline_mode = #tpu.pipeline_mode<synchronous>, transform_indices = @transform_46, window_bounds = array<i64: 16, 1>}, {pipeline_mode = #tpu.pipeline_mode<synchronous>, transform_indices = @transform_47, window_bounds = array<i64: 16, 128>}]} {
    %c0 = arith.constant 0 : index
    %c0_0 = arith.constant 0 : index
    %0 = vector.load %arg45[%c0, %c0_0] : memref<16x1xi32, #tpu.memory_space<vmem>>, vector<16x1xi32>
    %1 = tpu.iota {dimensions = array<i32: 1>} : vector<16x16xi32>
    %2 = vector.broadcast %0 : vector<16x1xi32> to vector<16x16xi32>
    %3 = arith.cmpi eq, %2, %1 : vector<16x16xi32>
    %4 = arith.extui %3 : vector<16x16xi1> to vector<16x16xi32>
    %5 = arith.sitofp %4 : vector<16x16xi32> to vector<16x16xf32>
    %c0_1 = arith.constant 0 : index
    %c0_2 = arith.constant 0 : index
    %6 = vector.load %arg44[%c0_1, %c0_2] : memref<16x32xf32, #tpu.memory_space<vmem>>, vector<16x32xf32>
    %cst = arith.constant dense<0.000000e+00> : vector<16x32xf32>
    %7 = tpu.matmul %5, %6, %cst {dimension_numbers = #tpu.dot_dimension_numbers<[1], [0], [0], [1], [0, 0, 1, 1], [], []>} : vector<16x16xf32>, vector<16x32xf32>, vector<16x32xf32> -> vector<16x32xf32>
    %c0_3 = arith.constant 0 : index
    %c0_4 = arith.constant 0 : index
    %8 = vector.load %arg43[%c0_3, %c0_4] : memref<64x32xf32, #tpu.memory_space<vmem>>, vector<8x32xf32>
    %9 = tpu.concatenate %8, %8 in 0 : vector<8x32xf32>, vector<8x32xf32> -> vector<16x32xf32>
    %10 = arith.addf %7, %9 : vector<16x32xf32>
    %c0_5 = arith.constant 0 : index
    %c0_6 = arith.constant 0 : index
    %11 = vector.load %arg36[%c0_5, %c0_6] : memref<32x32xf32, #tpu.memory_space<vmem>>, vector<32x32xf32>
    %cst_7 = arith.constant dense<0.000000e+00> : vector<16x32xf32>
    %12 = tpu.matmul %10, %11, %cst_7 {dimension_numbers = #tpu.dot_dimension_numbers<[1], [0], [0], [1], [0, 0, 1, 1], [], []>} : vector<16x32xf32>, vector<32x32xf32>, vector<16x32xf32> -> vector<16x32xf32>
    %c0_8 = arith.constant 0 : index
    %c0_9 = arith.constant 0 : index
    %13 = vector.load %arg33[%c0_8, %c0_9] : memref<1x32xf32, #tpu.memory_space<vmem>>, vector<1x32xf32>
    %14 = vector.broadcast %13 : vector<1x32xf32> to vector<16x32xf32>
    %15 = arith.addf %12, %14 : vector<16x32xf32>
    %c0_10 = arith.constant 0 : index
    %c0_11 = arith.constant 0 : index
    %16 = vector.load %arg34[%c0_10, %c0_11] : memref<32x64xf32, #tpu.memory_space<vmem>>, vector<32x64xf32>
    %cst_12 = arith.constant dense<0.000000e+00> : vector<16x64xf32>
    %17 = tpu.matmul %10, %16, %cst_12 {dimension_numbers = #tpu.dot_dimension_numbers<[1], [0], [0], [1], [0, 0, 1, 1], [], []>} : vector<16x32xf32>, vector<32x64xf32>, vector<16x64xf32> -> vector<16x64xf32>
    %c0_13 = arith.constant 0 : index
    %c0_14 = arith.constant 0 : index
    %18 = vector.load %arg31[%c0_13, %c0_14] : memref<1x64xf32, #tpu.memory_space<vmem>>, vector<1x64xf32>
    %19 = vector.broadcast %18 : vector<1x64xf32> to vector<16x64xf32>
    %20 = arith.addf %17, %19 : vector<16x64xf32>
    %21 = vector.extract_strided_slice %20 {offsets = [0, 0], sizes = [16, 32], strides = [1, 1]} : vector<16x64xf32> to vector<16x32xf32>
    %22 = vector.extract_strided_slice %20 {offsets = [0, 32], sizes = [16, 32], strides = [1, 1]} : vector<16x64xf32> to vector<16x32xf32>
    %23 = vector.extract_strided_slice %15 {offsets = [0, 0], sizes = [8, 32], strides = [1, 1]} : vector<16x32xf32> to vector<8x32xf32>
    %24 = vector.extract_strided_slice %21 {offsets = [0, 0], sizes = [8, 32], strides = [1, 1]} : vector<16x32xf32> to vector<8x32xf32>
    %25 = vector.extract_strided_slice %22 {offsets = [0, 0], sizes = [8, 32], strides = [1, 1]} : vector<16x32xf32> to vector<8x32xf32>
    %26 = vector.extract_strided_slice %23 {offsets = [0, 0], sizes = [8, 16], strides = [1, 1]} : vector<8x32xf32> to vector<8x16xf32>
    %27 = vector.extract_strided_slice %24 {offsets = [0, 0], sizes = [8, 16], strides = [1, 1]} : vector<8x32xf32> to vector<8x16xf32>
    %cst_15 = arith.constant dense<0.000000e+00> : vector<8x8xf32>
    %28 = tpu.matmul %26, %27, %cst_15 {dimension_numbers = #tpu.dot_dimension_numbers<[1], [1], [0], [0], [0, 0, 1, 0], [], []>} : vector<8x16xf32>, vector<8x16xf32>, vector<8x8xf32> -> vector<8x8xf32>
    %cst_16 = arith.constant 2.500000e-01 : f32
    %29 = vector.broadcast %cst_16 : f32 to vector<8x8xf32>
    %30 = arith.mulf %28, %29 : vector<8x8xf32>
    %cst_17 = arith.constant dense<0xFF800000> : vector<8xf32>
    %31 = vector.multi_reduction <maximumf>, %30, %cst_17 [1] : vector<8x8xf32> to vector<8xf32>
    %32 = vector.shape_cast %31 : vector<8xf32> to vector<8x1xf32>
    %33 = vector.broadcast %32 : vector<8x1xf32> to vector<8x8xf32>
    %34 = arith.subf %30, %33 : vector<8x8xf32>
    %35 = math.exp %34 : vector<8x8xf32>
    %cst_18 = arith.constant dense<0.000000e+00> : vector<8xf32>
    %36 = vector.multi_reduction <add>, %35, %cst_18 [1] : vector<8x8xf32> to vector<8xf32>
    %37 = vector.shape_cast %36 : vector<8xf32> to vector<8x1xf32>
    %38 = tpu.reciprocal %37 {approx = true} : vector<8x1xf32> -> vector<8x1xf32>
    %39 = vector.extract_strided_slice %25 {offsets = [0, 0], sizes = [8, 16], strides = [1, 1]} : vector<8x32xf32> to vector<8x16xf32>
    %cst_19 = arith.constant dense<0.000000e+00> : vector<8x16xf32>
    %40 = tpu.matmul %35, %39, %cst_19 {dimension_numbers = #tpu.dot_dimension_numbers<[1], [0], [0], [1], [0, 0, 1, 1], [], []>} : vector<8x8xf32>, vector<8x16xf32>, vector<8x16xf32> -> vector<8x16xf32>
    %41 = vector.broadcast %38 : vector<8x1xf32> to vector<8x16xf32>
    %42 = arith.mulf %40, %41 : vector<8x16xf32>
    %43 = vector.extract_strided_slice %23 {offsets = [0, 16], sizes = [8, 16], strides = [1, 1]} : vector<8x32xf32> to vector<8x16xf32>
    %44 = vector.extract_strided_slice %24 {offsets = [0, 16], sizes = [8, 16], strides = [1, 1]} : vector<8x32xf32> to vector<8x16xf32>
    %cst_20 = arith.constant dense<0.000000e+00> : vector<8x8xf32>
    %45 = tpu.matmul %43, %44, %cst_20 {dimension_numbers = #tpu.dot_dimension_numbers<[1], [1], [0], [0], [0, 0, 1, 0], [], []>} : vector<8x16xf32>, vector<8x16xf32>, vector<8x8xf32> -> vector<8x8xf32>
    %cst_21 = arith.constant 2.500000e-01 : f32
    %46 = vector.broadcast %cst_21 : f32 to vector<8x8xf32>
    %47 = arith.mulf %45, %46 : vector<8x8xf32>
    %cst_22 = arith.constant dense<0xFF800000> : vector<8xf32>
    %48 = vector.multi_reduction <maximumf>, %47, %cst_22 [1] : vector<8x8xf32> to vector<8xf32>
    %49 = vector.shape_cast %48 : vector<8xf32> to vector<8x1xf32>
    %50 = vector.broadcast %49 : vector<8x1xf32> to vector<8x8xf32>
    %51 = arith.subf %47, %50 : vector<8x8xf32>
    %52 = math.exp %51 : vector<8x8xf32>
    %cst_23 = arith.constant dense<0.000000e+00> : vector<8xf32>
    %53 = vector.multi_reduction <add>, %52, %cst_23 [1] : vector<8x8xf32> to vector<8xf32>
    %54 = vector.shape_cast %53 : vector<8xf32> to vector<8x1xf32>
    %55 = tpu.reciprocal %54 {approx = true} : vector<8x1xf32> -> vector<8x1xf32>
    %56 = vector.extract_strided_slice %25 {offsets = [0, 16], sizes = [8, 16], strides = [1, 1]} : vector<8x32xf32> to vector<8x16xf32>
    %cst_24 = arith.constant dense<0.000000e+00> : vector<8x16xf32>
    %57 = tpu.matmul %52, %56, %cst_24 {dimension_numbers = #tpu.dot_dimension_numbers<[1], [0], [0], [1], [0, 0, 1, 1], [], []>} : vector<8x8xf32>, vector<8x16xf32>, vector<8x16xf32> -> vector<8x16xf32>
    %58 = vector.broadcast %55 : vector<8x1xf32> to vector<8x16xf32>
    %59 = arith.mulf %57, %58 : vector<8x16xf32>
    %60 = tpu.concatenate %42, %59 in 1 : vector<8x16xf32>, vector<8x16xf32> -> vector<8x32xf32>
    %61 = vector.extract_strided_slice %15 {offsets = [8, 0], sizes = [8, 32], strides = [1, 1]} : vector<16x32xf32> to vector<8x32xf32>
    %62 = vector.extract_strided_slice %21 {offsets = [8, 0], sizes = [8, 32], strides = [1, 1]} : vector<16x32xf32> to vector<8x32xf32>
    %63 = vector.extract_strided_slice %22 {offsets = [8, 0], sizes = [8, 32], strides = [1, 1]} : vector<16x32xf32> to vector<8x32xf32>
    %64 = vector.extract_strided_slice %61 {offsets = [0, 0], sizes = [8, 16], strides = [1, 1]} : vector<8x32xf32> to vector<8x16xf32>
    %65 = vector.extract_strided_slice %62 {offsets = [0, 0], sizes = [8, 16], strides = [1, 1]} : vector<8x32xf32> to vector<8x16xf32>
    %cst_25 = arith.constant dense<0.000000e+00> : vector<8x8xf32>
    %66 = tpu.matmul %64, %65, %cst_25 {dimension_numbers = #tpu.dot_dimension_numbers<[1], [1], [0], [0], [0, 0, 1, 0], [], []>} : vector<8x16xf32>, vector<8x16xf32>, vector<8x8xf32> -> vector<8x8xf32>
    %cst_26 = arith.constant 2.500000e-01 : f32
    %67 = vector.broadcast %cst_26 : f32 to vector<8x8xf32>
    %68 = arith.mulf %66, %67 : vector<8x8xf32>
    %cst_27 = arith.constant dense<0xFF800000> : vector<8xf32>
    %69 = vector.multi_reduction <maximumf>, %68, %cst_27 [1] : vector<8x8xf32> to vector<8xf32>
    %70 = vector.shape_cast %69 : vector<8xf32> to vector<8x1xf32>
    %71 = vector.broadcast %70 : vector<8x1xf32> to vector<8x8xf32>
    %72 = arith.subf %68, %71 : vector<8x8xf32>
    %73 = math.exp %72 : vector<8x8xf32>
    %cst_28 = arith.constant dense<0.000000e+00> : vector<8xf32>
    %74 = vector.multi_reduction <add>, %73, %cst_28 [1] : vector<8x8xf32> to vector<8xf32>
    %75 = vector.shape_cast %74 : vector<8xf32> to vector<8x1xf32>
    %76 = tpu.reciprocal %75 {approx = true} : vector<8x1xf32> -> vector<8x1xf32>
    %77 = vector.extract_strided_slice %63 {offsets = [0, 0], sizes = [8, 16], strides = [1, 1]} : vector<8x32xf32> to vector<8x16xf32>
    %cst_29 = arith.constant dense<0.000000e+00> : vector<8x16xf32>
    %78 = tpu.matmul %73, %77, %cst_29 {dimension_numbers = #tpu.dot_dimension_numbers<[1], [0], [0], [1], [0, 0, 1, 1], [], []>} : vector<8x8xf32>, vector<8x16xf32>, vector<8x16xf32> -> vector<8x16xf32>
    %79 = vector.broadcast %76 : vector<8x1xf32> to vector<8x16xf32>
    %80 = arith.mulf %78, %79 : vector<8x16xf32>
    %81 = vector.extract_strided_slice %61 {offsets = [0, 16], sizes = [8, 16], strides = [1, 1]} : vector<8x32xf32> to vector<8x16xf32>
    %82 = vector.extract_strided_slice %62 {offsets = [0, 16], sizes = [8, 16], strides = [1, 1]} : vector<8x32xf32> to vector<8x16xf32>
    %cst_30 = arith.constant dense<0.000000e+00> : vector<8x8xf32>
    %83 = tpu.matmul %81, %82, %cst_30 {dimension_numbers = #tpu.dot_dimension_numbers<[1], [1], [0], [0], [0, 0, 1, 0], [], []>} : vector<8x16xf32>, vector<8x16xf32>, vector<8x8xf32> -> vector<8x8xf32>
    %cst_31 = arith.constant 2.500000e-01 : f32
    %84 = vector.broadcast %cst_31 : f32 to vector<8x8xf32>
    %85 = arith.mulf %83, %84 : vector<8x8xf32>
    %cst_32 = arith.constant dense<0xFF800000> : vector<8xf32>
    %86 = vector.multi_reduction <maximumf>, %85, %cst_32 [1] : vector<8x8xf32> to vector<8xf32>
    %87 = vector.shape_cast %86 : vector<8xf32> to vector<8x1xf32>
    %88 = vector.broadcast %87 : vector<8x1xf32> to vector<8x8xf32>
    %89 = arith.subf %85, %88 : vector<8x8xf32>
    %90 = math.exp %89 : vector<8x8xf32>
    %cst_33 = arith.constant dense<0.000000e+00> : vector<8xf32>
    %91 = vector.multi_reduction <add>, %90, %cst_33 [1] : vector<8x8xf32> to vector<8xf32>
    %92 = vector.shape_cast %91 : vector<8xf32> to vector<8x1xf32>
    %93 = tpu.reciprocal %92 {approx = true} : vector<8x1xf32> -> vector<8x1xf32>
    %94 = vector.extract_strided_slice %63 {offsets = [0, 16], sizes = [8, 16], strides = [1, 1]} : vector<8x32xf32> to vector<8x16xf32>
    %cst_34 = arith.constant dense<0.000000e+00> : vector<8x16xf32>
    %95 = tpu.matmul %90, %94, %cst_34 {dimension_numbers = #tpu.dot_dimension_numbers<[1], [0], [0], [1], [0, 0, 1, 1], [], []>} : vector<8x8xf32>, vector<8x16xf32>, vector<8x16xf32> -> vector<8x16xf32>
    %96 = vector.broadcast %93 : vector<8x1xf32> to vector<8x16xf32>
    %97 = arith.mulf %95, %96 : vector<8x16xf32>
    %98 = tpu.concatenate %80, %97 in 1 : vector<8x16xf32>, vector<8x16xf32> -> vector<8x32xf32>
    %99 = tpu.concatenate %60, %98 in 0 : vector<8x32xf32>, vector<8x32xf32> -> vector<16x32xf32>
    %c0_35 = arith.constant 0 : index
    %c0_36 = arith.constant 0 : index
    %100 = vector.load %arg35[%c0_35, %c0_36] : memref<32x32xf32, #tpu.memory_space<vmem>>, vector<32x32xf32>
    %cst_37 = arith.constant dense<0.000000e+00> : vector<16x32xf32>
    %101 = tpu.matmul %99, %100, %cst_37 {dimension_numbers = #tpu.dot_dimension_numbers<[1], [0], [0], [1], [0, 0, 1, 1], [], []>} : vector<16x32xf32>, vector<32x32xf32>, vector<16x32xf32> -> vector<16x32xf32>
    %c0_38 = arith.constant 0 : index
    %c0_39 = arith.constant 0 : index
    %102 = vector.load %arg32[%c0_38, %c0_39] : memref<1x32xf32, #tpu.memory_space<vmem>>, vector<1x32xf32>
    %103 = vector.broadcast %102 : vector<1x32xf32> to vector<16x32xf32>
    %104 = arith.addf %101, %103 : vector<16x32xf32>
    %105 = arith.addf %10, %104 : vector<16x32xf32>
    %c0_40 = arith.constant 0 : index
    %c0_41 = arith.constant 0 : index
    %106 = vector.load %arg28[%c0_40, %c0_41] : memref<1x32xf32, #tpu.memory_space<vmem>>, vector<1x32xf32>
    %c0_42 = arith.constant 0 : index
    %c0_43 = arith.constant 0 : index
    %107 = vector.load %arg27[%c0_42, %c0_43] : memref<1x32xf32, #tpu.memory_space<vmem>>, vector<1x32xf32>
    %cst_44 = arith.constant dense<0.000000e+00> : vector<16xf32>
    %108 = vector.multi_reduction <add>, %105, %cst_44 [1] : vector<16x32xf32> to vector<16xf32>
    %109 = vector.shape_cast %108 : vector<16xf32> to vector<16x1xf32>
    %cst_45 = arith.constant 3.200000e+01 : f32
    %110 = vector.broadcast %cst_45 : f32 to vector<16x1xf32>
    %111 = arith.divf %109, %110 : vector<16x1xf32>
    %112 = vector.broadcast %111 : vector<16x1xf32> to vector<16x32xf32>
    %113 = arith.subf %105, %112 : vector<16x32xf32>
    %114 = arith.mulf %113, %113 : vector<16x32xf32>
    %cst_46 = arith.constant dense<0.000000e+00> : vector<16xf32>
    %115 = vector.multi_reduction <add>, %114, %cst_46 [1] : vector<16x32xf32> to vector<16xf32>
    %116 = vector.shape_cast %115 : vector<16xf32> to vector<16x1xf32>
    %cst_47 = arith.constant 3.200000e+01 : f32
    %117 = vector.broadcast %cst_47 : f32 to vector<16x1xf32>
    %118 = arith.divf %116, %117 : vector<16x1xf32>
    %119 = vector.broadcast %111 : vector<16x1xf32> to vector<16x32xf32>
    %120 = arith.subf %105, %119 : vector<16x32xf32>
    %cst_48 = arith.constant 9.99999974E-6 : f32
    %121 = vector.broadcast %cst_48 : f32 to vector<16x1xf32>
    %122 = arith.addf %118, %121 : vector<16x1xf32>
    %123 = math.rsqrt %122 : vector<16x1xf32>
    %124 = vector.broadcast %123 : vector<16x1xf32> to vector<16x32xf32>
    %125 = arith.mulf %120, %124 : vector<16x32xf32>
    %126 = vector.broadcast %106 : vector<1x32xf32> to vector<16x32xf32>
    %127 = arith.mulf %125, %126 : vector<16x32xf32>
    %128 = vector.broadcast %107 : vector<1x32xf32> to vector<16x32xf32>
    %129 = arith.addf %127, %128 : vector<16x32xf32>
    %c0_49 = arith.constant 0 : index
    %c0_50 = arith.constant 0 : index
    %130 = vector.load %arg37[%c0_49, %c0_50] : memref<32x64xf32, #tpu.memory_space<vmem>>, vector<32x64xf32>
    %cst_51 = arith.constant dense<0.000000e+00> : vector<16x64xf32>
    %131 = tpu.matmul %129, %130, %cst_51 {dimension_numbers = #tpu.dot_dimension_numbers<[1], [0], [0], [1], [0, 0, 1, 1], [], []>} : vector<16x32xf32>, vector<32x64xf32>, vector<16x64xf32> -> vector<16x64xf32>
    %c0_52 = arith.constant 0 : index
    %c0_53 = arith.constant 0 : index
    %132 = vector.load %arg25[%c0_52, %c0_53] : memref<1x64xf32, #tpu.memory_space<vmem>>, vector<1x64xf32>
    %133 = vector.broadcast %132 : vector<1x64xf32> to vector<16x64xf32>
    %134 = arith.addf %131, %133 : vector<16x64xf32>
    %cst_54 = arith.constant 0.000000e+00 : f32
    %135 = vector.broadcast %cst_54 : f32 to vector<16x64xf32>
    %136 = arith.maximumf %134, %135 : vector<16x64xf32>
    %c0_55 = arith.constant 0 : index
    %c0_56 = arith.constant 0 : index
    %137 = vector.load %arg38[%c0_55, %c0_56] : memref<64x32xf32, #tpu.memory_space<vmem>>, vector<64x32xf32>
    %cst_57 = arith.constant dense<0.000000e+00> : vector<16x32xf32>
    %138 = tpu.matmul %136, %137, %cst_57 {dimension_numbers = #tpu.dot_dimension_numbers<[1], [0], [0], [1], [0, 0, 1, 1], [], []>} : vector<16x64xf32>, vector<64x32xf32>, vector<16x32xf32> -> vector<16x32xf32>
    %c0_58 = arith.constant 0 : index
    %c0_59 = arith.constant 0 : index
    %139 = vector.load %arg26[%c0_58, %c0_59] : memref<1x32xf32, #tpu.memory_space<vmem>>, vector<1x32xf32>
    %140 = vector.broadcast %139 : vector<1x32xf32> to vector<16x32xf32>
    %141 = arith.addf %138, %140 : vector<16x32xf32>
    %142 = arith.addf %129, %141 : vector<16x32xf32>
    %c0_60 = arith.constant 0 : index
    %c0_61 = arith.constant 0 : index
    %143 = vector.load %arg30[%c0_60, %c0_61] : memref<1x32xf32, #tpu.memory_space<vmem>>, vector<1x32xf32>
    %c0_62 = arith.constant 0 : index
    %c0_63 = arith.constant 0 : index
    %144 = vector.load %arg29[%c0_62, %c0_63] : memref<1x32xf32, #tpu.memory_space<vmem>>, vector<1x32xf32>
    %cst_64 = arith.constant dense<0.000000e+00> : vector<16xf32>
    %145 = vector.multi_reduction <add>, %142, %cst_64 [1] : vector<16x32xf32> to vector<16xf32>
    %146 = vector.shape_cast %145 : vector<16xf32> to vector<16x1xf32>
    %cst_65 = arith.constant 3.200000e+01 : f32
    %147 = vector.broadcast %cst_65 : f32 to vector<16x1xf32>
    %148 = arith.divf %146, %147 : vector<16x1xf32>
    %149 = vector.broadcast %148 : vector<16x1xf32> to vector<16x32xf32>
    %150 = arith.subf %142, %149 : vector<16x32xf32>
    %151 = arith.mulf %150, %150 : vector<16x32xf32>
    %cst_66 = arith.constant dense<0.000000e+00> : vector<16xf32>
    %152 = vector.multi_reduction <add>, %151, %cst_66 [1] : vector<16x32xf32> to vector<16xf32>
    %153 = vector.shape_cast %152 : vector<16xf32> to vector<16x1xf32>
    %cst_67 = arith.constant 3.200000e+01 : f32
    %154 = vector.broadcast %cst_67 : f32 to vector<16x1xf32>
    %155 = arith.divf %153, %154 : vector<16x1xf32>
    %156 = vector.broadcast %148 : vector<16x1xf32> to vector<16x32xf32>
    %157 = arith.subf %142, %156 : vector<16x32xf32>
    %cst_68 = arith.constant 9.99999974E-6 : f32
    %158 = vector.broadcast %cst_68 : f32 to vector<16x1xf32>
    %159 = arith.addf %155, %158 : vector<16x1xf32>
    %160 = math.rsqrt %159 : vector<16x1xf32>
    %161 = vector.broadcast %160 : vector<16x1xf32> to vector<16x32xf32>
    %162 = arith.mulf %157, %161 : vector<16x32xf32>
    %163 = vector.broadcast %143 : vector<1x32xf32> to vector<16x32xf32>
    %164 = arith.mulf %162, %163 : vector<16x32xf32>
    %165 = vector.broadcast %144 : vector<1x32xf32> to vector<16x32xf32>
    %166 = arith.addf %164, %165 : vector<16x32xf32>
    %c0_69 = arith.constant 0 : index
    %c0_70 = arith.constant 0 : index
    %167 = vector.load %arg40[%c0_69, %c0_70] : memref<1x32xf32, #tpu.memory_space<vmem>>, vector<1x32xf32>
    %c0_71 = arith.constant 0 : index
    %c0_72 = arith.constant 0 : index
    %168 = vector.load %arg39[%c0_71, %c0_72] : memref<1x32xf32, #tpu.memory_space<vmem>>, vector<1x32xf32>
    %cst_73 = arith.constant dense<0.000000e+00> : vector<16xf32>
    %169 = vector.multi_reduction <add>, %166, %cst_73 [1] : vector<16x32xf32> to vector<16xf32>
    %170 = vector.shape_cast %169 : vector<16xf32> to vector<16x1xf32>
    %cst_74 = arith.constant 3.200000e+01 : f32
    %171 = vector.broadcast %cst_74 : f32 to vector<16x1xf32>
    %172 = arith.divf %170, %171 : vector<16x1xf32>
    %173 = vector.broadcast %172 : vector<16x1xf32> to vector<16x32xf32>
    %174 = arith.subf %166, %173 : vector<16x32xf32>
    %175 = arith.mulf %174, %174 : vector<16x32xf32>
    %cst_75 = arith.constant dense<0.000000e+00> : vector<16xf32>
    %176 = vector.multi_reduction <add>, %175, %cst_75 [1] : vector<16x32xf32> to vector<16xf32>
    %177 = vector.shape_cast %176 : vector<16xf32> to vector<16x1xf32>
    %cst_76 = arith.constant 3.200000e+01 : f32
    %178 = vector.broadcast %cst_76 : f32 to vector<16x1xf32>
    %179 = arith.divf %177, %178 : vector<16x1xf32>
    %180 = vector.broadcast %172 : vector<16x1xf32> to vector<16x32xf32>
    %181 = arith.subf %166, %180 : vector<16x32xf32>
    %cst_77 = arith.constant 9.99999974E-6 : f32
    %182 = vector.broadcast %cst_77 : f32 to vector<16x1xf32>
    %183 = arith.addf %179, %182 : vector<16x1xf32>
    %184 = math.rsqrt %183 : vector<16x1xf32>
    %185 = vector.broadcast %184 : vector<16x1xf32> to vector<16x32xf32>
    %186 = arith.mulf %181, %185 : vector<16x32xf32>
    %187 = vector.broadcast %167 : vector<1x32xf32> to vector<16x32xf32>
    %188 = arith.mulf %186, %187 : vector<16x32xf32>
    %189 = vector.broadcast %168 : vector<1x32xf32> to vector<16x32xf32>
    %190 = arith.addf %188, %189 : vector<16x32xf32>
    %c0_78 = arith.constant 0 : index
    %c0_79 = arith.constant 0 : index
    %191 = vector.load %arg47[%c0_78, %c0_79] : memref<16x1xi32, #tpu.memory_space<vmem>>, vector<16x1xi32>
    %192 = tpu.iota {dimensions = array<i32: 1>} : vector<16x16xi32>
    %193 = vector.broadcast %191 : vector<16x1xi32> to vector<16x16xi32>
    %194 = arith.cmpi eq, %193, %192 : vector<16x16xi32>
    %195 = arith.extui %194 : vector<16x16xi1> to vector<16x16xi32>
    %196 = arith.sitofp %195 : vector<16x16xi32> to vector<16x16xf32>
    %c0_80 = arith.constant 0 : index
    %c0_81 = arith.constant 0 : index
    %197 = vector.load %arg46[%c0_80, %c0_81] : memref<16x32xf32, #tpu.memory_space<vmem>>, vector<16x32xf32>
    %cst_82 = arith.constant dense<0.000000e+00> : vector<16x32xf32>
    %198 = tpu.matmul %196, %197, %cst_82 {dimension_numbers = #tpu.dot_dimension_numbers<[1], [0], [0], [1], [0, 0, 1, 1], [], []>} : vector<16x16xf32>, vector<16x32xf32>, vector<16x32xf32> -> vector<16x32xf32>
    %c0_83 = arith.constant 0 : index
    %c0_84 = arith.constant 0 : index
    %199 = vector.load %arg43[%c0_83, %c0_84] : memref<64x32xf32, #tpu.memory_space<vmem>>, vector<8x32xf32>
    %200 = tpu.concatenate %199, %199 in 0 : vector<8x32xf32>, vector<8x32xf32> -> vector<16x32xf32>
    %201 = arith.addf %198, %200 : vector<16x32xf32>
    %c0_85 = arith.constant 0 : index
    %c0_86 = arith.constant 0 : index
    %202 = vector.load %arg20[%c0_85, %c0_86] : memref<32x32xf32, #tpu.memory_space<vmem>>, vector<32x32xf32>
    %cst_87 = arith.constant dense<0.000000e+00> : vector<16x32xf32>
    %203 = tpu.matmul %201, %202, %cst_87 {dimension_numbers = #tpu.dot_dimension_numbers<[1], [0], [0], [1], [0, 0, 1, 1], [], []>} : vector<16x32xf32>, vector<32x32xf32>, vector<16x32xf32> -> vector<16x32xf32>
    %c0_88 = arith.constant 0 : index
    %c0_89 = arith.constant 0 : index
    %204 = vector.load %arg17[%c0_88, %c0_89] : memref<1x32xf32, #tpu.memory_space<vmem>>, vector<1x32xf32>
    %205 = vector.broadcast %204 : vector<1x32xf32> to vector<16x32xf32>
    %206 = arith.addf %203, %205 : vector<16x32xf32>
    %c0_90 = arith.constant 0 : index
    %c0_91 = arith.constant 0 : index
    %207 = vector.load %arg18[%c0_90, %c0_91] : memref<32x64xf32, #tpu.memory_space<vmem>>, vector<32x64xf32>
    %cst_92 = arith.constant dense<0.000000e+00> : vector<16x64xf32>
    %208 = tpu.matmul %201, %207, %cst_92 {dimension_numbers = #tpu.dot_dimension_numbers<[1], [0], [0], [1], [0, 0, 1, 1], [], []>} : vector<16x32xf32>, vector<32x64xf32>, vector<16x64xf32> -> vector<16x64xf32>
    %c0_93 = arith.constant 0 : index
    %c0_94 = arith.constant 0 : index
    %209 = vector.load %arg15[%c0_93, %c0_94] : memref<1x64xf32, #tpu.memory_space<vmem>>, vector<1x64xf32>
    %210 = vector.broadcast %209 : vector<1x64xf32> to vector<16x64xf32>
    %211 = arith.addf %208, %210 : vector<16x64xf32>
    %212 = vector.extract_strided_slice %211 {offsets = [0, 0], sizes = [16, 32], strides = [1, 1]} : vector<16x64xf32> to vector<16x32xf32>
    %213 = vector.extract_strided_slice %211 {offsets = [0, 32], sizes = [16, 32], strides = [1, 1]} : vector<16x64xf32> to vector<16x32xf32>
    %214 = vector.extract_strided_slice %206 {offsets = [0, 0], sizes = [8, 32], strides = [1, 1]} : vector<16x32xf32> to vector<8x32xf32>
    %215 = vector.extract_strided_slice %212 {offsets = [0, 0], sizes = [8, 32], strides = [1, 1]} : vector<16x32xf32> to vector<8x32xf32>
    %216 = vector.extract_strided_slice %213 {offsets = [0, 0], sizes = [8, 32], strides = [1, 1]} : vector<16x32xf32> to vector<8x32xf32>
    %217 = vector.extract_strided_slice %214 {offsets = [0, 0], sizes = [8, 16], strides = [1, 1]} : vector<8x32xf32> to vector<8x16xf32>
    %218 = vector.extract_strided_slice %215 {offsets = [0, 0], sizes = [8, 16], strides = [1, 1]} : vector<8x32xf32> to vector<8x16xf32>
    %cst_95 = arith.constant dense<0.000000e+00> : vector<8x8xf32>
    %219 = tpu.matmul %217, %218, %cst_95 {dimension_numbers = #tpu.dot_dimension_numbers<[1], [1], [0], [0], [0, 0, 1, 0], [], []>} : vector<8x16xf32>, vector<8x16xf32>, vector<8x8xf32> -> vector<8x8xf32>
    %cst_96 = arith.constant 2.500000e-01 : f32
    %220 = vector.broadcast %cst_96 : f32 to vector<8x8xf32>
    %221 = arith.mulf %219, %220 : vector<8x8xf32>
    %cst_97 = arith.constant dense<0xFF800000> : vector<8xf32>
    %222 = vector.multi_reduction <maximumf>, %221, %cst_97 [1] : vector<8x8xf32> to vector<8xf32>
    %223 = vector.shape_cast %222 : vector<8xf32> to vector<8x1xf32>
    %224 = vector.broadcast %223 : vector<8x1xf32> to vector<8x8xf32>
    %225 = arith.subf %221, %224 : vector<8x8xf32>
    %226 = math.exp %225 : vector<8x8xf32>
    %cst_98 = arith.constant dense<0.000000e+00> : vector<8xf32>
    %227 = vector.multi_reduction <add>, %226, %cst_98 [1] : vector<8x8xf32> to vector<8xf32>
    %228 = vector.shape_cast %227 : vector<8xf32> to vector<8x1xf32>
    %229 = tpu.reciprocal %228 {approx = true} : vector<8x1xf32> -> vector<8x1xf32>
    %230 = vector.extract_strided_slice %216 {offsets = [0, 0], sizes = [8, 16], strides = [1, 1]} : vector<8x32xf32> to vector<8x16xf32>
    %cst_99 = arith.constant dense<0.000000e+00> : vector<8x16xf32>
    %231 = tpu.matmul %226, %230, %cst_99 {dimension_numbers = #tpu.dot_dimension_numbers<[1], [0], [0], [1], [0, 0, 1, 1], [], []>} : vector<8x8xf32>, vector<8x16xf32>, vector<8x16xf32> -> vector<8x16xf32>
    %232 = vector.broadcast %229 : vector<8x1xf32> to vector<8x16xf32>
    %233 = arith.mulf %231, %232 : vector<8x16xf32>
    %234 = vector.extract_strided_slice %214 {offsets = [0, 16], sizes = [8, 16], strides = [1, 1]} : vector<8x32xf32> to vector<8x16xf32>
    %235 = vector.extract_strided_slice %215 {offsets = [0, 16], sizes = [8, 16], strides = [1, 1]} : vector<8x32xf32> to vector<8x16xf32>
    %cst_100 = arith.constant dense<0.000000e+00> : vector<8x8xf32>
    %236 = tpu.matmul %234, %235, %cst_100 {dimension_numbers = #tpu.dot_dimension_numbers<[1], [1], [0], [0], [0, 0, 1, 0], [], []>} : vector<8x16xf32>, vector<8x16xf32>, vector<8x8xf32> -> vector<8x8xf32>
    %cst_101 = arith.constant 2.500000e-01 : f32
    %237 = vector.broadcast %cst_101 : f32 to vector<8x8xf32>
    %238 = arith.mulf %236, %237 : vector<8x8xf32>
    %cst_102 = arith.constant dense<0xFF800000> : vector<8xf32>
    %239 = vector.multi_reduction <maximumf>, %238, %cst_102 [1] : vector<8x8xf32> to vector<8xf32>
    %240 = vector.shape_cast %239 : vector<8xf32> to vector<8x1xf32>
    %241 = vector.broadcast %240 : vector<8x1xf32> to vector<8x8xf32>
    %242 = arith.subf %238, %241 : vector<8x8xf32>
    %243 = math.exp %242 : vector<8x8xf32>
    %cst_103 = arith.constant dense<0.000000e+00> : vector<8xf32>
    %244 = vector.multi_reduction <add>, %243, %cst_103 [1] : vector<8x8xf32> to vector<8xf32>
    %245 = vector.shape_cast %244 : vector<8xf32> to vector<8x1xf32>
    %246 = tpu.reciprocal %245 {approx = true} : vector<8x1xf32> -> vector<8x1xf32>
    %247 = vector.extract_strided_slice %216 {offsets = [0, 16], sizes = [8, 16], strides = [1, 1]} : vector<8x32xf32> to vector<8x16xf32>
    %cst_104 = arith.constant dense<0.000000e+00> : vector<8x16xf32>
    %248 = tpu.matmul %243, %247, %cst_104 {dimension_numbers = #tpu.dot_dimension_numbers<[1], [0], [0], [1], [0, 0, 1, 1], [], []>} : vector<8x8xf32>, vector<8x16xf32>, vector<8x16xf32> -> vector<8x16xf32>
    %249 = vector.broadcast %246 : vector<8x1xf32> to vector<8x16xf32>
    %250 = arith.mulf %248, %249 : vector<8x16xf32>
    %251 = tpu.concatenate %233, %250 in 1 : vector<8x16xf32>, vector<8x16xf32> -> vector<8x32xf32>
    %252 = vector.extract_strided_slice %206 {offsets = [8, 0], sizes = [8, 32], strides = [1, 1]} : vector<16x32xf32> to vector<8x32xf32>
    %253 = vector.extract_strided_slice %212 {offsets = [8, 0], sizes = [8, 32], strides = [1, 1]} : vector<16x32xf32> to vector<8x32xf32>
    %254 = vector.extract_strided_slice %213 {offsets = [8, 0], sizes = [8, 32], strides = [1, 1]} : vector<16x32xf32> to vector<8x32xf32>
    %255 = vector.extract_strided_slice %252 {offsets = [0, 0], sizes = [8, 16], strides = [1, 1]} : vector<8x32xf32> to vector<8x16xf32>
    %256 = vector.extract_strided_slice %253 {offsets = [0, 0], sizes = [8, 16], strides = [1, 1]} : vector<8x32xf32> to vector<8x16xf32>
    %cst_105 = arith.constant dense<0.000000e+00> : vector<8x8xf32>
    %257 = tpu.matmul %255, %256, %cst_105 {dimension_numbers = #tpu.dot_dimension_numbers<[1], [1], [0], [0], [0, 0, 1, 0], [], []>} : vector<8x16xf32>, vector<8x16xf32>, vector<8x8xf32> -> vector<8x8xf32>
    %cst_106 = arith.constant 2.500000e-01 : f32
    %258 = vector.broadcast %cst_106 : f32 to vector<8x8xf32>
    %259 = arith.mulf %257, %258 : vector<8x8xf32>
    %cst_107 = arith.constant dense<0xFF800000> : vector<8xf32>
    %260 = vector.multi_reduction <maximumf>, %259, %cst_107 [1] : vector<8x8xf32> to vector<8xf32>
    %261 = vector.shape_cast %260 : vector<8xf32> to vector<8x1xf32>
    %262 = vector.broadcast %261 : vector<8x1xf32> to vector<8x8xf32>
    %263 = arith.subf %259, %262 : vector<8x8xf32>
    %264 = math.exp %263 : vector<8x8xf32>
    %cst_108 = arith.constant dense<0.000000e+00> : vector<8xf32>
    %265 = vector.multi_reduction <add>, %264, %cst_108 [1] : vector<8x8xf32> to vector<8xf32>
    %266 = vector.shape_cast %265 : vector<8xf32> to vector<8x1xf32>
    %267 = tpu.reciprocal %266 {approx = true} : vector<8x1xf32> -> vector<8x1xf32>
    %268 = vector.extract_strided_slice %254 {offsets = [0, 0], sizes = [8, 16], strides = [1, 1]} : vector<8x32xf32> to vector<8x16xf32>
    %cst_109 = arith.constant dense<0.000000e+00> : vector<8x16xf32>
    %269 = tpu.matmul %264, %268, %cst_109 {dimension_numbers = #tpu.dot_dimension_numbers<[1], [0], [0], [1], [0, 0, 1, 1], [], []>} : vector<8x8xf32>, vector<8x16xf32>, vector<8x16xf32> -> vector<8x16xf32>
    %270 = vector.broadcast %267 : vector<8x1xf32> to vector<8x16xf32>
    %271 = arith.mulf %269, %270 : vector<8x16xf32>
    %272 = vector.extract_strided_slice %252 {offsets = [0, 16], sizes = [8, 16], strides = [1, 1]} : vector<8x32xf32> to vector<8x16xf32>
    %273 = vector.extract_strided_slice %253 {offsets = [0, 16], sizes = [8, 16], strides = [1, 1]} : vector<8x32xf32> to vector<8x16xf32>
    %cst_110 = arith.constant dense<0.000000e+00> : vector<8x8xf32>
    %274 = tpu.matmul %272, %273, %cst_110 {dimension_numbers = #tpu.dot_dimension_numbers<[1], [1], [0], [0], [0, 0, 1, 0], [], []>} : vector<8x16xf32>, vector<8x16xf32>, vector<8x8xf32> -> vector<8x8xf32>
    %cst_111 = arith.constant 2.500000e-01 : f32
    %275 = vector.broadcast %cst_111 : f32 to vector<8x8xf32>
    %276 = arith.mulf %274, %275 : vector<8x8xf32>
    %cst_112 = arith.constant dense<0xFF800000> : vector<8xf32>
    %277 = vector.multi_reduction <maximumf>, %276, %cst_112 [1] : vector<8x8xf32> to vector<8xf32>
    %278 = vector.shape_cast %277 : vector<8xf32> to vector<8x1xf32>
    %279 = vector.broadcast %278 : vector<8x1xf32> to vector<8x8xf32>
    %280 = arith.subf %276, %279 : vector<8x8xf32>
    %281 = math.exp %280 : vector<8x8xf32>
    %cst_113 = arith.constant dense<0.000000e+00> : vector<8xf32>
    %282 = vector.multi_reduction <add>, %281, %cst_113 [1] : vector<8x8xf32> to vector<8xf32>
    %283 = vector.shape_cast %282 : vector<8xf32> to vector<8x1xf32>
    %284 = tpu.reciprocal %283 {approx = true} : vector<8x1xf32> -> vector<8x1xf32>
    %285 = vector.extract_strided_slice %254 {offsets = [0, 16], sizes = [8, 16], strides = [1, 1]} : vector<8x32xf32> to vector<8x16xf32>
    %cst_114 = arith.constant dense<0.000000e+00> : vector<8x16xf32>
    %286 = tpu.matmul %281, %285, %cst_114 {dimension_numbers = #tpu.dot_dimension_numbers<[1], [0], [0], [1], [0, 0, 1, 1], [], []>} : vector<8x8xf32>, vector<8x16xf32>, vector<8x16xf32> -> vector<8x16xf32>
    %287 = vector.broadcast %284 : vector<8x1xf32> to vector<8x16xf32>
    %288 = arith.mulf %286, %287 : vector<8x16xf32>
    %289 = tpu.concatenate %271, %288 in 1 : vector<8x16xf32>, vector<8x16xf32> -> vector<8x32xf32>
    %290 = tpu.concatenate %251, %289 in 0 : vector<8x32xf32>, vector<8x32xf32> -> vector<16x32xf32>
    %c0_115 = arith.constant 0 : index
    %c0_116 = arith.constant 0 : index
    %291 = vector.load %arg19[%c0_115, %c0_116] : memref<32x32xf32, #tpu.memory_space<vmem>>, vector<32x32xf32>
    %cst_117 = arith.constant dense<0.000000e+00> : vector<16x32xf32>
    %292 = tpu.matmul %290, %291, %cst_117 {dimension_numbers = #tpu.dot_dimension_numbers<[1], [0], [0], [1], [0, 0, 1, 1], [], []>} : vector<16x32xf32>, vector<32x32xf32>, vector<16x32xf32> -> vector<16x32xf32>
    %c0_118 = arith.constant 0 : index
    %c0_119 = arith.constant 0 : index
    %293 = vector.load %arg16[%c0_118, %c0_119] : memref<1x32xf32, #tpu.memory_space<vmem>>, vector<1x32xf32>
    %294 = vector.broadcast %293 : vector<1x32xf32> to vector<16x32xf32>
    %295 = arith.addf %292, %294 : vector<16x32xf32>
    %296 = arith.addf %201, %295 : vector<16x32xf32>
    %c0_120 = arith.constant 0 : index
    %c0_121 = arith.constant 0 : index
    %297 = vector.load %arg10[%c0_120, %c0_121] : memref<1x32xf32, #tpu.memory_space<vmem>>, vector<1x32xf32>
    %c0_122 = arith.constant 0 : index
    %c0_123 = arith.constant 0 : index
    %298 = vector.load %arg9[%c0_122, %c0_123] : memref<1x32xf32, #tpu.memory_space<vmem>>, vector<1x32xf32>
    %cst_124 = arith.constant dense<0.000000e+00> : vector<16xf32>
    %299 = vector.multi_reduction <add>, %296, %cst_124 [1] : vector<16x32xf32> to vector<16xf32>
    %300 = vector.shape_cast %299 : vector<16xf32> to vector<16x1xf32>
    %cst_125 = arith.constant 3.200000e+01 : f32
    %301 = vector.broadcast %cst_125 : f32 to vector<16x1xf32>
    %302 = arith.divf %300, %301 : vector<16x1xf32>
    %303 = vector.broadcast %302 : vector<16x1xf32> to vector<16x32xf32>
    %304 = arith.subf %296, %303 : vector<16x32xf32>
    %305 = arith.mulf %304, %304 : vector<16x32xf32>
    %cst_126 = arith.constant dense<0.000000e+00> : vector<16xf32>
    %306 = vector.multi_reduction <add>, %305, %cst_126 [1] : vector<16x32xf32> to vector<16xf32>
    %307 = vector.shape_cast %306 : vector<16xf32> to vector<16x1xf32>
    %cst_127 = arith.constant 3.200000e+01 : f32
    %308 = vector.broadcast %cst_127 : f32 to vector<16x1xf32>
    %309 = arith.divf %307, %308 : vector<16x1xf32>
    %310 = vector.broadcast %302 : vector<16x1xf32> to vector<16x32xf32>
    %311 = arith.subf %296, %310 : vector<16x32xf32>
    %cst_128 = arith.constant 9.99999974E-6 : f32
    %312 = vector.broadcast %cst_128 : f32 to vector<16x1xf32>
    %313 = arith.addf %309, %312 : vector<16x1xf32>
    %314 = math.rsqrt %313 : vector<16x1xf32>
    %315 = vector.broadcast %314 : vector<16x1xf32> to vector<16x32xf32>
    %316 = arith.mulf %311, %315 : vector<16x32xf32>
    %317 = vector.broadcast %297 : vector<1x32xf32> to vector<16x32xf32>
    %318 = arith.mulf %316, %317 : vector<16x32xf32>
    %319 = vector.broadcast %298 : vector<1x32xf32> to vector<16x32xf32>
    %320 = arith.addf %318, %319 : vector<16x32xf32>
    %c0_129 = arith.constant 0 : index
    %c0_130 = arith.constant 0 : index
    %321 = vector.load %arg8[%c0_129, %c0_130] : memref<32x32xf32, #tpu.memory_space<vmem>>, vector<32x32xf32>
    %cst_131 = arith.constant dense<0.000000e+00> : vector<16x32xf32>
    %322 = tpu.matmul %320, %321, %cst_131 {dimension_numbers = #tpu.dot_dimension_numbers<[1], [0], [0], [1], [0, 0, 1, 1], [], []>} : vector<16x32xf32>, vector<32x32xf32>, vector<16x32xf32> -> vector<16x32xf32>
    %c0_132 = arith.constant 0 : index
    %c0_133 = arith.constant 0 : index
    %323 = vector.load %arg5[%c0_132, %c0_133] : memref<1x32xf32, #tpu.memory_space<vmem>>, vector<1x32xf32>
    %324 = vector.broadcast %323 : vector<1x32xf32> to vector<16x32xf32>
    %325 = arith.addf %322, %324 : vector<16x32xf32>
    %c0_134 = arith.constant 0 : index
    %c0_135 = arith.constant 0 : index
    %326 = vector.load %arg6[%c0_134, %c0_135] : memref<32x64xf32, #tpu.memory_space<vmem>>, vector<32x64xf32>
    %cst_136 = arith.constant dense<0.000000e+00> : vector<16x64xf32>
    %327 = tpu.matmul %190, %326, %cst_136 {dimension_numbers = #tpu.dot_dimension_numbers<[1], [0], [0], [1], [0, 0, 1, 1], [], []>} : vector<16x32xf32>, vector<32x64xf32>, vector<16x64xf32> -> vector<16x64xf32>
    %c0_137 = arith.constant 0 : index
    %c0_138 = arith.constant 0 : index
    %328 = vector.load %arg3[%c0_137, %c0_138] : memref<1x64xf32, #tpu.memory_space<vmem>>, vector<1x64xf32>
    %329 = vector.broadcast %328 : vector<1x64xf32> to vector<16x64xf32>
    %330 = arith.addf %327, %329 : vector<16x64xf32>
    %331 = vector.extract_strided_slice %330 {offsets = [0, 0], sizes = [16, 32], strides = [1, 1]} : vector<16x64xf32> to vector<16x32xf32>
    %332 = vector.extract_strided_slice %330 {offsets = [0, 32], sizes = [16, 32], strides = [1, 1]} : vector<16x64xf32> to vector<16x32xf32>
    %333 = vector.extract_strided_slice %325 {offsets = [0, 0], sizes = [8, 32], strides = [1, 1]} : vector<16x32xf32> to vector<8x32xf32>
    %334 = vector.extract_strided_slice %331 {offsets = [0, 0], sizes = [8, 32], strides = [1, 1]} : vector<16x32xf32> to vector<8x32xf32>
    %335 = vector.extract_strided_slice %332 {offsets = [0, 0], sizes = [8, 32], strides = [1, 1]} : vector<16x32xf32> to vector<8x32xf32>
    %336 = vector.extract_strided_slice %333 {offsets = [0, 0], sizes = [8, 16], strides = [1, 1]} : vector<8x32xf32> to vector<8x16xf32>
    %337 = vector.extract_strided_slice %334 {offsets = [0, 0], sizes = [8, 16], strides = [1, 1]} : vector<8x32xf32> to vector<8x16xf32>
    %cst_139 = arith.constant dense<0.000000e+00> : vector<8x8xf32>
    %338 = tpu.matmul %336, %337, %cst_139 {dimension_numbers = #tpu.dot_dimension_numbers<[1], [1], [0], [0], [0, 0, 1, 0], [], []>} : vector<8x16xf32>, vector<8x16xf32>, vector<8x8xf32> -> vector<8x8xf32>
    %cst_140 = arith.constant 2.500000e-01 : f32
    %339 = vector.broadcast %cst_140 : f32 to vector<8x8xf32>
    %340 = arith.mulf %338, %339 : vector<8x8xf32>
    %cst_141 = arith.constant dense<0xFF800000> : vector<8xf32>
    %341 = vector.multi_reduction <maximumf>, %340, %cst_141 [1] : vector<8x8xf32> to vector<8xf32>
    %342 = vector.shape_cast %341 : vector<8xf32> to vector<8x1xf32>
    %343 = vector.broadcast %342 : vector<8x1xf32> to vector<8x8xf32>
    %344 = arith.subf %340, %343 : vector<8x8xf32>
    %345 = math.exp %344 : vector<8x8xf32>
    %cst_142 = arith.constant dense<0.000000e+00> : vector<8xf32>
    %346 = vector.multi_reduction <add>, %345, %cst_142 [1] : vector<8x8xf32> to vector<8xf32>
    %347 = vector.shape_cast %346 : vector<8xf32> to vector<8x1xf32>
    %348 = tpu.reciprocal %347 {approx = true} : vector<8x1xf32> -> vector<8x1xf32>
    %349 = vector.extract_strided_slice %335 {offsets = [0, 0], sizes = [8, 16], strides = [1, 1]} : vector<8x32xf32> to vector<8x16xf32>
    %cst_143 = arith.constant dense<0.000000e+00> : vector<8x16xf32>
    %350 = tpu.matmul %345, %349, %cst_143 {dimension_numbers = #tpu.dot_dimension_numbers<[1], [0], [0], [1], [0, 0, 1, 1], [], []>} : vector<8x8xf32>, vector<8x16xf32>, vector<8x16xf32> -> vector<8x16xf32>
    %351 = vector.broadcast %348 : vector<8x1xf32> to vector<8x16xf32>
    %352 = arith.mulf %350, %351 : vector<8x16xf32>
    %353 = vector.extract_strided_slice %333 {offsets = [0, 16], sizes = [8, 16], strides = [1, 1]} : vector<8x32xf32> to vector<8x16xf32>
    %354 = vector.extract_strided_slice %334 {offsets = [0, 16], sizes = [8, 16], strides = [1, 1]} : vector<8x32xf32> to vector<8x16xf32>
    %cst_144 = arith.constant dense<0.000000e+00> : vector<8x8xf32>
    %355 = tpu.matmul %353, %354, %cst_144 {dimension_numbers = #tpu.dot_dimension_numbers<[1], [1], [0], [0], [0, 0, 1, 0], [], []>} : vector<8x16xf32>, vector<8x16xf32>, vector<8x8xf32> -> vector<8x8xf32>
    %cst_145 = arith.constant 2.500000e-01 : f32
    %356 = vector.broadcast %cst_145 : f32 to vector<8x8xf32>
    %357 = arith.mulf %355, %356 : vector<8x8xf32>
    %cst_146 = arith.constant dense<0xFF800000> : vector<8xf32>
    %358 = vector.multi_reduction <maximumf>, %357, %cst_146 [1] : vector<8x8xf32> to vector<8xf32>
    %359 = vector.shape_cast %358 : vector<8xf32> to vector<8x1xf32>
    %360 = vector.broadcast %359 : vector<8x1xf32> to vector<8x8xf32>
    %361 = arith.subf %357, %360 : vector<8x8xf32>
    %362 = math.exp %361 : vector<8x8xf32>
    %cst_147 = arith.constant dense<0.000000e+00> : vector<8xf32>
    %363 = vector.multi_reduction <add>, %362, %cst_147 [1] : vector<8x8xf32> to vector<8xf32>
    %364 = vector.shape_cast %363 : vector<8xf32> to vector<8x1xf32>
    %365 = tpu.reciprocal %364 {approx = true} : vector<8x1xf32> -> vector<8x1xf32>
    %366 = vector.extract_strided_slice %335 {offsets = [0, 16], sizes = [8, 16], strides = [1, 1]} : vector<8x32xf32> to vector<8x16xf32>
    %cst_148 = arith.constant dense<0.000000e+00> : vector<8x16xf32>
    %367 = tpu.matmul %362, %366, %cst_148 {dimension_numbers = #tpu.dot_dimension_numbers<[1], [0], [0], [1], [0, 0, 1, 1], [], []>} : vector<8x8xf32>, vector<8x16xf32>, vector<8x16xf32> -> vector<8x16xf32>
    %368 = vector.broadcast %365 : vector<8x1xf32> to vector<8x16xf32>
    %369 = arith.mulf %367, %368 : vector<8x16xf32>
    %370 = tpu.concatenate %352, %369 in 1 : vector<8x16xf32>, vector<8x16xf32> -> vector<8x32xf32>
    %371 = vector.extract_strided_slice %325 {offsets = [8, 0], sizes = [8, 32], strides = [1, 1]} : vector<16x32xf32> to vector<8x32xf32>
    %372 = vector.extract_strided_slice %331 {offsets = [8, 0], sizes = [8, 32], strides = [1, 1]} : vector<16x32xf32> to vector<8x32xf32>
    %373 = vector.extract_strided_slice %332 {offsets = [8, 0], sizes = [8, 32], strides = [1, 1]} : vector<16x32xf32> to vector<8x32xf32>
    %374 = vector.extract_strided_slice %371 {offsets = [0, 0], sizes = [8, 16], strides = [1, 1]} : vector<8x32xf32> to vector<8x16xf32>
    %375 = vector.extract_strided_slice %372 {offsets = [0, 0], sizes = [8, 16], strides = [1, 1]} : vector<8x32xf32> to vector<8x16xf32>
    %cst_149 = arith.constant dense<0.000000e+00> : vector<8x8xf32>
    %376 = tpu.matmul %374, %375, %cst_149 {dimension_numbers = #tpu.dot_dimension_numbers<[1], [1], [0], [0], [0, 0, 1, 0], [], []>} : vector<8x16xf32>, vector<8x16xf32>, vector<8x8xf32> -> vector<8x8xf32>
    %cst_150 = arith.constant 2.500000e-01 : f32
    %377 = vector.broadcast %cst_150 : f32 to vector<8x8xf32>
    %378 = arith.mulf %376, %377 : vector<8x8xf32>
    %cst_151 = arith.constant dense<0xFF800000> : vector<8xf32>
    %379 = vector.multi_reduction <maximumf>, %378, %cst_151 [1] : vector<8x8xf32> to vector<8xf32>
    %380 = vector.shape_cast %379 : vector<8xf32> to vector<8x1xf32>
    %381 = vector.broadcast %380 : vector<8x1xf32> to vector<8x8xf32>
    %382 = arith.subf %378, %381 : vector<8x8xf32>
    %383 = math.exp %382 : vector<8x8xf32>
    %cst_152 = arith.constant dense<0.000000e+00> : vector<8xf32>
    %384 = vector.multi_reduction <add>, %383, %cst_152 [1] : vector<8x8xf32> to vector<8xf32>
    %385 = vector.shape_cast %384 : vector<8xf32> to vector<8x1xf32>
    %386 = tpu.reciprocal %385 {approx = true} : vector<8x1xf32> -> vector<8x1xf32>
    %387 = vector.extract_strided_slice %373 {offsets = [0, 0], sizes = [8, 16], strides = [1, 1]} : vector<8x32xf32> to vector<8x16xf32>
    %cst_153 = arith.constant dense<0.000000e+00> : vector<8x16xf32>
    %388 = tpu.matmul %383, %387, %cst_153 {dimension_numbers = #tpu.dot_dimension_numbers<[1], [0], [0], [1], [0, 0, 1, 1], [], []>} : vector<8x8xf32>, vector<8x16xf32>, vector<8x16xf32> -> vector<8x16xf32>
    %389 = vector.broadcast %386 : vector<8x1xf32> to vector<8x16xf32>
    %390 = arith.mulf %388, %389 : vector<8x16xf32>
    %391 = vector.extract_strided_slice %371 {offsets = [0, 16], sizes = [8, 16], strides = [1, 1]} : vector<8x32xf32> to vector<8x16xf32>
    %392 = vector.extract_strided_slice %372 {offsets = [0, 16], sizes = [8, 16], strides = [1, 1]} : vector<8x32xf32> to vector<8x16xf32>
    %cst_154 = arith.constant dense<0.000000e+00> : vector<8x8xf32>
    %393 = tpu.matmul %391, %392, %cst_154 {dimension_numbers = #tpu.dot_dimension_numbers<[1], [1], [0], [0], [0, 0, 1, 0], [], []>} : vector<8x16xf32>, vector<8x16xf32>, vector<8x8xf32> -> vector<8x8xf32>
    %cst_155 = arith.constant 2.500000e-01 : f32
    %394 = vector.broadcast %cst_155 : f32 to vector<8x8xf32>
    %395 = arith.mulf %393, %394 : vector<8x8xf32>
    %cst_156 = arith.constant dense<0xFF800000> : vector<8xf32>
    %396 = vector.multi_reduction <maximumf>, %395, %cst_156 [1] : vector<8x8xf32> to vector<8xf32>
    %397 = vector.shape_cast %396 : vector<8xf32> to vector<8x1xf32>
    %398 = vector.broadcast %397 : vector<8x1xf32> to vector<8x8xf32>
    %399 = arith.subf %395, %398 : vector<8x8xf32>
    %400 = math.exp %399 : vector<8x8xf32>
    %cst_157 = arith.constant dense<0.000000e+00> : vector<8xf32>
    %401 = vector.multi_reduction <add>, %400, %cst_157 [1] : vector<8x8xf32> to vector<8xf32>
    %402 = vector.shape_cast %401 : vector<8xf32> to vector<8x1xf32>
    %403 = tpu.reciprocal %402 {approx = true} : vector<8x1xf32> -> vector<8x1xf32>
    %404 = vector.extract_strided_slice %373 {offsets = [0, 16], sizes = [8, 16], strides = [1, 1]} : vector<8x32xf32> to vector<8x16xf32>
    %cst_158 = arith.constant dense<0.000000e+00> : vector<8x16xf32>
    %405 = tpu.matmul %400, %404, %cst_158 {dimension_numbers = #tpu.dot_dimension_numbers<[1], [0], [0], [1], [0, 0, 1, 1], [], []>} : vector<8x8xf32>, vector<8x16xf32>, vector<8x16xf32> -> vector<8x16xf32>
    %406 = vector.broadcast %403 : vector<8x1xf32> to vector<8x16xf32>
    %407 = arith.mulf %405, %406 : vector<8x16xf32>
    %408 = tpu.concatenate %390, %407 in 1 : vector<8x16xf32>, vector<8x16xf32> -> vector<8x32xf32>
    %409 = tpu.concatenate %370, %408 in 0 : vector<8x32xf32>, vector<8x32xf32> -> vector<16x32xf32>
    %c0_159 = arith.constant 0 : index
    %c0_160 = arith.constant 0 : index
    %410 = vector.load %arg7[%c0_159, %c0_160] : memref<32x32xf32, #tpu.memory_space<vmem>>, vector<32x32xf32>
    %cst_161 = arith.constant dense<0.000000e+00> : vector<16x32xf32>
    %411 = tpu.matmul %409, %410, %cst_161 {dimension_numbers = #tpu.dot_dimension_numbers<[1], [0], [0], [1], [0, 0, 1, 1], [], []>} : vector<16x32xf32>, vector<32x32xf32>, vector<16x32xf32> -> vector<16x32xf32>
    %c0_162 = arith.constant 0 : index
    %c0_163 = arith.constant 0 : index
    %412 = vector.load %arg4[%c0_162, %c0_163] : memref<1x32xf32, #tpu.memory_space<vmem>>, vector<1x32xf32>
    %413 = vector.broadcast %412 : vector<1x32xf32> to vector<16x32xf32>
    %414 = arith.addf %411, %413 : vector<16x32xf32>
    %415 = arith.addf %320, %414 : vector<16x32xf32>
    %c0_164 = arith.constant 0 : index
    %c0_165 = arith.constant 0 : index
    %416 = vector.load %arg12[%c0_164, %c0_165] : memref<1x32xf32, #tpu.memory_space<vmem>>, vector<1x32xf32>
    %c0_166 = arith.constant 0 : index
    %c0_167 = arith.constant 0 : index
    %417 = vector.load %arg11[%c0_166, %c0_167] : memref<1x32xf32, #tpu.memory_space<vmem>>, vector<1x32xf32>
    %cst_168 = arith.constant dense<0.000000e+00> : vector<16xf32>
    %418 = vector.multi_reduction <add>, %415, %cst_168 [1] : vector<16x32xf32> to vector<16xf32>
    %419 = vector.shape_cast %418 : vector<16xf32> to vector<16x1xf32>
    %cst_169 = arith.constant 3.200000e+01 : f32
    %420 = vector.broadcast %cst_169 : f32 to vector<16x1xf32>
    %421 = arith.divf %419, %420 : vector<16x1xf32>
    %422 = vector.broadcast %421 : vector<16x1xf32> to vector<16x32xf32>
    %423 = arith.subf %415, %422 : vector<16x32xf32>
    %424 = arith.mulf %423, %423 : vector<16x32xf32>
    %cst_170 = arith.constant dense<0.000000e+00> : vector<16xf32>
    %425 = vector.multi_reduction <add>, %424, %cst_170 [1] : vector<16x32xf32> to vector<16xf32>
    %426 = vector.shape_cast %425 : vector<16xf32> to vector<16x1xf32>
    %cst_171 = arith.constant 3.200000e+01 : f32
    %427 = vector.broadcast %cst_171 : f32 to vector<16x1xf32>
    %428 = arith.divf %426, %427 : vector<16x1xf32>
    %429 = vector.broadcast %421 : vector<16x1xf32> to vector<16x32xf32>
    %430 = arith.subf %415, %429 : vector<16x32xf32>
    %cst_172 = arith.constant 9.99999974E-6 : f32
    %431 = vector.broadcast %cst_172 : f32 to vector<16x1xf32>
    %432 = arith.addf %428, %431 : vector<16x1xf32>
    %433 = math.rsqrt %432 : vector<16x1xf32>
    %434 = vector.broadcast %433 : vector<16x1xf32> to vector<16x32xf32>
    %435 = arith.mulf %430, %434 : vector<16x32xf32>
    %436 = vector.broadcast %416 : vector<1x32xf32> to vector<16x32xf32>
    %437 = arith.mulf %435, %436 : vector<16x32xf32>
    %438 = vector.broadcast %417 : vector<1x32xf32> to vector<16x32xf32>
    %439 = arith.addf %437, %438 : vector<16x32xf32>
    %c0_173 = arith.constant 0 : index
    %c0_174 = arith.constant 0 : index
    %440 = vector.load %arg21[%c0_173, %c0_174] : memref<32x64xf32, #tpu.memory_space<vmem>>, vector<32x64xf32>
    %cst_175 = arith.constant dense<0.000000e+00> : vector<16x64xf32>
    %441 = tpu.matmul %439, %440, %cst_175 {dimension_numbers = #tpu.dot_dimension_numbers<[1], [0], [0], [1], [0, 0, 1, 1], [], []>} : vector<16x32xf32>, vector<32x64xf32>, vector<16x64xf32> -> vector<16x64xf32>
    %c0_176 = arith.constant 0 : index
    %c0_177 = arith.constant 0 : index
    %442 = vector.load %arg1[%c0_176, %c0_177] : memref<1x64xf32, #tpu.memory_space<vmem>>, vector<1x64xf32>
    %443 = vector.broadcast %442 : vector<1x64xf32> to vector<16x64xf32>
    %444 = arith.addf %441, %443 : vector<16x64xf32>
    %cst_178 = arith.constant 0.000000e+00 : f32
    %445 = vector.broadcast %cst_178 : f32 to vector<16x64xf32>
    %446 = arith.maximumf %444, %445 : vector<16x64xf32>
    %c0_179 = arith.constant 0 : index
    %c0_180 = arith.constant 0 : index
    %447 = vector.load %arg22[%c0_179, %c0_180] : memref<64x32xf32, #tpu.memory_space<vmem>>, vector<64x32xf32>
    %cst_181 = arith.constant dense<0.000000e+00> : vector<16x32xf32>
    %448 = tpu.matmul %446, %447, %cst_181 {dimension_numbers = #tpu.dot_dimension_numbers<[1], [0], [0], [1], [0, 0, 1, 1], [], []>} : vector<16x64xf32>, vector<64x32xf32>, vector<16x32xf32> -> vector<16x32xf32>
    %c0_182 = arith.constant 0 : index
    %c0_183 = arith.constant 0 : index
    %449 = vector.load %arg2[%c0_182, %c0_183] : memref<1x32xf32, #tpu.memory_space<vmem>>, vector<1x32xf32>
    %450 = vector.broadcast %449 : vector<1x32xf32> to vector<16x32xf32>
    %451 = arith.addf %448, %450 : vector<16x32xf32>
    %452 = arith.addf %439, %451 : vector<16x32xf32>
    %c0_184 = arith.constant 0 : index
    %c0_185 = arith.constant 0 : index
    %453 = vector.load %arg14[%c0_184, %c0_185] : memref<1x32xf32, #tpu.memory_space<vmem>>, vector<1x32xf32>
    %c0_186 = arith.constant 0 : index
    %c0_187 = arith.constant 0 : index
    %454 = vector.load %arg13[%c0_186, %c0_187] : memref<1x32xf32, #tpu.memory_space<vmem>>, vector<1x32xf32>
    %cst_188 = arith.constant dense<0.000000e+00> : vector<16xf32>
    %455 = vector.multi_reduction <add>, %452, %cst_188 [1] : vector<16x32xf32> to vector<16xf32>
    %456 = vector.shape_cast %455 : vector<16xf32> to vector<16x1xf32>
    %cst_189 = arith.constant 3.200000e+01 : f32
    %457 = vector.broadcast %cst_189 : f32 to vector<16x1xf32>
    %458 = arith.divf %456, %457 : vector<16x1xf32>
    %459 = vector.broadcast %458 : vector<16x1xf32> to vector<16x32xf32>
    %460 = arith.subf %452, %459 : vector<16x32xf32>
    %461 = arith.mulf %460, %460 : vector<16x32xf32>
    %cst_190 = arith.constant dense<0.000000e+00> : vector<16xf32>
    %462 = vector.multi_reduction <add>, %461, %cst_190 [1] : vector<16x32xf32> to vector<16xf32>
    %463 = vector.shape_cast %462 : vector<16xf32> to vector<16x1xf32>
    %cst_191 = arith.constant 3.200000e+01 : f32
    %464 = vector.broadcast %cst_191 : f32 to vector<16x1xf32>
    %465 = arith.divf %463, %464 : vector<16x1xf32>
    %466 = vector.broadcast %458 : vector<16x1xf32> to vector<16x32xf32>
    %467 = arith.subf %452, %466 : vector<16x32xf32>
    %cst_192 = arith.constant 9.99999974E-6 : f32
    %468 = vector.broadcast %cst_192 : f32 to vector<16x1xf32>
    %469 = arith.addf %465, %468 : vector<16x1xf32>
    %470 = math.rsqrt %469 : vector<16x1xf32>
    %471 = vector.broadcast %470 : vector<16x1xf32> to vector<16x32xf32>
    %472 = arith.mulf %467, %471 : vector<16x32xf32>
    %473 = vector.broadcast %453 : vector<1x32xf32> to vector<16x32xf32>
    %474 = arith.mulf %472, %473 : vector<16x32xf32>
    %475 = vector.broadcast %454 : vector<1x32xf32> to vector<16x32xf32>
    %476 = arith.addf %474, %475 : vector<16x32xf32>
    %c0_193 = arith.constant 0 : index
    %c0_194 = arith.constant 0 : index
    %477 = vector.load %arg24[%c0_193, %c0_194] : memref<1x32xf32, #tpu.memory_space<vmem>>, vector<1x32xf32>
    %c0_195 = arith.constant 0 : index
    %c0_196 = arith.constant 0 : index
    %478 = vector.load %arg23[%c0_195, %c0_196] : memref<1x32xf32, #tpu.memory_space<vmem>>, vector<1x32xf32>
    %cst_197 = arith.constant dense<0.000000e+00> : vector<16xf32>
    %479 = vector.multi_reduction <add>, %476, %cst_197 [1] : vector<16x32xf32> to vector<16xf32>
    %480 = vector.shape_cast %479 : vector<16xf32> to vector<16x1xf32>
    %cst_198 = arith.constant 3.200000e+01 : f32
    %481 = vector.broadcast %cst_198 : f32 to vector<16x1xf32>
    %482 = arith.divf %480, %481 : vector<16x1xf32>
    %483 = vector.broadcast %482 : vector<16x1xf32> to vector<16x32xf32>
    %484 = arith.subf %476, %483 : vector<16x32xf32>
    %485 = arith.mulf %484, %484 : vector<16x32xf32>
    %cst_199 = arith.constant dense<0.000000e+00> : vector<16xf32>
    %486 = vector.multi_reduction <add>, %485, %cst_199 [1] : vector<16x32xf32> to vector<16xf32>
    %487 = vector.shape_cast %486 : vector<16xf32> to vector<16x1xf32>
    %cst_200 = arith.constant 3.200000e+01 : f32
    %488 = vector.broadcast %cst_200 : f32 to vector<16x1xf32>
    %489 = arith.divf %487, %488 : vector<16x1xf32>
    %490 = vector.broadcast %482 : vector<16x1xf32> to vector<16x32xf32>
    %491 = arith.subf %476, %490 : vector<16x32xf32>
    %cst_201 = arith.constant 9.99999974E-6 : f32
    %492 = vector.broadcast %cst_201 : f32 to vector<16x1xf32>
    %493 = arith.addf %489, %492 : vector<16x1xf32>
    %494 = math.rsqrt %493 : vector<16x1xf32>
    %495 = vector.broadcast %494 : vector<16x1xf32> to vector<16x32xf32>
    %496 = arith.mulf %491, %495 : vector<16x32xf32>
    %497 = vector.broadcast %477 : vector<1x32xf32> to vector<16x32xf32>
    %498 = arith.mulf %496, %497 : vector<16x32xf32>
    %499 = vector.broadcast %478 : vector<1x32xf32> to vector<16x32xf32>
    %500 = arith.addf %498, %499 : vector<16x32xf32>
    %c0_202 = arith.constant 0 : index
    %c0_203 = arith.constant 0 : index
    %501 = vector.load %arg42[%c0_202, %c0_203] : memref<32x128xf32, #tpu.memory_space<vmem>>, vector<32x128xf32>
    %cst_204 = arith.constant dense<0.000000e+00> : vector<16x128xf32>
    %502 = tpu.matmul %500, %501, %cst_204 {dimension_numbers = #tpu.dot_dimension_numbers<[1], [0], [0], [1], [0, 0, 1, 1], [], []>} : vector<16x32xf32>, vector<32x128xf32>, vector<16x128xf32> -> vector<16x128xf32>
    %c0_205 = arith.constant 0 : index
    %c0_206 = arith.constant 0 : index
    %503 = vector.load %arg41[%c0_205, %c0_206] : memref<1x128xf32, #tpu.memory_space<vmem>>, vector<1x128xf32>
    %504 = vector.broadcast %503 : vector<1x128xf32> to vector<16x128xf32>
    %505 = arith.addf %502, %504 : vector<16x128xf32>
    %c0_207 = arith.constant 0 : index
    %c0_208 = arith.constant 0 : index
    %506 = vector.load %arg48[%c0_207, %c0_208] : memref<16x128xf32, #tpu.memory_space<vmem>>, vector<16x128xf32>
    tpu.vector_store %arg48[%c0_207, %c0_208], %505 {strides = array<i32>} : memref<16x128xf32, #tpu.memory_space<vmem>>, vector<16x128xf32>,
    return
  }
  func.func @transform_0(%arg0: i32) -> (i32, i32) {
    %c0_i32 = arith.constant 0 : i32
    %c0_i32_0 = arith.constant 0 : i32
    %c0_i32_1 = arith.constant 0 : i32
    return %c0_i32, %c0_i32_0 : i32, i32
  }
  func.func @transform_1(%arg0: i32) -> (i32, i32) {
    %c0_i32 = arith.constant 0 : i32
    %c0_i32_0 = arith.constant 0 : i32
    %c0_i32_1 = arith.constant 0 : i32
    return %c0_i32, %c0_i32_0 : i32, i32
  }
  func.func @transform_2(%arg0: i32) -> (i32, i32) {
    %c0_i32 = arith.constant 0 : i32
    %c0_i32_0 = arith.constant 0 : i32
    %c0_i32_1 = arith.constant 0 : i32
    return %c0_i32, %c0_i32_0 : i32, i32
  }
  func.func @transform_3(%arg0: i32) -> (i32, i32) {
    %c0_i32 = arith.constant 0 : i32
    %c0_i32_0 = arith.constant 0 : i32
    %c0_i32_1 = arith.constant 0 : i32
    return %c0_i32, %c0_i32_0 : i32, i32
  }
  func.func @transform_4(%arg0: i32) -> (i32, i32) {
    %c0_i32 = arith.constant 0 : i32
    %c0_i32_0 = arith.constant 0 : i32
    %c0_i32_1 = arith.constant 0 : i32
    return %c0_i32, %c0_i32_0 : i32, i32
  }
  func.func @transform_5(%arg0: i32) -> (i32, i32) {
    %c0_i32 = arith.constant 0 : i32
    %c0_i32_0 = arith.constant 0 : i32
    %c0_i32_1 = arith.constant 0 : i32
    return %c0_i32, %c0_i32_0 : i32, i32
  }
  func.func @transform_6(%arg0: i32) -> (i32, i32) {
    %c0_i32 = arith.constant 0 : i32
    %c0_i32_0 = arith.constant 0 : i32
    %c0_i32_1 = arith.constant 0 : i32
    return %c0_i32, %c0_i32_0 : i32, i32
  }
  func.func @transform_7(%arg0: i32) -> (i32, i32) {
    %c0_i32 = arith.constant 0 : i32
    %c0_i32_0 = arith.constant 0 : i32
    %c0_i32_1 = arith.constant 0 : i32
    return %c0_i32, %c0_i32_0 : i32, i32
  }
  func.func @transform_8(%arg0: i32) -> (i32, i32) {
    %c0_i32 = arith.constant 0 : i32
    %c0_i32_0 = arith.constant 0 : i32
    %c0_i32_1 = arith.constant 0 : i32
    return %c0_i32, %c0_i32_0 : i32, i32
  }
  func.func @transform_9(%arg0: i32) -> (i32, i32) {
    %c0_i32 = arith.constant 0 : i32
    %c0_i32_0 = arith.constant 0 : i32
    %c0_i32_1 = arith.constant 0 : i32
    return %c0_i32, %c0_i32_0 : i32, i32
  }
  func.func @transform_10(%arg0: i32) -> (i32, i32) {
    %c0_i32 = arith.constant 0 : i32
    %c0_i32_0 = arith.constant 0 : i32
    %c0_i32_1 = arith.constant 0 : i32
    return %c0_i32, %c0_i32_0 : i32, i32
  }
  func.func @transform_11(%arg0: i32) -> (i32, i32) {
    %c0_i32 = arith.constant 0 : i32
    %c0_i32_0 = arith.constant 0 : i32
    %c0_i32_1 = arith.constant 0 : i32
    return %c0_i32, %c0_i32_0 : i32, i32
  }
  func.func @transform_12(%arg0: i32) -> (i32, i32) {
    %c0_i32 = arith.constant 0 : i32
    %c0_i32_0 = arith.constant 0 : i32
    %c0_i32_1 = arith.constant 0 : i32
    return %c0_i32, %c0_i32_0 : i32, i32
  }
  func.func @transform_13(%arg0: i32) -> (i32, i32) {
    %c0_i32 = arith.constant 0 : i32
    %c0_i32_0 = arith.constant 0 : i32
    %c0_i32_1 = arith.constant 0 : i32
    return %c0_i32, %c0_i32_0 : i32, i32
  }
  func.func @transform_14(%arg0: i32) -> (i32, i32) {
    %c0_i32 = arith.constant 0 : i32
    %c0_i32_0 = arith.constant 0 : i32
    %c0_i32_1 = arith.constant 0 : i32
    return %c0_i32, %c0_i32_0 : i32, i32
  }
  func.func @transform_15(%arg0: i32) -> (i32, i32) {
    %c0_i32 = arith.constant 0 : i32
    %c0_i32_0 = arith.constant 0 : i32
    %c0_i32_1 = arith.constant 0 : i32
    return %c0_i32, %c0_i32_0 : i32, i32
  }
  func.func @transform_16(%arg0: i32) -> (i32, i32) {
    %c0_i32 = arith.constant 0 : i32
    %c0_i32_0 = arith.constant 0 : i32
    %c0_i32_1 = arith.constant 0 : i32
    return %c0_i32, %c0_i32_0 : i32, i32
  }
  func.func @transform_17(%arg0: i32) -> (i32, i32) {
    %c0_i32 = arith.constant 0 : i32
    %c0_i32_0 = arith.constant 0 : i32
    %c0_i32_1 = arith.constant 0 : i32
    return %c0_i32, %c0_i32_0 : i32, i32
  }
  func.func @transform_18(%arg0: i32) -> (i32, i32) {
    %c0_i32 = arith.constant 0 : i32
    %c0_i32_0 = arith.constant 0 : i32
    %c0_i32_1 = arith.constant 0 : i32
    return %c0_i32, %c0_i32_0 : i32, i32
  }
  func.func @transform_19(%arg0: i32) -> (i32, i32) {
    %c0_i32 = arith.constant 0 : i32
    %c0_i32_0 = arith.constant 0 : i32
    %c0_i32_1 = arith.constant 0 : i32
    return %c0_i32, %c0_i32_0 : i32, i32
  }
  func.func @transform_20(%arg0: i32) -> (i32, i32) {
    %c0_i32 = arith.constant 0 : i32
    %c0_i32_0 = arith.constant 0 : i32
    %c0_i32_1 = arith.constant 0 : i32
    return %c0_i32, %c0_i32_0 : i32, i32
  }
  func.func @transform_21(%arg0: i32) -> (i32, i32) {
    %c0_i32 = arith.constant 0 : i32
    %c0_i32_0 = arith.constant 0 : i32
    %c0_i32_1 = arith.constant 0 : i32
    return %c0_i32, %c0_i32_0 : i32, i32
  }
  func.func @transform_22(%arg0: i32) -> (i32, i32) {
    %c0_i32 = arith.constant 0 : i32
    %c0_i32_0 = arith.constant 0 : i32
    %c0_i32_1 = arith.constant 0 : i32
    return %c0_i32, %c0_i32_0 : i32, i32
  }
  func.func @transform_23(%arg0: i32) -> (i32, i32) {
    %c0_i32 = arith.constant 0 : i32
    %c0_i32_0 = arith.constant 0 : i32
    %c0_i32_1 = arith.constant 0 : i32
    return %c0_i32, %c0_i32_0 : i32, i32
  }
  func.func @transform_24(%arg0: i32) -> (i32, i32) {
    %c0_i32 = arith.constant 0 : i32
    %c0_i32_0 = arith.constant 0 : i32
    %c0_i32_1 = arith.constant 0 : i32
    return %c0_i32, %c0_i32_0 : i32, i32
  }
  func.func @transform_25(%arg0: i32) -> (i32, i32) {
    %c0_i32 = arith.constant 0 : i32
    %c0_i32_0 = arith.constant 0 : i32
    %c0_i32_1 = arith.constant 0 : i32
    return %c0_i32, %c0_i32_0 : i32, i32
  }
  func.func @transform_26(%arg0: i32) -> (i32, i32) {
    %c0_i32 = arith.constant 0 : i32
    %c0_i32_0 = arith.constant 0 : i32
    %c0_i32_1 = arith.constant 0 : i32
    return %c0_i32, %c0_i32_0 : i32, i32
  }
  func.func @transform_27(%arg0: i32) -> (i32, i32) {
    %c0_i32 = arith.constant 0 : i32
    %c0_i32_0 = arith.constant 0 : i32
    %c0_i32_1 = arith.constant 0 : i32
    return %c0_i32, %c0_i32_0 : i32, i32
  }
  func.func @transform_28(%arg0: i32) -> (i32, i32) {
    %c0_i32 = arith.constant 0 : i32
    %c0_i32_0 = arith.constant 0 : i32
    %c0_i32_1 = arith.constant 0 : i32
    return %c0_i32, %c0_i32_0 : i32, i32
  }
  func.func @transform_29(%arg0: i32) -> (i32, i32) {
    %c0_i32 = arith.constant 0 : i32
    %c0_i32_0 = arith.constant 0 : i32
    %c0_i32_1 = arith.constant 0 : i32
    return %c0_i32, %c0_i32_0 : i32, i32
  }
  func.func @transform_30(%arg0: i32) -> (i32, i32) {
    %c0_i32 = arith.constant 0 : i32
    %c0_i32_0 = arith.constant 0 : i32
    %c0_i32_1 = arith.constant 0 : i32
    return %c0_i32, %c0_i32_0 : i32, i32
  }
  func.func @transform_31(%arg0: i32) -> (i32, i32) {
    %c0_i32 = arith.constant 0 : i32
    %c0_i32_0 = arith.constant 0 : i32
    %c0_i32_1 = arith.constant 0 : i32
    return %c0_i32, %c0_i32_0 : i32, i32
  }
  func.func @transform_32(%arg0: i32) -> (i32, i32) {
    %c0_i32 = arith.constant 0 : i32
    %c0_i32_0 = arith.constant 0 : i32
    %c0_i32_1 = arith.constant 0 : i32
    return %c0_i32, %c0_i32_0 : i32, i32
  }
  func.func @transform_33(%arg0: i32) -> (i32, i32) {
    %c0_i32 = arith.constant 0 : i32
    %c0_i32_0 = arith.constant 0 : i32
    %c0_i32_1 = arith.constant 0 : i32
    return %c0_i32, %c0_i32_0 : i32, i32
  }
  func.func @transform_34(%arg0: i32) -> (i32, i32) {
    %c0_i32 = arith.constant 0 : i32
    %c0_i32_0 = arith.constant 0 : i32
    %c0_i32_1 = arith.constant 0 : i32
    return %c0_i32, %c0_i32_0 : i32, i32
  }
  func.func @transform_35(%arg0: i32) -> (i32, i32) {
    %c0_i32 = arith.constant 0 : i32
    %c0_i32_0 = arith.constant 0 : i32
    %c0_i32_1 = arith.constant 0 : i32
    return %c0_i32, %c0_i32_0 : i32, i32
  }
  func.func @transform_36(%arg0: i32) -> (i32, i32) {
    %c0_i32 = arith.constant 0 : i32
    %c0_i32_0 = arith.constant 0 : i32
    %c0_i32_1 = arith.constant 0 : i32
    return %c0_i32, %c0_i32_0 : i32, i32
  }
  func.func @transform_37(%arg0: i32) -> (i32, i32) {
    %c0_i32 = arith.constant 0 : i32
    %c0_i32_0 = arith.constant 0 : i32
    %c0_i32_1 = arith.constant 0 : i32
    return %c0_i32, %c0_i32_0 : i32, i32
  }
  func.func @transform_38(%arg0: i32) -> (i32, i32) {
    %c0_i32 = arith.constant 0 : i32
    %c0_i32_0 = arith.constant 0 : i32
    %c0_i32_1 = arith.constant 0 : i32
    return %c0_i32, %c0_i32_0 : i32, i32
  }
  func.func @transform_39(%arg0: i32) -> (i32, i32) {
    %c0_i32 = arith.constant 0 : i32
    %c0_i32_0 = arith.constant 0 : i32
    %c0_i32_1 = arith.constant 0 : i32
    return %c0_i32, %c0_i32_0 : i32, i32
  }
  func.func @transform_40(%arg0: i32) -> (i32, i32) {
    %c0_i32 = arith.constant 0 : i32
    %c0_i32_0 = arith.constant 0 : i32
    %c0_i32_1 = arith.constant 0 : i32
    return %c0_i32, %c0_i32_0 : i32, i32
  }
  func.func @transform_41(%arg0: i32) -> (i32, i32) {
    %c0_i32 = arith.constant 0 : i32
    %c0_i32_0 = arith.constant 0 : i32
    %c0_i32_1 = arith.constant 0 : i32
    return %c0_i32, %c0_i32_0 : i32, i32
  }
  func.func @transform_42(%arg0: i32) -> (i32, i32) {
    %c0_i32 = arith.constant 0 : i32
    %c0_i32_0 = arith.constant 0 : i32
    %c0_i32_1 = arith.constant 0 : i32
    return %c0_i32, %c0_i32_0 : i32, i32
  }
  func.func @transform_43(%arg0: i32) -> (i32, i32) {
    %c0_i32 = arith.constant 0 : i32
    %c0_i32_0 = arith.constant 0 : i32
    %c0_i32_1 = arith.constant 0 : i32
    return %c0_i32, %c0_i32_0 : i32, i32
  }
  func.func @transform_44(%arg0: i32) -> (i32, i32) {
    %c0_i32 = arith.constant 0 : i32
    %c0_i32_0 = arith.constant 0 : i32
    %c0_i32_1 = arith.constant 0 : i32
    return %c0_i32, %c0_i32_0 : i32, i32
  }
  func.func @transform_45(%arg0: i32) -> (i32, i32) {
    %c0_i32 = arith.constant 0 : i32
    %c0_i32_0 = arith.constant 0 : i32
    %c0_i32_1 = arith.constant 0 : i32
    return %c0_i32, %c0_i32_0 : i32, i32
  }
  func.func @transform_46(%arg0: i32) -> (i32, i32) {
    %c0_i32 = arith.constant 0 : i32
    %c0_i32_0 = arith.constant 0 : i32
    %c0_i32_1 = arith.constant 0 : i32
    return %c0_i32, %c0_i32_0 : i32, i32
  }
  func.func @transform_47(%arg0: i32) -> (i32, i32) {
    %c0_i32 = arith.constant 0 : i32
    %c0_i32_0 = arith.constant 0 : i32
    %c0_i32_1 = arith.constant 0 : i32
    return %c0_i32, %c0_i32_0 : i32, i32
  }
}

</mosaic_0001>

<llo_original>
// kernel: transformer_forward.1
$region0: #{transformer_forward.1}
  #allocation0 [shape = 'u32[]', space=smem, size = 0x4, offset = 0x4, fixed_abs, tag = 'smem constant byte address 0x4 - core index']
  #allocation1 [shape = 'u32[144,128]{1,0:T(1,128)}', space=vmem, size = 0x12000, scoped, tag = 'internal scratch']
  %s0 = inlined_call_operand.smem [shape: u32[48], index: -1, kind: input, shape index: {}]
  %s1 = sld [smem:[%s0]]
  %s2 = scalar_lea.smem %s0, 1
  %s3 = sld [smem:[%s2]]
  %s4 = scalar_lea.smem %s0, 2
  %s5 = sld [smem:[%s4]]
  %s6 = scalar_lea.smem %s0, 3
  %s7 = sld [smem:[%s6]]
  %s8 = scalar_lea.smem %s0, 4
  %s9 = sld [smem:[%s8]]
  %s10 = scalar_lea.smem %s0, 5
  %s11 = sld [smem:[%s10]]
  %s12 = scalar_lea.smem %s0, 6
  %s13 = sld [smem:[%s12]]
  %s14 = scalar_lea.smem %s0, 7
  %s15 = sld [smem:[%s14]]
  %s16 = scalar_lea.smem %s0, 8
  %s17 = sld [smem:[%s16]]
  %s18 = scalar_lea.smem %s0, 9
  %s19 = sld [smem:[%s18]]
  %s20 = scalar_lea.smem %s0, 10
  %s21 = sld [smem:[%s20]]
  %s22 = scalar_lea.smem %s0, 11
  %s23 = sld [smem:[%s22]]
  %s24 = scalar_lea.smem %s0, 12
  %s25 = sld [smem:[%s24]]
  %s26 = scalar_lea.smem %s0, 13
  %s27 = sld [smem:[%s26]]
  %s28 = scalar_lea.smem %s0, 14
  %s29 = sld [smem:[%s28]]
  %s30 = scalar_lea.smem %s0, 15
  %s31 = sld [smem:[%s30]]
  %s32 = scalar_lea.smem %s0, 16
  %s33 = sld [smem:[%s32]]
  %s34 = scalar_lea.smem %s0, 17
  %s35 = sld [smem:[%s34]]
  %s36 = scalar_lea.smem %s0, 18
  %s37 = sld [smem:[%s36]]
  %s38 = scalar_lea.smem %s0, 19
  %s39 = sld [smem:[%s38]]
  %s40 = scalar_lea.smem %s0, 20
  %s41 = sld [smem:[%s40]]
  %s42 = scalar_lea.smem %s0, 21
  %s43 = sld [smem:[%s42]]
  %s44 = scalar_lea.smem %s0, 22
  %s45 = sld [smem:[%s44]]
  %s46 = scalar_lea.smem %s0, 23
  %s47 = sld [smem:[%s46]]
  %s48 = scalar_lea.smem %s0, 24
  %s49 = sld [smem:[%s48]]
  %s50 = scalar_lea.smem %s0, 25
  %s51 = sld [smem:[%s50]]
  %s52 = scalar_lea.smem %s0, 26
  %s53 = sld [smem:[%s52]]
  %s54 = scalar_lea.smem %s0, 27
  %s55 = sld [smem:[%s54]]
  %s56 = scalar_lea.smem %s0, 28
  %s57 = sld [smem:[%s56]]
  %s58 = scalar_lea.smem %s0, 29
  %s59 = sld [smem:[%s58]]
  %s60 = scalar_lea.smem %s0, 30
  %s61 = sld [smem:[%s60]]
  %s62 = scalar_lea.smem %s0, 31
  %s63 = sld [smem:[%s62]]
  %s64 = scalar_lea.smem %s0, 32
  %s65 = sld [smem:[%s64]]
  %s66 = scalar_lea.smem %s0, 33
  %s67 = sld [smem:[%s66]]
  %s68 = scalar_lea.smem %s0, 34
  %s69 = sld [smem:[%s68]]
  %s70 = scalar_lea.smem %s0, 35
  %s71 = sld [smem:[%s70]]
  %s72 = scalar_lea.smem %s0, 36
  %s73 = sld [smem:[%s72]]
  %s74 = scalar_lea.smem %s0, 37
  %s75 = sld [smem:[%s74]]
  %s76 = scalar_lea.smem %s0, 38
  %s77 = sld [smem:[%s76]]
  %s78 = scalar_lea.smem %s0, 39
  %s79 = sld [smem:[%s78]]
  %s80 = scalar_lea.smem %s0, 40
  %s81 = sld [smem:[%s80]]
  %s82 = scalar_lea.smem %s0, 41
  %s83 = sld [smem:[%s82]]
  %s84 = scalar_lea.smem %s0, 42
  %s85 = sld [smem:[%s84]]
  %s86 = scalar_lea.smem %s0, 43
  %s87 = sld [smem:[%s86]]
  %s88 = scalar_lea.smem %s0, 44
  %s89 = sld [smem:[%s88]]
  %s90 = scalar_lea.smem %s0, 45
  %s91 = sld [smem:[%s90]]
  %s92 = scalar_lea.smem %s0, 46
  %s93 = sld [smem:[%s92]]
  %s94 = scalar_lea.smem %s0, 47
  %s95 = sld [smem:[%s94]]
  %s96 = sld [smem:[#allocation0]]
  $region314: #{transformer_forward.1} parent=0
    _
  %s98 = ssub.s32 1, %s96
  %s99 = scalar_select 0, %s98, %s96
  $region1: #{transformer_forward.1} parent=0
    #allocation2 [shape = 'u8[512]{0}', space=vmem, size = 0x400, scoped, tag = 'input window, operand 0, single buffered']
    #allocation3 [shape = 's32[1]{0}', space=sflag, size = 0x4, scoped, tag = 'scoped memory for transformer_forward.1']
    #allocation4 [shape = 'u8[512]{0}', space=vmem, size = 0x400, scoped, tag = 'input window, operand 1, single buffered']
    #allocation5 [shape = 's32[1]{0}', space=sflag, size = 0x4, scoped, tag = 'scoped memory for transformer_forward.1']
    #allocation6 [shape = 'u8[512]{0}', space=vmem, size = 0x400, scoped, tag = 'input window, operand 2, single buffered']
    #allocation7 [shape = 'u8[512]{0}', space=vmem, size = 0x400, scoped, tag = 'input window, operand 3, single buffered']
    #allocation8 [shape = 's32[1]{0}', space=sflag, size = 0x4, scoped, tag = 'scoped memory for transformer_forward.1']
    #allocation9 [shape = 'u8[512]{0}', space=vmem, size = 0x400, scoped, tag = 'input window, operand 4, single buffered']
    #allocation10 [shape = 'u8[512]{0}', space=vmem, size = 0x400, scoped, tag = 'input window, operand 8, single buffered']
    #allocation11 [shape = 's32[1]{0}', space=sflag, size = 0x4, scoped, tag = 'scoped memory for transformer_forward.1']
    #allocation12 [shape = 'u8[512]{0}', space=vmem, size = 0x400, scoped, tag = 'input window, operand 9, single buffered']
    #allocation13 [shape = 'u8[512]{0}', space=vmem, size = 0x400, scoped, tag = 'input window, operand 10, single buffered']
    #allocation14 [shape = 's32[1]{0}', space=sflag, size = 0x4, scoped, tag = 'scoped memory for transformer_forward.1']
    #allocation15 [shape = 'u8[512]{0}', space=vmem, size = 0x400, scoped, tag = 'input window, operand 11, single buffered']
    #allocation16 [shape = 'u8[512]{0}', space=vmem, size = 0x400, scoped, tag = 'input window, operand 12, single buffered']
    #allocation17 [shape = 's32[1]{0}', space=sflag, size = 0x4, scoped, tag = 'scoped memory for transformer_forward.1']
    #allocation18 [shape = 'u8[512]{0}', space=vmem, size = 0x400, scoped, tag = 'input window, operand 13, single buffered']
    #allocation19 [shape = 'u8[512]{0}', space=vmem, size = 0x400, scoped, tag = 'input window, operand 14, single buffered']
    #allocation20 [shape = 's32[1]{0}', space=sflag, size = 0x4, scoped, tag = 'scoped memory for transformer_forward.1']
    #allocation21 [shape = 'u8[512]{0}', space=vmem, size = 0x400, scoped, tag = 'input window, operand 15, single buffered']
    #allocation22 [shape = 'u8[512]{0}', space=vmem, size = 0x400, scoped, tag = 'input window, operand 16, single buffered']
    #allocation23 [shape = 's32[1]{0}', space=sflag, size = 0x4, scoped, tag = 'scoped memory for transformer_forward.1']
    #allocation24 [shape = 'u8[512]{0}', space=vmem, size = 0x400, scoped, tag = 'input window, operand 22, single buffered']
    #allocation25 [shape = 'u8[512]{0}', space=vmem, size = 0x400, scoped, tag = 'input window, operand 23, single buffered']
    #allocation26 [shape = 's32[1]{0}', space=sflag, size = 0x4, scoped, tag = 'scoped memory for transformer_forward.1']
    #allocation27 [shape = 'u8[512]{0}', space=vmem, size = 0x400, scoped, tag = 'input window, operand 24, single buffered']
    #allocation28 [shape = 'u8[512]{0}', space=vmem, size = 0x400, scoped, tag = 'input window, operand 25, single buffered']
    #allocation29 [shape = 's32[1]{0}', space=sflag, size = 0x4, scoped, tag = 'scoped memory for transformer_forward.1']
    #allocation30 [shape = 'u8[512]{0}', space=vmem, size = 0x400, scoped, tag = 'input window, operand 26, single buffered']
    #allocation31 [shape = 'u8[512]{0}', space=vmem, size = 0x400, scoped, tag = 'input window, operand 27, single buffered']
    #allocation32 [shape = 's32[1]{0}', space=sflag, size = 0x4, scoped, tag = 'scoped memory for transformer_forward.1']
    #allocation33 [shape = 'u8[512]{0}', space=vmem, size = 0x400, scoped, tag = 'input window, operand 28, single buffered']
    #allocation34 [shape = 'u8[512]{0}', space=vmem, size = 0x400, scoped, tag = 'input window, operand 29, single buffered']
    #allocation35 [shape = 's32[1]{0}', space=sflag, size = 0x4, scoped, tag = 'scoped memory for transformer_forward.1']
    #allocation36 [shape = 'u8[512]{0}', space=vmem, size = 0x400, scoped, tag = 'input window, operand 30, single buffered']
    #allocation37 [shape = 'u8[512]{0}', space=vmem, size = 0x400, scoped, tag = 'input window, operand 31, single buffered']
    #allocation38 [shape = 's32[1]{0}', space=sflag, size = 0x4, scoped, tag = 'scoped memory for transformer_forward.1']
    #allocation39 [shape = 'u8[512]{0}', space=vmem, size = 0x400, scoped, tag = 'input window, operand 32, single buffered']
    #allocation40 [shape = 'u8[512]{0}', space=vmem, size = 0x400, scoped, tag = 'input window, operand 38, single buffered']
    #allocation41 [shape = 's32[1]{0}', space=sflag, size = 0x4, scoped, tag = 'scoped memory for transformer_forward.1']
    #allocation42 [shape = 'u8[512]{0}', space=vmem, size = 0x400, scoped, tag = 'input window, operand 39, single buffered']
    #allocation43 [shape = 'u8[512]{0}', space=vmem, size = 0x400, scoped, tag = 'input window, operand 40, single buffered']
    #allocation44 [shape = 's32[1]{0}', space=sflag, size = 0x4, scoped, tag = 'scoped memory for transformer_forward.1']
    #allocation45 [shape = 'u8[16384]{0}', space=vmem, size = 0x4000, scoped, tag = 'input window, operand 41, single buffered']
    %100 = vsyncpa [#allocation3], 0
    %101 = vsyncpa [#allocation5], 0
    %102 = vsyncpa [#allocation8], 0
    %103 = vsyncpa [#allocation11], 0
    %104 = vsyncpa [#allocation14], 0
    %105 = vsyncpa [#allocation17], 0
    %106 = vsyncpa [#allocation20], 0
    %107 = vsyncpa [#allocation23], 0
    %108 = vsyncpa [#allocation26], 0
    %109 = vsyncpa [#allocation29], 0
    %110 = vsyncpa [#allocation32], 0
    %111 = vsyncpa [#allocation35], 0
    %112 = vsyncpa [#allocation38], 0
    %113 = vsyncpa [#allocation41], 0
    %114 = vsyncpa [#allocation44], 0
    // Predicated region
    $region2: #{transformer_forward.1} parent=1 // pred_check
      _
    $region3: #{transformer_forward.1} parent=1 // pred_check_branch
      %116 = sbr.rel (0) target = $region5
    $region4: #{transformer_forward.1} parent=1 // pred_region
      %s118 = ssub.s32 16, 16
      %119 = vsyncadd [#allocation3], %s118
      %s121 = sshll.u32 [#allocation2], 4
      %s122 = int_to_ptr.vmem [resolvable:$true] %s121
      %124 = dma.hbm_to_vmem [thread:$0]  %s1, 16, %s122, [#allocation3]
    $region5: #{transformer_forward.1} parent=1 // pred_fallthru
      _
    // Predicated region
    $region6: #{transformer_forward.1} parent=1 // pred_check
      _
    $region7: #{transformer_forward.1} parent=1 // pred_check_branch
      %126 = sbr.rel (0) target = $region9
    $region8: #{transformer_forward.1} parent=1 // pred_region
      %s128 = ssub.s32 16, 16
      %129 = vsyncadd [#allocation5], %s128
      %s131 = sshll.u32 [#allocation4], 4
      %s132 = int_to_ptr.vmem [resolvable:$true] %s131
      %134 = dma.hbm_to_vmem [thread:$0]  %s3, 16, %s132, [#allocation5]
    $region9: #{transformer_forward.1} parent=1 // pred_fallthru
      _
    // Predicated region
    $region10: #{transformer_forward.1} parent=1 // pred_check
      _
    $region11: #{transformer_forward.1} parent=1 // pred_check_branch
      %136 = sbr.rel (0) target = $region13
    $region12: #{transformer_forward.1} parent=1 // pred_region
      %s138 = ssub.s32 16, 16
      %139 = vsyncadd [#allocation5], %s138
      %s141 = sshll.u32 [#allocation6], 4
      %s142 = int_to_ptr.vmem [resolvable:$true] %s141
      %144 = dma.hbm_to_vmem [thread:$0]  %s5, 16, %s142, [#allocation5]
    $region13: #{transformer_forward.1} parent=1 // pred_fallthru
      _
    // Predicated region
    $region14: #{transformer_forward.1} parent=1 // pred_check
      _
    $region15: #{transformer_forward.1} parent=1 // pred_check_branch
      %146 = sbr.rel (0) target = $region17
    $region16: #{transformer_forward.1} parent=1 // pred_region
      %s148 = ssub.s32 16, 16
      %149 = vsyncadd [#allocation8], %s148
      %s151 = sshll.u32 [#allocation7], 4
      %s152 = int_to_ptr.vmem [resolvable:$true] %s151
      %154 = dma.hbm_to_vmem [thread:$0]  %s7, 16, %s152, [#allocation8]
    $region17: #{transformer_forward.1} parent=1 // pred_fallthru
      _
    // Predicated region
    $region18: #{transformer_forward.1} parent=1 // pred_check
      _
    $region19: #{transformer_forward.1} parent=1 // pred_check_branch
      %156 = sbr.rel (0) target = $region21
    $region20: #{transformer_forward.1} parent=1 // pred_region
      %s158 = ssub.s32 16, 16
      %159 = vsyncadd [#allocation8], %s158
      %s161 = sshll.u32 [#allocation9], 4
      %s162 = int_to_ptr.vmem [resolvable:$true] %s161
      %164 = dma.hbm_to_vmem [thread:$0]  %s9, 16, %s162, [#allocation8]
    $region21: #{transformer_forward.1} parent=1 // pred_fallthru
      _
    // Predicated region
    $region22: #{transformer_forward.1} parent=1 // pred_check
      _
    $region23: #{transformer_forward.1} parent=1 // pred_check_branch
      %166 = sbr.rel (0) target = $region25
    $region24: #{transformer_forward.1} parent=1 // pred_region
      _
    $region25: #{transformer_forward.1} parent=1 // pred_fallthru
      _
    // Predicated region
    $region26: #{transformer_forward.1} parent=1 // pred_check
      _
    $region27: #{transformer_forward.1} parent=1 // pred_check_branch
      %168 = sbr.rel (0) target = $region29
    $region28: #{transformer_forward.1} parent=1 // pred_region
      _
    $region29: #{transformer_forward.1} parent=1 // pred_fallthru
      _
    // Predicated region
    $region30: #{transformer_forward.1} parent=1 // pred_check
      _
    $region31: #{transformer_forward.1} parent=1 // pred_check_branch
      %170 = sbr.rel (0) target = $region33
    $region32: #{transformer_forward.1} parent=1 // pred_region
      _
    $region33: #{transformer_forward.1} parent=1 // pred_fallthru
      _
    // Predicated region
    $region34: #{transformer_forward.1} parent=1 // pred_check
      _
    $region35: #{transformer_forward.1} parent=1 // pred_check_branch
      %172 = sbr.rel (0) target = $region37
    $region36: #{transformer_forward.1} parent=1 // pred_region
      %s174 = ssub.s32 16, 16
      %175 = vsyncadd [#allocation11], %s174
      %s177 = sshll.u32 [#allocation10], 4
      %s178 = int_to_ptr.vmem [resolvable:$true] %s177
      %180 = dma.hbm_to_vmem [thread:$0]  %s17, 16, %s178, [#allocation11]
    $region37: #{transformer_forward.1} parent=1 // pred_fallthru
      _
    // Predicated region
    $region38: #{transformer_forward.1} parent=1 // pred_check
      _
    $region39: #{transformer_forward.1} parent=1 // pred_check_branch
      %182 = sbr.rel (0) target = $region41
    $region40: #{transformer_forward.1} parent=1 // pred_region
      %s184 = ssub.s32 16, 16
      %185 = vsyncadd [#allocation11], %s184
      %s187 = sshll.u32 [#allocation12], 4
      %s188 = int_to_ptr.vmem [resolvable:$true] %s187
      %190 = dma.hbm_to_vmem [thread:$0]  %s19, 16, %s188, [#allocation11]
    $region41: #{transformer_forward.1} parent=1 // pred_fallthru
      _
    // Predicated region
    $region42: #{transformer_forward.1} parent=1 // pred_check
      _
    $region43: #{transformer_forward.1} parent=1 // pred_check_branch
      %192 = sbr.rel (0) target = $region45
    $region44: #{transformer_forward.1} parent=1 // pred_region
      %s194 = ssub.s32 16, 16
      %195 = vsyncadd [#allocation14], %s194
      %s197 = sshll.u32 [#allocation13], 4
      %s198 = int_to_ptr.vmem [resolvable:$true] %s197
      %200 = dma.hbm_to_vmem [thread:$0]  %s21, 16, %s198, [#allocation14]
    $region45: #{transformer_forward.1} parent=1 // pred_fallthru
      _
    // Predicated region
    $region46: #{transformer_forward.1} parent=1 // pred_check
      _
    $region47: #{transformer_forward.1} parent=1 // pred_check_branch
      %202 = sbr.rel (0) target = $region49
    $region48: #{transformer_forward.1} parent=1 // pred_region
      %s204 = ssub.s32 16, 16
      %205 = vsyncadd [#allocation14], %s204
      %s207 = sshll.u32 [#allocation15], 4
      %s208 = int_to_ptr.vmem [resolvable:$true] %s207
      %210 = dma.hbm_to_vmem [thread:$0]  %s23, 16, %s208, [#allocation14]
    $region49: #{transformer_forward.1} parent=1 // pred_fallthru
      _
    // Predicated region
    $region50: #{transformer_forward.1} parent=1 // pred_check
      _
    $region51: #{transformer_forward.1} parent=1 // pred_check_branch
      %212 = sbr.rel (0) target = $region53
    $region52: #{transformer_forward.1} parent=1 // pred_region
      %s214 = ssub.s32 16, 16
      %215 = vsyncadd [#allocation17], %s214
      %s217 = sshll.u32 [#allocation16], 4
      %s218 = int_to_ptr.vmem [resolvable:$true] %s217
      %220 = dma.hbm_to_vmem [thread:$0]  %s25, 16, %s218, [#allocation17]
    $region53: #{transformer_forward.1} parent=1 // pred_fallthru
      _
    // Predicated region
    $region54: #{transformer_forward.1} parent=1 // pred_check
      _
    $region55: #{transformer_forward.1} parent=1 // pred_check_branch
      %222 = sbr.rel (0) target = $region57
    $region56: #{transformer_forward.1} parent=1 // pred_region
      %s224 = ssub.s32 16, 16
      %225 = vsyncadd [#allocation17], %s224
      %s227 = sshll.u32 [#allocation18], 4
      %s228 = int_to_ptr.vmem [resolvable:$true] %s227
      %230 = dma.hbm_to_vmem [thread:$0]  %s27, 16, %s228, [#allocation17]
    $region57: #{transformer_forward.1} parent=1 // pred_fallthru
      _
    // Predicated region
    $region58: #{transformer_forward.1} parent=1 // pred_check
      _
    $region59: #{transformer_forward.1} parent=1 // pred_check_branch
      %232 = sbr.rel (0) target = $region61
    $region60: #{transformer_forward.1} parent=1 // pred_region
      %s234 = ssub.s32 16, 16
      %235 = vsyncadd [#allocation20], %s234
      %s237 = sshll.u32 [#allocation19], 4
      %s238 = int_to_ptr.vmem [resolvable:$true] %s237
      %240 = dma.hbm_to_vmem [thread:$0]  %s29, 16, %s238, [#allocation20]
    $region61: #{transformer_forward.1} parent=1 // pred_fallthru
      _
    // Predicated region
    $region62: #{transformer_forward.1} parent=1 // pred_check
      _
    $region63: #{transformer_forward.1} parent=1 // pred_check_branch
      %242 = sbr.rel (0) target = $region65
    $region64: #{transformer_forward.1} parent=1 // pred_region
      %s244 = ssub.s32 16, 16
      %245 = vsyncadd [#allocation20], %s244
      %s247 = sshll.u32 [#allocation21], 4
      %s248 = int_to_ptr.vmem [resolvable:$true] %s247
      %250 = dma.hbm_to_vmem [thread:$0]  %s31, 16, %s248, [#allocation20]
    $region65: #{transformer_forward.1} parent=1 // pred_fallthru
      _
    // Predicated region
    $region66: #{transformer_forward.1} parent=1 // pred_check
      _
    $region67: #{transformer_forward.1} parent=1 // pred_check_branch
      %252 = sbr.rel (0) target = $region69
    $region68: #{transformer_forward.1} parent=1 // pred_region
      %s254 = ssub.s32 16, 16
      %255 = vsyncadd [#allocation23], %s254
      %s257 = sshll.u32 [#allocation22], 4
      %s258 = int_to_ptr.vmem [resolvable:$true] %s257
      %260 = dma.hbm_to_vmem [thread:$0]  %s33, 16, %s258, [#allocation23]
    $region69: #{transformer_forward.1} parent=1 // pred_fallthru
      _
    // Predicated region
    $region70: #{transformer_forward.1} parent=1 // pred_check
      _
    $region71: #{transformer_forward.1} parent=1 // pred_check_branch
      %262 = sbr.rel (0) target = $region73
    $region72: #{transformer_forward.1} parent=1 // pred_region
      _
    $region73: #{transformer_forward.1} parent=1 // pred_fallthru
      _
    // Predicated region
    $region74: #{transformer_forward.1} parent=1 // pred_check
      _
    $region75: #{transformer_forward.1} parent=1 // pred_check_branch
      %264 = sbr.rel (0) target = $region77
    $region76: #{transformer_forward.1} parent=1 // pred_region
      _
    $region77: #{transformer_forward.1} parent=1 // pred_fallthru
      _
    // Predicated region
    $region78: #{transformer_forward.1} parent=1 // pred_check
      _
    $region79: #{transformer_forward.1} parent=1 // pred_check_branch
      %266 = sbr.rel (0) target = $region81
    $region80: #{transformer_forward.1} parent=1 // pred_region
      _
    $region81: #{transformer_forward.1} parent=1 // pred_fallthru
      _
    // Predicated region
    $region82: #{transformer_forward.1} parent=1 // pred_check
      _
    $region83: #{transformer_forward.1} parent=1 // pred_check_branch
      %268 = sbr.rel (0) target = $region85
    $region84: #{transformer_forward.1} parent=1 // pred_region
      _
    $region85: #{transformer_forward.1} parent=1 // pred_fallthru
      _
    // Predicated region
    $region86: #{transformer_forward.1} parent=1 // pred_check
      _
    $region87: #{transformer_forward.1} parent=1 // pred_check_branch
      %270 = sbr.rel (0) target = $region89
    $region88: #{transformer_forward.1} parent=1 // pred_region
      _
    $region89: #{transformer_forward.1} parent=1 // pred_fallthru
      _
    // Predicated region
    $region90: #{transformer_forward.1} parent=1 // pred_check
      _
    $region91: #{transformer_forward.1} parent=1 // pred_check_branch
      %272 = sbr.rel (0) target = $region93
    $region92: #{transformer_forward.1} parent=1 // pred_region
      %s274 = ssub.s32 16, 16
      %275 = vsyncadd [#allocation23], %s274
      %s277 = sshll.u32 [#allocation24], 4
      %s278 = int_to_ptr.vmem [resolvable:$true] %s277
      %280 = dma.hbm_to_vmem [thread:$0]  %s45, 16, %s278, [#allocation23]
    $region93: #{transformer_forward.1} parent=1 // pred_fallthru
      _
    // Predicated region
    $region94: #{transformer_forward.1} parent=1 // pred_check
      _
    $region95: #{transformer_forward.1} parent=1 // pred_check_branch
      %282 = sbr.rel (0) target = $region97
    $region96: #{transformer_forward.1} parent=1 // pred_region
      %s284 = ssub.s32 16, 16
      %285 = vsyncadd [#allocation26], %s284
      %s287 = sshll.u32 [#allocation25], 4
      %s288 = int_to_ptr.vmem [resolvable:$true] %s287
      %290 = dma.hbm_to_vmem [thread:$0]  %s47, 16, %s288, [#allocation26]
    $region97: #{transformer_forward.1} parent=1 // pred_fallthru
      _
    // Predicated region
    $region98: #{transformer_forward.1} parent=1 // pred_check
      _
    $region99: #{transformer_forward.1} parent=1 // pred_check_branch
      %292 = sbr.rel (0) target = $region101
    $region100: #{transformer_forward.1} parent=1 // pred_region
      %s294 = ssub.s32 16, 16
      %295 = vsyncadd [#allocation26], %s294
      %s297 = sshll.u32 [#allocation27], 4
      %s298 = int_to_ptr.vmem [resolvable:$true] %s297
      %300 = dma.hbm_to_vmem [thread:$0]  %s49, 16, %s298, [#allocation26]
    $region101: #{transformer_forward.1} parent=1 // pred_fallthru
      _
    // Predicated region
    $region102: #{transformer_forward.1} parent=1 // pred_check
      _
    $region103: #{transformer_forward.1} parent=1 // pred_check_branch
      %302 = sbr.rel (0) target = $region105
    $region104: #{transformer_forward.1} parent=1 // pred_region
      %s304 = ssub.s32 16, 16
      %305 = vsyncadd [#allocation29], %s304
      %s307 = sshll.u32 [#allocation28], 4
      %s308 = int_to_ptr.vmem [resolvable:$true] %s307
      %310 = dma.hbm_to_vmem [thread:$0]  %s51, 16, %s308, [#allocation29]
    $region105: #{transformer_forward.1} parent=1 // pred_fallthru
      _
    // Predicated region
    $region106: #{transformer_forward.1} parent=1 // pred_check
      _
    $region107: #{transformer_forward.1} parent=1 // pred_check_branch
      %312 = sbr.rel (0) target = $region109
    $region108: #{transformer_forward.1} parent=1 // pred_region
      %s314 = ssub.s32 16, 16
      %315 = vsyncadd [#allocation29], %s314
      %s317 = sshll.u32 [#allocation30], 4
      %s318 = int_to_ptr.vmem [resolvable:$true] %s317
      %320 = dma.hbm_to_vmem [thread:$0]  %s53, 16, %s318, [#allocation29]
    $region109: #{transformer_forward.1} parent=1 // pred_fallthru
      _
    // Predicated region
    $region110: #{transformer_forward.1} parent=1 // pred_check
      _
    $region111: #{transformer_forward.1} parent=1 // pred_check_branch
      %322 = sbr.rel (0) target = $region113
    $region112: #{transformer_forward.1} parent=1 // pred_region
      %s324 = ssub.s32 16, 16
      %325 = vsyncadd [#allocation32], %s324
      %s327 = sshll.u32 [#allocation31], 4
      %s328 = int_to_ptr.vmem [resolvable:$true] %s327
      %330 = dma.hbm_to_vmem [thread:$0]  %s55, 16, %s328, [#allocation32]
    $region113: #{transformer_forward.1} parent=1 // pred_fallthru
      _
    // Predicated region
    $region114: #{transformer_forward.1} parent=1 // pred_check
      _
    $region115: #{transformer_forward.1} parent=1 // pred_check_branch
      %332 = sbr.rel (0) target = $region117
    $region116: #{transformer_forward.1} parent=1 // pred_region
      %s334 = ssub.s32 16, 16
      %335 = vsyncadd [#allocation32], %s334
      %s337 = sshll.u32 [#allocation33], 4
      %s338 = int_to_ptr.vmem [resolvable:$true] %s337
      %340 = dma.hbm_to_vmem [thread:$0]  %s57, 16, %s338, [#allocation32]
    $region117: #{transformer_forward.1} parent=1 // pred_fallthru
      _
    // Predicated region
    $region118: #{transformer_forward.1} parent=1 // pred_check
      _
    $region119: #{transformer_forward.1} parent=1 // pred_check_branch
      %342 = sbr.rel (0) target = $region121
    $region120: #{transformer_forward.1} parent=1 // pred_region
      %s344 = ssub.s32 16, 16
      %345 = vsyncadd [#allocation35], %s344
      %s347 = sshll.u32 [#allocation34], 4
      %s348 = int_to_ptr.vmem [resolvable:$true] %s347
      %350 = dma.hbm_to_vmem [thread:$0]  %s59, 16, %s348, [#allocation35]
    $region121: #{transformer_forward.1} parent=1 // pred_fallthru
      _
    // Predicated region
    $region122: #{transformer_forward.1} parent=1 // pred_check
      _
    $region123: #{transformer_forward.1} parent=1 // pred_check_branch
      %352 = sbr.rel (0) target = $region125
    $region124: #{transformer_forward.1} parent=1 // pred_region
      %s354 = ssub.s32 16, 16
      %355 = vsyncadd [#allocation35], %s354
      %s357 = sshll.u32 [#allocation36], 4
      %s358 = int_to_ptr.vmem [resolvable:$true] %s357
      %360 = dma.hbm_to_vmem [thread:$0]  %s61, 16, %s358, [#allocation35]
    $region125: #{transformer_forward.1} parent=1 // pred_fallthru
      _
    // Predicated region
    $region126: #{transformer_forward.1} parent=1 // pred_check
      _
    $region127: #{transformer_forward.1} parent=1 // pred_check_branch
      %362 = sbr.rel (0) target = $region129
    $region128: #{transformer_forward.1} parent=1 // pred_region
      %s364 = ssub.s32 16, 16
      %365 = vsyncadd [#allocation38], %s364
      %s367 = sshll.u32 [#allocation37], 4
      %s368 = int_to_ptr.vmem [resolvable:$true] %s367
      %370 = dma.hbm_to_vmem [thread:$0]  %s63, 16, %s368, [#allocation38]
    $region129: #{transformer_forward.1} parent=1 // pred_fallthru
      _
    // Predicated region
    $region130: #{transformer_forward.1} parent=1 // pred_check
      _
    $region131: #{transformer_forward.1} parent=1 // pred_check_branch
      %372 = sbr.rel (0) target = $region133
    $region132: #{transformer_forward.1} parent=1 // pred_region
      %s374 = ssub.s32 16, 16
      %375 = vsyncadd [#allocation38], %s374
      %s377 = sshll.u32 [#allocation39], 4
      %s378 = int_to_ptr.vmem [resolvable:$true] %s377
      %380 = dma.hbm_to_vmem [thread:$0]  %s65, 16, %s378, [#allocation38]
    $region133: #{transformer_forward.1} parent=1 // pred_fallthru
      _
    // Predicated region
    $region134: #{transformer_forward.1} parent=1 // pred_check
      _
    $region135: #{transformer_forward.1} parent=1 // pred_check_branch
      %382 = sbr.rel (0) target = $region137
    $region136: #{transformer_forward.1} parent=1 // pred_region
      _
    $region137: #{transformer_forward.1} parent=1 // pred_fallthru
      _
    // Predicated region
    $region138: #{transformer_forward.1} parent=1 // pred_check
      _
    $region139: #{transformer_forward.1} parent=1 // pred_check_branch
      %384 = sbr.rel (0) target = $region141
    $region140: #{transformer_forward.1} parent=1 // pred_region
      _
    $region141: #{transformer_forward.1} parent=1 // pred_fallthru
      _
    // Predicated region
    $region142: #{transformer_forward.1} parent=1 // pred_check
      _
    $region143: #{transformer_forward.1} parent=1 // pred_check_branch
      %386 = sbr.rel (0) target = $region145
    $region144: #{transformer_forward.1} parent=1 // pred_region
      _
    $region145: #{transformer_forward.1} parent=1 // pred_fallthru
      _
    // Predicated region
    $region146: #{transformer_forward.1} parent=1 // pred_check
      _
    $region147: #{transformer_forward.1} parent=1 // pred_check_branch
      %388 = sbr.rel (0) target = $region149
    $region148: #{transformer_forward.1} parent=1 // pred_region
      _
    $region149: #{transformer_forward.1} parent=1 // pred_fallthru
      _
    // Predicated region
    $region150: #{transformer_forward.1} parent=1 // pred_check
      _
    $region151: #{transformer_forward.1} parent=1 // pred_check_branch
      %390 = sbr.rel (0) target = $region153
    $region152: #{transformer_forward.1} parent=1 // pred_region
      _
    $region153: #{transformer_forward.1} parent=1 // pred_fallthru
      _
    // Predicated region
    $region154: #{transformer_forward.1} parent=1 // pred_check
      _
    $region155: #{transformer_forward.1} parent=1 // pred_check_branch
      %392 = sbr.rel (0) target = $region157
    $region156: #{transformer_forward.1} parent=1 // pred_region
      %s394 = ssub.s32 16, 16
      %395 = vsyncadd [#allocation41], %s394
      %s397 = sshll.u32 [#allocation40], 4
      %s398 = int_to_ptr.vmem [resolvable:$true] %s397
      %400 = dma.hbm_to_vmem [thread:$0]  %s77, 16, %s398, [#allocation41]
    $region157: #{transformer_forward.1} parent=1 // pred_fallthru
      _
    // Predicated region
    $region158: #{transformer_forward.1} parent=1 // pred_check
      _
    $region159: #{transformer_forward.1} parent=1 // pred_check_branch
      %402 = sbr.rel (0) target = $region161
    $region160: #{transformer_forward.1} parent=1 // pred_region
      %s404 = ssub.s32 16, 16
      %405 = vsyncadd [#allocation41], %s404
      %s407 = sshll.u32 [#allocation42], 4
      %s408 = int_to_ptr.vmem [resolvable:$true] %s407
      %410 = dma.hbm_to_vmem [thread:$0]  %s79, 16, %s408, [#allocation41]
    $region161: #{transformer_forward.1} parent=1 // pred_fallthru
      _
    // Predicated region
    $region162: #{transformer_forward.1} parent=1 // pred_check
      _
    $region163: #{transformer_forward.1} parent=1 // pred_check_branch
      %412 = sbr.rel (0) target = $region165
    $region164: #{transformer_forward.1} parent=1 // pred_region
      %s414 = ssub.s32 16, 16
      %415 = vsyncadd [#allocation44], %s414
      %s417 = sshll.u32 [#allocation43], 4
      %s418 = int_to_ptr.vmem [resolvable:$true] %s417
      %420 = dma.hbm_to_vmem [thread:$0]  %s81, 16, %s418, [#allocation44]
    $region165: #{transformer_forward.1} parent=1 // pred_fallthru
      _
    // Predicated region
    $region166: #{transformer_forward.1} parent=1 // pred_check
      _
    $region167: #{transformer_forward.1} parent=1 // pred_check_branch
      %422 = sbr.rel (0) target = $region169
    $region168: #{transformer_forward.1} parent=1 // pred_region
      %s424 = ssub.s32 512, 512
      %425 = vsyncadd [#allocation44], %s424
      %s426 = sshll.u32 [#allocation45], 4
      %s427 = int_to_ptr.vmem [resolvable:$true] %s426
      %432 = dma.hbm_to_vmem [thread:$0]  %s83, 512, %s427, [#allocation44], 128, 128, 8
    $region169: #{transformer_forward.1} parent=1 // pred_fallthru
      _
    // Predicated region
    $region170: #{transformer_forward.1} parent=1 // pred_check
      _
    $region171: #{transformer_forward.1} parent=1 // pred_check_branch
      %434 = sbr.rel (0) target = $region173
    $region172: #{transformer_forward.1} parent=1 // pred_region
      _
    $region173: #{transformer_forward.1} parent=1 // pred_fallthru
      _
    // Predicated region
    $region174: #{transformer_forward.1} parent=1 // pred_check
      _
    $region175: #{transformer_forward.1} parent=1 // pred_check_branch
      %436 = sbr.rel (0) target = $region177
    $region176: #{transformer_forward.1} parent=1 // pred_region
      _
    $region177: #{transformer_forward.1} parent=1 // pred_fallthru
      _
    // Predicated region
    $region178: #{transformer_forward.1} parent=1 // pred_check
      _
    $region179: #{transformer_forward.1} parent=1 // pred_check_branch
      %438 = sbr.rel (0) target = $region181
    $region180: #{transformer_forward.1} parent=1 // pred_region
      _
    $region181: #{transformer_forward.1} parent=1 // pred_fallthru
      _
    // Predicated region
    $region182: #{transformer_forward.1} parent=1 // pred_check
      _
    $region183: #{transformer_forward.1} parent=1 // pred_check_branch
      %440 = sbr.rel (0) target = $region185
    $region184: #{transformer_forward.1} parent=1 // pred_region
      _
    $region185: #{transformer_forward.1} parent=1 // pred_fallthru
      _
    // Predicated region
    $region186: #{transformer_forward.1} parent=1 // pred_check
      _
    $region187: #{transformer_forward.1} parent=1 // pred_check_branch
      %442 = sbr.rel (0) target = $region189
    $region188: #{transformer_forward.1} parent=1 // pred_region
      _
    $region189: #{transformer_forward.1} parent=1 // pred_fallthru
      _
    // Predicated region
    $region190: #{transformer_forward.1} parent=1 // pred_check
      _
    $region191: #{transformer_forward.1} parent=1 // pred_check_branch
      %444 = sbr.rel (0) target = $region193
    $region192: #{transformer_forward.1} parent=1 // pred_region
      %445 = dma.done [#allocation3], 16
    $region193: #{transformer_forward.1} parent=1 // pred_fallthru
      _
    // Predicated region
    $region194: #{transformer_forward.1} parent=1 // pred_check
      _
    $region195: #{transformer_forward.1} parent=1 // pred_check_branch
      %447 = sbr.rel (0) target = $region197
    $region196: #{transformer_forward.1} parent=1 // pred_region
      %448 = dma.done [#allocation5], 16
    $region197: #{transformer_forward.1} parent=1 // pred_fallthru
      _
    // Predicated region
    $region198: #{transformer_forward.1} parent=1 // pred_check
      _
    $region199: #{transformer_forward.1} parent=1 // pred_check_branch
      %450 = sbr.rel (0) target = $region201
    $region200: #{transformer_forward.1} parent=1 // pred_region
      %451 = dma.done [#allocation5], 16
    $region201: #{transformer_forward.1} parent=1 // pred_fallthru
      _
    // Predicated region
    $region202: #{transformer_forward.1} parent=1 // pred_check
      _
    $region203: #{transformer_forward.1} parent=1 // pred_check_branch
      %453 = sbr.rel (0) target = $region205
    $region204: #{transformer_forward.1} parent=1 // pred_region
      %454 = dma.done [#allocation8], 16
    $region205: #{transformer_forward.1} parent=1 // pred_fallthru
      _
    // Predicated region
    $region206: #{transformer_forward.1} parent=1 // pred_check
      _
    $region207: #{transformer_forward.1} parent=1 // pred_check_branch
      %456 = sbr.rel (0) target = $region209
    $region208: #{transformer_forward.1} parent=1 // pred_region
      %457 = dma.done [#allocation8], 16
    $region209: #{transformer_forward.1} parent=1 // pred_fallthru
      _
    // Predicated region
    $region210: #{transformer_forward.1} parent=1 // pred_check
      _
    $region211: #{transformer_forward.1} parent=1 // pred_check_branch
      %459 = sbr.rel (0) target = $region213
    $region212: #{transformer_forward.1} parent=1 // pred_region
      %460 = dma.done [#allocation11], 16
    $region213: #{transformer_forward.1} parent=1 // pred_fallthru
      _
    // Predicated region
    $region214: #{transformer_forward.1} parent=1 // pred_check
      _
    $region215: #{transformer_forward.1} parent=1 // pred_check_branch
      %462 = sbr.rel (0) target = $region217
    $region216: #{transformer_forward.1} parent=1 // pred_region
      %463 = dma.done [#allocation11], 16
    $region217: #{transformer_forward.1} parent=1 // pred_fallthru
      _
    // Predicated region
    $region218: #{transformer_forward.1} parent=1 // pred_check
      _
    $region219: #{transformer_forward.1} parent=1 // pred_check_branch
      %465 = sbr.rel (0) target = $region221
    $region220: #{transformer_forward.1} parent=1 // pred_region
      %466 = dma.done [#allocation14], 16
    $region221: #{transformer_forward.1} parent=1 // pred_fallthru
      _
    // Predicated region
    $region222: #{transformer_forward.1} parent=1 // pred_check
      _
    $region223: #{transformer_forward.1} parent=1 // pred_check_branch
      %468 = sbr.rel (0) target = $region225
    $region224: #{transformer_forward.1} parent=1 // pred_region
      %469 = dma.done [#allocation14], 16
    $region225: #{transformer_forward.1} parent=1 // pred_fallthru
      _
    // Predicated region
    $region226: #{transformer_forward.1} parent=1 // pred_check
      _
    $region227: #{transformer_forward.1} parent=1 // pred_check_branch
      %471 = sbr.rel (0) target = $region229
    $region228: #{transformer_forward.1} parent=1 // pred_region
      %472 = dma.done [#allocation17], 16
    $region229: #{transformer_forward.1} parent=1 // pred_fallthru
      _
    // Predicated region
    $region230: #{transformer_forward.1} parent=1 // pred_check
      _
    $region231: #{transformer_forward.1} parent=1 // pred_check_branch
      %474 = sbr.rel (0) target = $region233
    $region232: #{transformer_forward.1} parent=1 // pred_region
      %475 = dma.done [#allocation17], 16
    $region233: #{transformer_forward.1} parent=1 // pred_fallthru
      _
    // Predicated region
    $region234: #{transformer_forward.1} parent=1 // pred_check
      _
    $region235: #{transformer_forward.1} parent=1 // pred_check_branch
      %477 = sbr.rel (0) target = $region237
    $region236: #{transformer_forward.1} parent=1 // pred_region
      %478 = dma.done [#allocation20], 16
    $region237: #{transformer_forward.1} parent=1 // pred_fallthru
      _
    // Predicated region
    $region238: #{transformer_forward.1} parent=1 // pred_check
      _
    $region239: #{transformer_forward.1} parent=1 // pred_check_branch
      %480 = sbr.rel (0) target = $region241
    $region240: #{transformer_forward.1} parent=1 // pred_region
      %481 = dma.done [#allocation20], 16
    $region241: #{transformer_forward.1} parent=1 // pred_fallthru
      _
    // Predicated region
    $region242: #{transformer_forward.1} parent=1 // pred_check
      _
    $region243: #{transformer_forward.1} parent=1 // pred_check_branch
      %483 = sbr.rel (0) target = $region245
    $region244: #{transformer_forward.1} parent=1 // pred_region
      %484 = dma.done [#allocation23], 16
    $region245: #{transformer_forward.1} parent=1 // pred_fallthru
      _
    // Predicated region
    $region246: #{transformer_forward.1} parent=1 // pred_check
      _
    $region247: #{transformer_forward.1} parent=1 // pred_check_branch
      %486 = sbr.rel (0) target = $region249
    $region248: #{transformer_forward.1} parent=1 // pred_region
      %487 = dma.done [#allocation23], 16
    $region249: #{transformer_forward.1} parent=1 // pred_fallthru
      _
    // Predicated region
    $region250: #{transformer_forward.1} parent=1 // pred_check
      _
    $region251: #{transformer_forward.1} parent=1 // pred_check_branch
      %489 = sbr.rel (0) target = $region253
    $region252: #{transformer_forward.1} parent=1 // pred_region
      %490 = dma.done [#allocation26], 16
    $region253: #{transformer_forward.1} parent=1 // pred_fallthru
      _
    // Predicated region
    $region254: #{transformer_forward.1} parent=1 // pred_check
      _
    $region255: #{transformer_forward.1} parent=1 // pred_check_branch
      %492 = sbr.rel (0) target = $region257
    $region256: #{transformer_forward.1} parent=1 // pred_region
      %493 = dma.done [#allocation26], 16
    $region257: #{transformer_forward.1} parent=1 // pred_fallthru
      _
    // Predicated region
    $region258: #{transformer_forward.1} parent=1 // pred_check
      _
    $region259: #{transformer_forward.1} parent=1 // pred_check_branch
      %495 = sbr.rel (0) target = $region261
    $region260: #{transformer_forward.1} parent=1 // pred_region
      %496 = dma.done [#allocation29], 16
    $region261: #{transformer_forward.1} parent=1 // pred_fallthru
      _
    // Predicated region
    $region262: #{transformer_forward.1} parent=1 // pred_check
      _
    $region263: #{transformer_forward.1} parent=1 // pred_check_branch
      %498 = sbr.rel (0) target = $region265
    $region264: #{transformer_forward.1} parent=1 // pred_region
      %499 = dma.done [#allocation29], 16
    $region265: #{transformer_forward.1} parent=1 // pred_fallthru
      _
    // Predicated region
    $region266: #{transformer_forward.1} parent=1 // pred_check
      _
    $region267: #{transformer_forward.1} parent=1 // pred_check_branch
      %501 = sbr.rel (0) target = $region269
    $region268: #{transformer_forward.1} parent=1 // pred_region
      %502 = dma.done [#allocation32], 16
    $region269: #{transformer_forward.1} parent=1 // pred_fallthru
      _
    // Predicated region
    $region270: #{transformer_forward.1} parent=1 // pred_check
      _
    $region271: #{transformer_forward.1} parent=1 // pred_check_branch
      %504 = sbr.rel (0) target = $region273
    $region272: #{transformer_forward.1} parent=1 // pred_region
      %505 = dma.done [#allocation32], 16
    $region273: #{transformer_forward.1} parent=1 // pred_fallthru
      _
    // Predicated region
    $region274: #{transformer_forward.1} parent=1 // pred_check
      _
    $region275: #{transformer_forward.1} parent=1 // pred_check_branch
      %507 = sbr.rel (0) target = $region277
    $region276: #{transformer_forward.1} parent=1 // pred_region
      %508 = dma.done [#allocation35], 16
    $region277: #{transformer_forward.1} parent=1 // pred_fallthru
      _
    // Predicated region
    $region278: #{transformer_forward.1} parent=1 // pred_check
      _
    $region279: #{transformer_forward.1} parent=1 // pred_check_branch
      %510 = sbr.rel (0) target = $region281
    $region280: #{transformer_forward.1} parent=1 // pred_region
      %511 = dma.done [#allocation35], 16
    $region281: #{transformer_forward.1} parent=1 // pred_fallthru
      _
    // Predicated region
    $region282: #{transformer_forward.1} parent=1 // pred_check
      _
    $region283: #{transformer_forward.1} parent=1 // pred_check_branch
      %513 = sbr.rel (0) target = $region285
    $region284: #{transformer_forward.1} parent=1 // pred_region
      %514 = dma.done [#allocation38], 16
    $region285: #{transformer_forward.1} parent=1 // pred_fallthru
      _
    // Predicated region
    $region286: #{transformer_forward.1} parent=1 // pred_check
      _
    $region287: #{transformer_forward.1} parent=1 // pred_check_branch
      %516 = sbr.rel (0) target = $region289
    $region288: #{transformer_forward.1} parent=1 // pred_region
      %517 = dma.done [#allocation38], 16
    $region289: #{transformer_forward.1} parent=1 // pred_fallthru
      _
    // Predicated region
    $region290: #{transformer_forward.1} parent=1 // pred_check
      _
    $region291: #{transformer_forward.1} parent=1 // pred_check_branch
      %519 = sbr.rel (0) target = $region293
    $region292: #{transformer_forward.1} parent=1 // pred_region
      %520 = dma.done [#allocation41], 16
    $region293: #{transformer_forward.1} parent=1 // pred_fallthru
      _
    // Predicated region
    $region294: #{transformer_forward.1} parent=1 // pred_check
      _
    $region295: #{transformer_forward.1} parent=1 // pred_check_branch
      %522 = sbr.rel (0) target = $region297
    $region296: #{transformer_forward.1} parent=1 // pred_region
      %523 = dma.done [#allocation41], 16
    $region297: #{transformer_forward.1} parent=1 // pred_fallthru
      _
    // Predicated region
    $region298: #{transformer_forward.1} parent=1 // pred_check
      _
    $region299: #{transformer_forward.1} parent=1 // pred_check_branch
      %525 = sbr.rel (0) target = $region301
    $region300: #{transformer_forward.1} parent=1 // pred_region
      %526 = dma.done [#allocation44], 16
    $region301: #{transformer_forward.1} parent=1 // pred_fallthru
      _
    // Predicated region
    $region302: #{transformer_forward.1} parent=1 // pred_check
      _
    $region303: #{transformer_forward.1} parent=1 // pred_check_branch
      %528 = sbr.rel (0) target = $region305
    $region304: #{transformer_forward.1} parent=1 // pred_region
      %529 = dma.done [#allocation44], 512
    $region305: #{transformer_forward.1} parent=1 // pred_fallthru
      _
    %v530 = vld [vmem:[%s89] sm:$0xff]
    %v531 = vld [vmem:[%s89 + $0x8] sm:$0xff]
    %v532 = vlaneseq
    %v533 = vand.u32 %v532, 127
    %534 = vset.pattern.permute.xlu0 0
    %535 = vperm.xlu0 %534, %v530
    %v536 = vpop.permute.xlu0 %535
    %537 = vset.pattern.permute.xlu0 0
    %538 = vperm.xlu0 %537, %v531
    %v539 = vpop.permute.xlu0 %538
    %vm540 = vcmp.eq.s32.totalorder %v536, %v533
    %vm541 = vcmp.eq.s32.totalorder %v539, %v533
    %v542 = vsel %vm540, 1, 0
    %v543 = vsel %vm541, 1, 0
    %v544 = vcvt.s32.f32 %v542
    %v545 = vcvt.s32.f32 %v543
    %v546 = vld [vmem:[%s87] sm:$0xff]
    %v547 = vld [vmem:[%s87 + $0x8] sm:$0xff]
    %v548 = vld [vmem:[%s85] sm:$0xff]
    %vm549 = vcmask 130048
    %v551 = vsel %vm549, %v544, 0
    %v554 = vsel %vm549, %v545, 0
    %556 = vmatprep.subr.mxu0 0.0
    %557 = vmatpush1.msra.mxu0 %v546
    %558 = vmatprep.subr.mxu0 0.0
    %559 = vmatpush1.msra.mxu0 %v547
    %560 = vmatprep.subr.mxu0 0.0
    %561 = vmatpush1.msra.mxu0 0.0
    %562 = vmatprep.subr.mxu0 0.0
    %563 = vmatpush1.msra.mxu0 0.0
    %564 = vmatprep.subr.mxu0 0.0
    %565 = vmatpush1.msra.mxu0 0.0
    %566 = vmatprep.subr.mxu0 0.0
    %567 = vmatpush1.msra.mxu0 0.0
    %568 = vmatprep.subr.mxu0 0.0
    %569 = vmatpush1.msra.mxu0 0.0
    %570 = vmatprep.subr.mxu0 0.0
    %571 = vmatpush1.msra.mxu0 0.0
    %572 = vmatprep.subr.mxu0 0.0
    %573 = vmatpush1.msra.mxu0 0.0
    %574 = vmatprep.subr.mxu0 0.0
    %575 = vmatpush1.msra.mxu0 0.0
    %576 = vmatprep.subr.mxu0 0.0
    %577 = vmatpush1.msra.mxu0 0.0
    %578 = vmatprep.subr.mxu0 0.0
    %579 = vmatpush1.msra.mxu0 0.0
    %580 = vmatprep.subr.mxu0 0.0
    %581 = vmatpush1.msra.mxu0 0.0
    %582 = vmatprep.subr.mxu0 0.0
    %583 = vmatpush1.msra.mxu0 0.0
    %584 = vmatprep.subr.mxu0 0.0
    %585 = vmatpush1.msra.mxu0 0.0
    %586 = vmatprep.subr.mxu0 0.0
    %587 = vmatpush1.msra.mxu0 0.0
    %588 = vmatprep.subr.mxu0 0.0
    %589 = vmatpush1.msra.mxu0 0.0
    %590 = vmatprep.subr.mxu0 0.0
    %591 = vmatpush1.msra.mxu0 0.0
    %592 = vmatprep.subr.mxu0 0.0
    %593 = vmatpush1.msra.mxu0 0.0
    %594 = vmatprep.subr.mxu0 0.0
    %595 = vmatpush1.msra.mxu0 0.0
    %596 = vmatprep.subr.mxu0 0.0
    %597 = vmatpush1.msra.mxu0 0.0
    %598 = vmatprep.subr.mxu0 0.0
    %599 = vmatpush1.msra.mxu0 0.0
    %600 = vmatprep.subr.mxu0 0.0
    %601 = vmatpush1.msra.mxu0 0.0
    %602 = vmatprep.subr.mxu0 0.0
    %603 = vmatpush1.msra.mxu0 0.0
    %604 = vmatprep.subr.mxu0 0.0
    %605 = vmatpush1.msra.mxu0 0.0
    %606 = vmatprep.subr.mxu0 0.0
    %607 = vmatpush1.msra.mxu0 0.0
    %608 = vmatprep.subr.mxu0 0.0
    %609 = vmatpush1.msra.mxu0 0.0
    %610 = vmatprep.subr.mxu0 0.0
    %611 = vmatpush1.msra.mxu0 0.0
    %612 = vmatprep.subr.mxu0 0.0
    %613 = vmatpush1.msra.mxu0 0.0
    %614 = vmatprep.subr.mxu0 0.0
    %615 = vmatpush1.msra.mxu0 0.0
    %616 = vmatprep.subr.mxu0 0.0
    %617 = vmatpush1.msra.mxu0 0.0
    %618 = vmatprep.subr.mxu0 0.0
    %619 = vmatpush1.msra.mxu0 0.0
    %620 = vmatprep.mubr.f32.mxu0 0.0
    %621 = vmatmul.mubr.f32.gmra.mrb[0].mxu0 %v551
    %v622 = vpop.f32.mrb[0].mxu0
    %v623 = vadd.f32 %v548, %v622
    %v624 = vpop.f32.mrb[0].mxu0
    %625 = vmatprep.mubr.f32.mxu0 0.0
    %626 = vmatmul.mubr.f32.gmra.mrb[0].mxu0 %v554
    %v627 = vpop.f32.mrb[0].mxu0
    %v628 = vadd.f32 %v548, %v627
    %v629 = vpop.f32.mrb[0].mxu0
    %630 = vdwg.mxu0
    %v631 = vld [vmem:[%s71] sm:$0xff]
    %v632 = vld [vmem:[%s71 + $0x8] sm:$0xff]
    %v633 = vld [vmem:[%s71 + $0x10] sm:$0xff]
    %v634 = vld [vmem:[%s71 + $0x18] sm:$0xff]
    %v635 = vld [vmem:[#allocation39] sm:$0x1]
    %v637 = vlaneseq
    %v638 = vshrl.u32 %v637, 7
    %v639 = vsub.s32 0, %v638
    %v640 = vrot.slane %v635, %v639
    %vm642 = vcmask 261120
    %v644 = vsel %vm642, %v623, 0
    %v647 = vsel %vm642, %v628, 0
    %649 = vmatprep.subr.mxu0 0.0
    %650 = vmatpush1.msra.mxu0 %v631
    %651 = vmatprep.subr.mxu0 0.0
    %652 = vmatpush1.msra.mxu0 %v632
    %653 = vmatprep.subr.mxu0 0.0
    %654 = vmatpush1.msra.mxu0 %v633
    %655 = vmatprep.subr.mxu0 0.0
    %656 = vmatpush1.msra.mxu0 %v634
    %657 = vmatprep.subr.mxu0 0.0
    %658 = vmatpush1.msra.mxu0 0.0
    %659 = vmatprep.subr.mxu0 0.0
    %660 = vmatpush1.msra.mxu0 0.0
    %661 = vmatprep.subr.mxu0 0.0
    %662 = vmatpush1.msra.mxu0 0.0
    %663 = vmatprep.subr.mxu0 0.0
    %664 = vmatpush1.msra.mxu0 0.0
    %665 = vmatprep.subr.mxu0 0.0
    %666 = vmatpush1.msra.mxu0 0.0
    %667 = vmatprep.subr.mxu0 0.0
    %668 = vmatpush1.msra.mxu0 0.0
    %669 = vmatprep.subr.mxu0 0.0
    %670 = vmatpush1.msra.mxu0 0.0
    %671 = vmatprep.subr.mxu0 0.0
    %672 = vmatpush1.msra.mxu0 0.0
    %673 = vmatprep.subr.mxu0 0.0
    %674 = vmatpush1.msra.mxu0 0.0
    %675 = vmatprep.subr.mxu0 0.0
    %676 = vmatpush1.msra.mxu0 0.0
    %677 = vmatprep.subr.mxu0 0.0
    %678 = vmatpush1.msra.mxu0 0.0
    %679 = vmatprep.subr.mxu0 0.0
    %680 = vmatpush1.msra.mxu0 0.0
    %681 = vmatprep.subr.mxu0 0.0
    %682 = vmatpush1.msra.mxu0 0.0
    %683 = vmatprep.subr.mxu0 0.0
    %684 = vmatpush1.msra.mxu0 0.0
    %685 = vmatprep.subr.mxu0 0.0
    %686 = vmatpush1.msra.mxu0 0.0
    %687 = vmatprep.subr.mxu0 0.0
    %688 = vmatpush1.msra.mxu0 0.0
    %689 = vmatprep.subr.mxu0 0.0
    %690 = vmatpush1.msra.mxu0 0.0
    %691 = vmatprep.subr.mxu0 0.0
    %692 = vmatpush1.msra.mxu0 0.0
    %693 = vmatprep.subr.mxu0 0.0
    %694 = vmatpush1.msra.mxu0 0.0
    %695 = vmatprep.subr.mxu0 0.0
    %696 = vmatpush1.msra.mxu0 0.0
    %697 = vmatprep.subr.mxu0 0.0
    %698 = vmatpush1.msra.mxu0 0.0
    %699 = vmatprep.subr.mxu0 0.0
    %700 = vmatpush1.msra.mxu0 0.0
    %701 = vmatprep.subr.mxu0 0.0
    %702 = vmatpush1.msra.mxu0 0.0
    %703 = vmatprep.subr.mxu0 0.0
    %704 = vmatpush1.msra.mxu0 0.0
    %705 = vmatprep.subr.mxu0 0.0
    %706 = vmatpush1.msra.mxu0 0.0
    %707 = vmatprep.subr.mxu0 0.0
    %708 = vmatpush1.msra.mxu0 0.0
    %709 = vmatprep.subr.mxu0 0.0
    %710 = vmatpush1.msra.mxu0 0.0
    %711 = vmatprep.subr.mxu0 0.0
    %712 = vmatpush1.msra.mxu0 0.0
    %713 = vmatprep.mubr.f32.mxu0 0.0
    %714 = vmatmul.mubr.f32.gmra.mrb[0].mxu0 %v644
    %v715 = vpop.f32.mrb[0].mxu0
    %v716 = vadd.f32 %v640, %v715
    %v717 = vpop.f32.mrb[0].mxu0
    %718 = vmatprep.mubr.f32.mxu0 0.0
    %719 = vmatmul.mubr.f32.gmra.mrb[0].mxu0 %v647
    %v720 = vpop.f32.mrb[0].mxu0
    %v721 = vadd.f32 %v640, %v720
    %v722 = vpop.f32.mrb[0].mxu0
    %723 = vdwg.mxu0
    %v724 = vld [vmem:[%s67] sm:$0xff]
    %v725 = vld [vmem:[%s67 + $0x8] sm:$0xff]
    %v726 = vld [vmem:[%s67 + $0x10] sm:$0xff]
    %v727 = vld [vmem:[%s67 + $0x18] sm:$0xff]
    %v728 = vld [vmem:[#allocation36] sm:$0x1]
    %v730 = vlaneseq
    %v731 = vshrl.u32 %v730, 7
    %v732 = vsub.s32 0, %v731
    %v733 = vrot.slane %v728, %v732
    %735 = vmatprep.subr.mxu0 0.0
    %736 = vmatpush1.msra.mxu0 %v724
    %737 = vmatprep.subr.mxu0 0.0
    %738 = vmatpush1.msra.mxu0 %v725
    %739 = vmatprep.subr.mxu0 0.0
    %740 = vmatpush1.msra.mxu0 %v726
    %741 = vmatprep.subr.mxu0 0.0
    %742 = vmatpush1.msra.mxu0 %v727
    %743 = vmatprep.subr.mxu0 0.0
    %744 = vmatpush1.msra.mxu0 0.0
    %745 = vmatprep.subr.mxu0 0.0
    %746 = vmatpush1.msra.mxu0 0.0
    %747 = vmatprep.subr.mxu0 0.0
    %748 = vmatpush1.msra.mxu0 0.0
    %749 = vmatprep.subr.mxu0 0.0
    %750 = vmatpush1.msra.mxu0 0.0
    %751 = vmatprep.subr.mxu0 0.0
    %752 = vmatpush1.msra.mxu0 0.0
    %753 = vmatprep.subr.mxu0 0.0
    %754 = vmatpush1.msra.mxu0 0.0
    %755 = vmatprep.subr.mxu0 0.0
    %756 = vmatpush1.msra.mxu0 0.0
    %757 = vmatprep.subr.mxu0 0.0
    %758 = vmatpush1.msra.mxu0 0.0
    %759 = vmatprep.subr.mxu0 0.0
    %760 = vmatpush1.msra.mxu0 0.0
    %761 = vmatprep.subr.mxu0 0.0
    %762 = vmatpush1.msra.mxu0 0.0
    %763 = vmatprep.subr.mxu0 0.0
    %764 = vmatpush1.msra.mxu0 0.0
    %765 = vmatprep.subr.mxu0 0.0
    %766 = vmatpush1.msra.mxu0 0.0
    %767 = vmatprep.subr.mxu0 0.0
    %768 = vmatpush1.msra.mxu0 0.0
    %769 = vmatprep.subr.mxu0 0.0
    %770 = vmatpush1.msra.mxu0 0.0
    %771 = vmatprep.subr.mxu0 0.0
    %772 = vmatpush1.msra.mxu0 0.0
    %773 = vmatprep.subr.mxu0 0.0
    %774 = vmatpush1.msra.mxu0 0.0
    %775 = vmatprep.subr.mxu0 0.0
    %776 = vmatpush1.msra.mxu0 0.0
    %777 = vmatprep.subr.mxu0 0.0
    %778 = vmatpush1.msra.mxu0 0.0
    %779 = vmatprep.subr.mxu0 0.0
    %780 = vmatpush1.msra.mxu0 0.0
    %781 = vmatprep.subr.mxu0 0.0
    %782 = vmatpush1.msra.mxu0 0.0
    %783 = vmatprep.subr.mxu0 0.0
    %784 = vmatpush1.msra.mxu0 0.0
    %785 = vmatprep.subr.mxu0 0.0
    %786 = vmatpush1.msra.mxu0 0.0
    %787 = vmatprep.subr.mxu0 0.0
    %788 = vmatpush1.msra.mxu0 0.0
    %789 = vmatprep.subr.mxu0 0.0
    %790 = vmatpush1.msra.mxu0 0.0
    %791 = vmatprep.subr.mxu0 0.0
    %792 = vmatpush1.msra.mxu0 0.0
    %793 = vmatprep.subr.mxu0 0.0
    %794 = vmatpush1.msra.mxu0 0.0
    %795 = vmatprep.subr.mxu0 0.0
    %796 = vmatpush1.msra.mxu0 0.0
    %797 = vmatprep.subr.mxu0 0.0
    %798 = vmatpush1.msra.mxu0 0.0
    %799 = vmatprep.mubr.f32.mxu0 0.0
    %800 = vmatmul.mubr.f32.gmra.mrb[0].mxu0 %v644
    %v801 = vpop.f32.mrb[0].mxu0
    %v802 = vadd.f32 %v733, %v801
    %v803 = vpop.f32.mrb[0].mxu0
    %804 = vmatprep.mubr.f32.mxu0 0.0
    %805 = vmatmul.mubr.f32.gmra.mrb[0].mxu0 %v647
    %v806 = vpop.f32.mrb[0].mxu0
    %v807 = vadd.f32 %v733, %v806
    %v808 = vpop.f32.mrb[0].mxu0
    %809 = vdwg.mxu0
    %v811 = vsel %vm549, %v716, 0
    %v814 = vsel %vm549, %v802, 0
    %816 = vmatprep.subr.mxu0 0.0
    %817 = vmatpush1.xpose.msra.mxu0 %v814
    %818 = vmatprep.subr.mxu0 0.0
    %819 = vmatpush1.xpose.msra.mxu0 0.0
    %820 = vmatprep.subr.mxu0 0.0
    %821 = vmatpush1.xpose.msra.mxu0 0.0
    %822 = vmatprep.subr.mxu0 0.0
    %823 = vmatpush1.xpose.msra.mxu0 0.0
    %824 = vmatprep.subr.mxu0 0.0
    %825 = vmatpush1.xpose.msra.mxu0 0.0
    %826 = vmatprep.subr.mxu0 0.0
    %827 = vmatpush1.xpose.msra.mxu0 0.0
    %828 = vmatprep.subr.mxu0 0.0
    %829 = vmatpush1.xpose.msra.mxu0 0.0
    %830 = vmatprep.subr.mxu0 0.0
    %831 = vmatpush1.xpose.msra.mxu0 0.0
    %832 = vmatprep.subr.mxu0 0.0
    %833 = vmatpush1.xpose.msra.mxu0 0.0
    %834 = vmatprep.subr.mxu0 0.0
    %835 = vmatpush1.xpose.msra.mxu0 0.0
    %836 = vmatprep.subr.mxu0 0.0
    %837 = vmatpush1.xpose.msra.mxu0 0.0
    %838 = vmatprep.subr.mxu0 0.0
    %839 = vmatpush1.xpose.msra.mxu0 0.0
    %840 = vmatprep.subr.mxu0 0.0
    %841 = vmatpush1.xpose.msra.mxu0 0.0
    %842 = vmatprep.subr.mxu0 0.0
    %843 = vmatpush1.xpose.msra.mxu0 0.0
    %844 = vmatprep.subr.mxu0 0.0
    %845 = vmatpush1.xpose.msra.mxu0 0.0
    %846 = vmatprep.subr.mxu0 0.0
    %847 = vmatpush1.xpose.msra.mxu0 0.0
    %848 = vmatprep.subr.mxu0 0.0
    %849 = vmatpush1.xpose.msra.mxu0 0.0
    %850 = vmatprep.subr.mxu0 0.0
    %851 = vmatpush1.xpose.msra.mxu0 0.0
    %852 = vmatprep.subr.mxu0 0.0
    %853 = vmatpush1.xpose.msra.mxu0 0.0
    %854 = vmatprep.subr.mxu0 0.0
    %855 = vmatpush1.xpose.msra.mxu0 0.0
    %856 = vmatprep.subr.mxu0 0.0
    %857 = vmatpush1.xpose.msra.mxu0 0.0
    %858 = vmatprep.subr.mxu0 0.0
    %859 = vmatpush1.xpose.msra.mxu0 0.0
    %860 = vmatprep.subr.mxu0 0.0
    %861 = vmatpush1.xpose.msra.mxu0 0.0
    %862 = vmatprep.subr.mxu0 0.0
    %863 = vmatpush1.xpose.msra.mxu0 0.0
    %864 = vmatprep.subr.mxu0 0.0
    %865 = vmatpush1.xpose.msra.mxu0 0.0
    %866 = vmatprep.subr.mxu0 0.0
    %867 = vmatpush1.xpose.msra.mxu0 0.0
    %868 = vmatprep.subr.mxu0 0.0
    %869 = vmatpush1.xpose.msra.mxu0 0.0
    %870 = vmatprep.subr.mxu0 0.0
    %871 = vmatpush1.xpose.msra.mxu0 0.0
    %872 = vmatprep.subr.mxu0 0.0
    %873 = vmatpush1.xpose.msra.mxu0 0.0
    %874 = vmatprep.subr.mxu0 0.0
    %875 = vmatpush1.xpose.msra.mxu0 0.0
    %876 = vmatprep.subr.mxu0 0.0
    %877 = vmatpush1.xpose.msra.mxu0 0.0
    %878 = vmatprep.subr.mxu0 0.0
    %879 = vmatpush1.xpose.msra.mxu0 0.0
    %880 = vmatprep.mubr.f32.mxu0 0.0
    %881 = vmatmul.mubr.f32.gmra.mrb[0].mxu0 %v811
    %v882 = vpop.f32.mrb[0].mxu0
    %v883 = vadd.f32 0.0, %v882
    %v884 = vpop.f32.mrb[0].mxu0
    %885 = vdwg.mxu0
    %v886 = vmul.f32 %v883, 0.25
    %vm887 = vcmask 64512
    %v888 = vsel %vm887, %v886, -inf
    %889 = vmax.xlane.f32.xlu0 %v888
    %v890 = vpop.xlane.xlu0 %889
    %v891 = vsub.f32 %v886, %v890
    %v892 = vmul.f32 %v891, 1.442695
    %v893 = vpow.pop %v892
    %v894 = vsel %vm887, %v893, 0.0
    %895 = vadd.xlane.f32.xlu0 %v894
    %v896 = vpop.xlane.xlu0 %895
    %v897 = vrcp.pop %v896
    %898 = vrot.lane.b32.xlu0 %v802, 96
    %v899 = vpop.permute.xlu0 %898
    %v902 = vsel %vm887, %v893, 0
    %904 = vmatprep.subr.mxu0 0.0
    %905 = vmatpush1.msra.mxu0 %v899
    %906 = vmatprep.subr.mxu0 0.0
    %907 = vmatpush1.msra.mxu0 0.0
    %908 = vmatprep.subr.mxu0 0.0
    %909 = vmatpush1.msra.mxu0 0.0
    %910 = vmatprep.subr.mxu0 0.0
    %911 = vmatpush1.msra.mxu0 0.0
    %912 = vmatprep.subr.mxu0 0.0
    %913 = vmatpush1.msra.mxu0 0.0
    %914 = vmatprep.subr.mxu0 0.0
    %915 = vmatpush1.msra.mxu0 0.0
    %916 = vmatprep.subr.mxu0 0.0
    %917 = vmatpush1.msra.mxu0 0.0
    %918 = vmatprep.subr.mxu0 0.0
    %919 = vmatpush1.msra.mxu0 0.0
    %920 = vmatprep.subr.mxu0 0.0
    %921 = vmatpush1.msra.mxu0 0.0
    %922 = vmatprep.subr.mxu0 0.0
    %923 = vmatpush1.msra.mxu0 0.0
    %924 = vmatprep.subr.mxu0 0.0
    %925 = vmatpush1.msra.mxu0 0.0
    %926 = vmatprep.subr.mxu0 0.0
    %927 = vmatpush1.msra.mxu0 0.0
    %928 = vmatprep.subr.mxu0 0.0
    %929 = vmatpush1.msra.mxu0 0.0
    %930 = vmatprep.subr.mxu0 0.0
    %931 = vmatpush1.msra.mxu0 0.0
    %932 = vmatprep.subr.mxu0 0.0
    %933 = vmatpush1.msra.mxu0 0.0
    %934 = vmatprep.subr.mxu0 0.0
    %935 = vmatpush1.msra.mxu0 0.0
    %936 = vmatprep.subr.mxu0 0.0
    %937 = vmatpush1.msra.mxu0 0.0
    %938 = vmatprep.subr.mxu0 0.0
    %939 = vmatpush1.msra.mxu0 0.0
    %940 = vmatprep.subr.mxu0 0.0
    %941 = vmatpush1.msra.mxu0 0.0
    %942 = vmatprep.subr.mxu0 0.0
    %943 = vmatpush1.msra.mxu0 0.0
    %944 = vmatprep.subr.mxu0 0.0
    %945 = vmatpush1.msra.mxu0 0.0
    %946 = vmatprep.subr.mxu0 0.0
    %947 = vmatpush1.msra.mxu0 0.0
    %948 = vmatprep.subr.mxu0 0.0
    %949 = vmatpush1.msra.mxu0 0.0
    %950 = vmatprep.subr.mxu0 0.0
    %951 = vmatpush1.msra.mxu0 0.0
    %952 = vmatprep.subr.mxu0 0.0
    %953 = vmatpush1.msra.mxu0 0.0
    %954 = vmatprep.subr.mxu0 0.0
    %955 = vmatpush1.msra.mxu0 0.0
    %956 = vmatprep.subr.mxu0 0.0
    %957 = vmatpush1.msra.mxu0 0.0
    %958 = vmatprep.subr.mxu0 0.0
    %959 = vmatpush1.msra.mxu0 0.0
    %960 = vmatprep.subr.mxu0 0.0
    %961 = vmatpush1.msra.mxu0 0.0
    %962 = vmatprep.subr.mxu0 0.0
    %963 = vmatpush1.msra.mxu0 0.0
    %964 = vmatprep.subr.mxu0 0.0
    %965 = vmatpush1.msra.mxu0 0.0
    %966 = vmatprep.subr.mxu0 0.0
    %967 = vmatpush1.msra.mxu0 0.0
    %968 = vmatprep.mubr.f32.mxu0 0.0
    %969 = vmatmul.mubr.f32.gmra.mrb[0].mxu0 %v902
    %v970 = vpop.f32.mrb[0].mxu0
    %v971 = vadd.f32 0.0, %v970
    %v972 = vpop.f32.mrb[0].mxu0
    %973 = vdwg.mxu0
    %v974 = vmul.f32 %v971, %v897
    %975 = vrot.lane.b32.xlu0 %v716, 112
    %v976 = vpop.permute.xlu0 %975
    %977 = vrot.lane.b32.xlu0 %v802, 112
    %v978 = vpop.permute.xlu0 %977
    %v979 = vsel %vm549, %v976, 0
    %v981 = vsel %vm549, %v978, 0
    %983 = vmatprep.subr.mxu0 0.0
    %984 = vmatpush1.xpose.msra.mxu0 %v981
    %985 = vmatprep.subr.mxu0 0.0
    %986 = vmatpush1.xpose.msra.mxu0 0.0
    %987 = vmatprep.subr.mxu0 0.0
    %988 = vmatpush1.xpose.msra.mxu0 0.0
    %989 = vmatprep.subr.mxu0 0.0
    %990 = vmatpush1.xpose.msra.mxu0 0.0
    %991 = vmatprep.subr.mxu0 0.0
    %992 = vmatpush1.xpose.msra.mxu0 0.0
    %993 = vmatprep.subr.mxu0 0.0
    %994 = vmatpush1.xpose.msra.mxu0 0.0
    %995 = vmatprep.subr.mxu0 0.0
    %996 = vmatpush1.xpose.msra.mxu0 0.0
    %997 = vmatprep.subr.mxu0 0.0
    %998 = vmatpush1.xpose.msra.mxu0 0.0
    %999 = vmatprep.subr.mxu0 0.0
    %1000 = vmatpush1.xpose.msra.mxu0 0.0
    %1001 = vmatprep.subr.mxu0 0.0
    %1002 = vmatpush1.xpose.msra.mxu0 0.0
    %1003 = vmatprep.subr.mxu0 0.0
    %1004 = vmatpush1.xpose.msra.mxu0 0.0
    %1005 = vmatprep.subr.mxu0 0.0
    %1006 = vmatpush1.xpose.msra.mxu0 0.0
    %1007 = vmatprep.subr.mxu0 0.0
    %1008 = vmatpush1.xpose.msra.mxu0 0.0
    %1009 = vmatprep.subr.mxu0 0.0
    %1010 = vmatpush1.xpose.msra.mxu0 0.0
    %1011 = vmatprep.subr.mxu0 0.0
    %1012 = vmatpush1.xpose.msra.mxu0 0.0
    %1013 = vmatprep.subr.mxu0 0.0
    %1014 = vmatpush1.xpose.msra.mxu0 0.0
    %1015 = vmatprep.subr.mxu0 0.0
    %1016 = vmatpush1.xpose.msra.mxu0 0.0
    %1017 = vmatprep.subr.mxu0 0.0
    %1018 = vmatpush1.xpose.msra.mxu0 0.0
    %1019 = vmatprep.subr.mxu0 0.0
    %1020 = vmatpush1.xpose.msra.mxu0 0.0
    %1021 = vmatprep.subr.mxu0 0.0
    %1022 = vmatpush1.xpose.msra.mxu0 0.0
    %1023 = vmatprep.subr.mxu0 0.0
    %1024 = vmatpush1.xpose.msra.mxu0 0.0
    %1025 = vmatprep.subr.mxu0 0.0
    %1026 = vmatpush1.xpose.msra.mxu0 0.0
    %1027 = vmatprep.subr.mxu0 0.0
    %1028 = vmatpush1.xpose.msra.mxu0 0.0
    %1029 = vmatprep.subr.mxu0 0.0
    %1030 = vmatpush1.xpose.msra.mxu0 0.0
    %1031 = vmatprep.subr.mxu0 0.0
    %1032 = vmatpush1.xpose.msra.mxu0 0.0
    %1033 = vmatprep.subr.mxu0 0.0
    %1034 = vmatpush1.xpose.msra.mxu0 0.0
    %1035 = vmatprep.subr.mxu0 0.0
    %1036 = vmatpush1.xpose.msra.mxu0 0.0
    %1037 = vmatprep.subr.mxu0 0.0
    %1038 = vmatpush1.xpose.msra.mxu0 0.0
    %1039 = vmatprep.subr.mxu0 0.0
    %1040 = vmatpush1.xpose.msra.mxu0 0.0
    %1041 = vmatprep.subr.mxu0 0.0
    %1042 = vmatpush1.xpose.msra.mxu0 0.0
    %1043 = vmatprep.subr.mxu0 0.0
    %1044 = vmatpush1.xpose.msra.mxu0 0.0
    %1045 = vmatprep.subr.mxu0 0.0
    %1046 = vmatpush1.xpose.msra.mxu0 0.0
    %1047 = vmatprep.mubr.f32.mxu0 0.0
    %1048 = vmatmul.mubr.f32.gmra.mrb[0].mxu0 %v979
    %v1049 = vpop.f32.mrb[0].mxu0
    %v1050 = vadd.f32 0.0, %v1049
    %v1051 = vpop.f32.mrb[0].mxu0
    %1052 = vdwg.mxu0
    %v1053 = vmul.f32 %v1050, 0.25
    %v1054 = vsel %vm887, %v1053, -inf
    %1055 = vmax.xlane.f32.xlu0 %v1054
    %v1056 = vpop.xlane.xlu0 %1055
    %v1057 = vsub.f32 %v1053, %v1056
    %v1058 = vmul.f32 %v1057, 1.442695
    %v1059 = vpow.pop %v1058
    %v1060 = vsel %vm887, %v1059, 0.0
    %1061 = vadd.xlane.f32.xlu0 %v1060
    %v1062 = vpop.xlane.xlu0 %1061
    %v1063 = vrcp.pop %v1062
    %1064 = vrot.lane.b32.xlu0 %v802, 80
    %v1065 = vpop.permute.xlu0 %1064
    %v1068 = vsel %vm887, %v1059, 0
    %1070 = vmatprep.subr.mxu0 0.0
    %1071 = vmatpush1.msra.mxu0 %v1065
    %1072 = vmatprep.subr.mxu0 0.0
    %1073 = vmatpush1.msra.mxu0 0.0
    %1074 = vmatprep.subr.mxu0 0.0
    %1075 = vmatpush1.msra.mxu0 0.0
    %1076 = vmatprep.subr.mxu0 0.0
    %1077 = vmatpush1.msra.mxu0 0.0
    %1078 = vmatprep.subr.mxu0 0.0
    %1079 = vmatpush1.msra.mxu0 0.0
    %1080 = vmatprep.subr.mxu0 0.0
    %1081 = vmatpush1.msra.mxu0 0.0
    %1082 = vmatprep.subr.mxu0 0.0
    %1083 = vmatpush1.msra.mxu0 0.0
    %1084 = vmatprep.subr.mxu0 0.0
    %1085 = vmatpush1.msra.mxu0 0.0
    %1086 = vmatprep.subr.mxu0 0.0
    %1087 = vmatpush1.msra.mxu0 0.0
    %1088 = vmatprep.subr.mxu0 0.0
    %1089 = vmatpush1.msra.mxu0 0.0
    %1090 = vmatprep.subr.mxu0 0.0
    %1091 = vmatpush1.msra.mxu0 0.0
    %1092 = vmatprep.subr.mxu0 0.0
    %1093 = vmatpush1.msra.mxu0 0.0
    %1094 = vmatprep.subr.mxu0 0.0
    %1095 = vmatpush1.msra.mxu0 0.0
    %1096 = vmatprep.subr.mxu0 0.0
    %1097 = vmatpush1.msra.mxu0 0.0
    %1098 = vmatprep.subr.mxu0 0.0
    %1099 = vmatpush1.msra.mxu0 0.0
    %1100 = vmatprep.subr.mxu0 0.0
    %1101 = vmatpush1.msra.mxu0 0.0
    %1102 = vmatprep.subr.mxu0 0.0
    %1103 = vmatpush1.msra.mxu0 0.0
    %1104 = vmatprep.subr.mxu0 0.0
    %1105 = vmatpush1.msra.mxu0 0.0
    %1106 = vmatprep.subr.mxu0 0.0
    %1107 = vmatpush1.msra.mxu0 0.0
    %1108 = vmatprep.subr.mxu0 0.0
    %1109 = vmatpush1.msra.mxu0 0.0
    %1110 = vmatprep.subr.mxu0 0.0
    %1111 = vmatpush1.msra.mxu0 0.0
    %1112 = vmatprep.subr.mxu0 0.0
    %1113 = vmatpush1.msra.mxu0 0.0
    %1114 = vmatprep.subr.mxu0 0.0
    %1115 = vmatpush1.msra.mxu0 0.0
    %1116 = vmatprep.subr.mxu0 0.0
    %1117 = vmatpush1.msra.mxu0 0.0
    %1118 = vmatprep.subr.mxu0 0.0
    %1119 = vmatpush1.msra.mxu0 0.0
    %1120 = vmatprep.subr.mxu0 0.0
    %1121 = vmatpush1.msra.mxu0 0.0
    %1122 = vmatprep.subr.mxu0 0.0
    %1123 = vmatpush1.msra.mxu0 0.0
    %1124 = vmatprep.subr.mxu0 0.0
    %1125 = vmatpush1.msra.mxu0 0.0
    %1126 = vmatprep.subr.mxu0 0.0
    %1127 = vmatpush1.msra.mxu0 0.0
    %1128 = vmatprep.subr.mxu0 0.0
    %1129 = vmatpush1.msra.mxu0 0.0
    %1130 = vmatprep.subr.mxu0 0.0
    %1131 = vmatpush1.msra.mxu0 0.0
    %1132 = vmatprep.subr.mxu0 0.0
    %1133 = vmatpush1.msra.mxu0 0.0
    %1134 = vmatprep.mubr.f32.mxu0 0.0
    %1135 = vmatmul.mubr.f32.gmra.mrb[0].mxu0 %v1068
    %v1136 = vpop.f32.mrb[0].mxu0
    %v1137 = vadd.f32 0.0, %v1136
    %v1138 = vpop.f32.mrb[0].mxu0
    %1139 = vdwg.mxu0
    %v1140 = vmul.f32 %v1137, %v1063
    %1142 = vrot.lane.b32.xlu0 %v1140, 16
    %v1143 = vpop.permute.xlu0 %1142
    %v1145 = vsel %vm549, %v974, %v1143
    %v1147 = vsel %vm549, %v721, 0
    %v1150 = vsel %vm549, %v807, 0
    %1152 = vmatprep.subr.mxu0 0.0
    %1153 = vmatpush1.xpose.msra.mxu0 %v1150
    %1154 = vmatprep.subr.mxu0 0.0
    %1155 = vmatpush1.xpose.msra.mxu0 0.0
    %1156 = vmatprep.subr.mxu0 0.0
    %1157 = vmatpush1.xpose.msra.mxu0 0.0
    %1158 = vmatprep.subr.mxu0 0.0
    %1159 = vmatpush1.xpose.msra.mxu0 0.0
    %1160 = vmatprep.subr.mxu0 0.0
    %1161 = vmatpush1.xpose.msra.mxu0 0.0
    %1162 = vmatprep.subr.mxu0 0.0
    %1163 = vmatpush1.xpose.msra.mxu0 0.0
    %1164 = vmatprep.subr.mxu0 0.0
    %1165 = vmatpush1.xpose.msra.mxu0 0.0
    %1166 = vmatprep.subr.mxu0 0.0
    %1167 = vmatpush1.xpose.msra.mxu0 0.0
    %1168 = vmatprep.subr.mxu0 0.0
    %1169 = vmatpush1.xpose.msra.mxu0 0.0
    %1170 = vmatprep.subr.mxu0 0.0
    %1171 = vmatpush1.xpose.msra.mxu0 0.0
    %1172 = vmatprep.subr.mxu0 0.0
    %1173 = vmatpush1.xpose.msra.mxu0 0.0
    %1174 = vmatprep.subr.mxu0 0.0
    %1175 = vmatpush1.xpose.msra.mxu0 0.0
    %1176 = vmatprep.subr.mxu0 0.0
    %1177 = vmatpush1.xpose.msra.mxu0 0.0
    %1178 = vmatprep.subr.mxu0 0.0
    %1179 = vmatpush1.xpose.msra.mxu0 0.0
    %1180 = vmatprep.subr.mxu0 0.0
    %1181 = vmatpush1.xpose.msra.mxu0 0.0
    %1182 = vmatprep.subr.mxu0 0.0
    %1183 = vmatpush1.xpose.msra.mxu0 0.0
    %1184 = vmatprep.subr.mxu0 0.0
    %1185 = vmatpush1.xpose.msra.mxu0 0.0
    %1186 = vmatprep.subr.mxu0 0.0
    %1187 = vmatpush1.xpose.msra.mxu0 0.0
    %1188 = vmatprep.subr.mxu0 0.0
    %1189 = vmatpush1.xpose.msra.mxu0 0.0
    %1190 = vmatprep.subr.mxu0 0.0
    %1191 = vmatpush1.xpose.msra.mxu0 0.0
    %1192 = vmatprep.subr.mxu0 0.0
    %1193 = vmatpush1.xpose.msra.mxu0 0.0
    %1194 = vmatprep.subr.mxu0 0.0
    %1195 = vmatpush1.xpose.msra.mxu0 0.0
    %1196 = vmatprep.subr.mxu0 0.0
    %1197 = vmatpush1.xpose.msra.mxu0 0.0
    %1198 = vmatprep.subr.mxu0 0.0
    %1199 = vmatpush1.xpose.msra.mxu0 0.0
    %1200 = vmatprep.subr.mxu0 0.0
    %1201 = vmatpush1.xpose.msra.mxu0 0.0
    %1202 = vmatprep.subr.mxu0 0.0
    %1203 = vmatpush1.xpose.msra.mxu0 0.0
    %1204 = vmatprep.subr.mxu0 0.0
    %1205 = vmatpush1.xpose.msra.mxu0 0.0
    %1206 = vmatprep.subr.mxu0 0.0
    %1207 = vmatpush1.xpose.msra.mxu0 0.0
    %1208 = vmatprep.subr.mxu0 0.0
    %1209 = vmatpush1.xpose.msra.mxu0 0.0
    %1210 = vmatprep.subr.mxu0 0.0
    %1211 = vmatpush1.xpose.msra.mxu0 0.0
    %1212 = vmatprep.subr.mxu0 0.0
    %1213 = vmatpush1.xpose.msra.mxu0 0.0
    %1214 = vmatprep.subr.mxu0 0.0
    %1215 = vmatpush1.xpose.msra.mxu0 0.0
    %1216 = vmatprep.mubr.f32.mxu0 0.0
    %1217 = vmatmul.mubr.f32.gmra.mrb[0].mxu0 %v1147
    %v1218 = vpop.f32.mrb[0].mxu0
    %v1219 = vadd.f32 0.0, %v1218
    %v1220 = vpop.f32.mrb[0].mxu0
    %1221 = vdwg.mxu0
    %v1222 = vmul.f32 %v1219, 0.25
    %v1223 = vsel %vm887, %v1222, -inf
    %1224 = vmax.xlane.f32.xlu0 %v1223
    %v1225 = vpop.xlane.xlu0 %1224
    %v1226 = vsub.f32 %v1222, %v1225
    %v1227 = vmul.f32 %v1226, 1.442695
    %v1228 = vpow.pop %v1227
    %v1229 = vsel %vm887, %v1228, 0.0
    %1230 = vadd.xlane.f32.xlu0 %v1229
    %v1231 = vpop.xlane.xlu0 %1230
    %v1232 = vrcp.pop %v1231
    %1233 = vrot.lane.b32.xlu0 %v807, 96
    %v1234 = vpop.permute.xlu0 %1233
    %v1237 = vsel %vm887, %v1228, 0
    %1239 = vmatprep.subr.mxu0 0.0
    %1240 = vmatpush1.msra.mxu0 %v1234
    %1241 = vmatprep.subr.mxu0 0.0
    %1242 = vmatpush1.msra.mxu0 0.0
    %1243 = vmatprep.subr.mxu0 0.0
    %1244 = vmatpush1.msra.mxu0 0.0
    %1245 = vmatprep.subr.mxu0 0.0
    %1246 = vmatpush1.msra.mxu0 0.0
    %1247 = vmatprep.subr.mxu0 0.0
    %1248 = vmatpush1.msra.mxu0 0.0
    %1249 = vmatprep.subr.mxu0 0.0
    %1250 = vmatpush1.msra.mxu0 0.0
    %1251 = vmatprep.subr.mxu0 0.0
    %1252 = vmatpush1.msra.mxu0 0.0
    %1253 = vmatprep.subr.mxu0 0.0
    %1254 = vmatpush1.msra.mxu0 0.0
    %1255 = vmatprep.subr.mxu0 0.0
    %1256 = vmatpush1.msra.mxu0 0.0
    %1257 = vmatprep.subr.mxu0 0.0
    %1258 = vmatpush1.msra.mxu0 0.0
    %1259 = vmatprep.subr.mxu0 0.0
    %1260 = vmatpush1.msra.mxu0 0.0
    %1261 = vmatprep.subr.mxu0 0.0
    %1262 = vmatpush1.msra.mxu0 0.0
    %1263 = vmatprep.subr.mxu0 0.0
    %1264 = vmatpush1.msra.mxu0 0.0
    %1265 = vmatprep.subr.mxu0 0.0
    %1266 = vmatpush1.msra.mxu0 0.0
    %1267 = vmatprep.subr.mxu0 0.0
    %1268 = vmatpush1.msra.mxu0 0.0
    %1269 = vmatprep.subr.mxu0 0.0
    %1270 = vmatpush1.msra.mxu0 0.0
    %1271 = vmatprep.subr.mxu0 0.0
    %1272 = vmatpush1.msra.mxu0 0.0
    %1273 = vmatprep.subr.mxu0 0.0
    %1274 = vmatpush1.msra.mxu0 0.0
    %1275 = vmatprep.subr.mxu0 0.0
    %1276 = vmatpush1.msra.mxu0 0.0
    %1277 = vmatprep.subr.mxu0 0.0
    %1278 = vmatpush1.msra.mxu0 0.0
    %1279 = vmatprep.subr.mxu0 0.0
    %1280 = vmatpush1.msra.mxu0 0.0
    %1281 = vmatprep.subr.mxu0 0.0
    %1282 = vmatpush1.msra.mxu0 0.0
    %1283 = vmatprep.subr.mxu0 0.0
    %1284 = vmatpush1.msra.mxu0 0.0
    %1285 = vmatprep.subr.mxu0 0.0
    %1286 = vmatpush1.msra.mxu0 0.0
    %1287 = vmatprep.subr.mxu0 0.0
    %1288 = vmatpush1.msra.mxu0 0.0
    %1289 = vmatprep.subr.mxu0 0.0
    %1290 = vmatpush1.msra.mxu0 0.0
    %1291 = vmatprep.subr.mxu0 0.0
    %1292 = vmatpush1.msra.mxu0 0.0
    %1293 = vmatprep.subr.mxu0 0.0
    %1294 = vmatpush1.msra.mxu0 0.0
    %1295 = vmatprep.subr.mxu0 0.0
    %1296 = vmatpush1.msra.mxu0 0.0
    %1297 = vmatprep.subr.mxu0 0.0
    %1298 = vmatpush1.msra.mxu0 0.0
    %1299 = vmatprep.subr.mxu0 0.0
    %1300 = vmatpush1.msra.mxu0 0.0
    %1301 = vmatprep.subr.mxu0 0.0
    %1302 = vmatpush1.msra.mxu0 0.0
    %1303 = vmatprep.mubr.f32.mxu0 0.0
    %1304 = vmatmul.mubr.f32.gmra.mrb[0].mxu0 %v1237
    %v1305 = vpop.f32.mrb[0].mxu0
    %v1306 = vadd.f32 0.0, %v1305
    %v1307 = vpop.f32.mrb[0].mxu0
    %1308 = vdwg.mxu0
    %v1309 = vmul.f32 %v1306, %v1232
    %1310 = vrot.lane.b32.xlu0 %v721, 112
    %v1311 = vpop.permute.xlu0 %1310
    %1312 = vrot.lane.b32.xlu0 %v807, 112
    %v1313 = vpop.permute.xlu0 %1312
    %v1314 = vsel %vm549, %v1311, 0
    %v1316 = vsel %vm549, %v1313, 0
    %1318 = vmatprep.subr.mxu0 0.0
    %1319 = vmatpush1.xpose.msra.mxu0 %v1316
    %1320 = vmatprep.subr.mxu0 0.0
    %1321 = vmatpush1.xpose.msra.mxu0 0.0
    %1322 = vmatprep.subr.mxu0 0.0
    %1323 = vmatpush1.xpose.msra.mxu0 0.0
    %1324 = vmatprep.subr.mxu0 0.0
    %1325 = vmatpush1.xpose.msra.mxu0 0.0
    %1326 = vmatprep.subr.mxu0 0.0
    %1327 = vmatpush1.xpose.msra.mxu0 0.0
    %1328 = vmatprep.subr.mxu0 0.0
    %1329 = vmatpush1.xpose.msra.mxu0 0.0
    %1330 = vmatprep.subr.mxu0 0.0
    %1331 = vmatpush1.xpose.msra.mxu0 0.0
    %1332 = vmatprep.subr.mxu0 0.0
    %1333 = vmatpush1.xpose.msra.mxu0 0.0
    %1334 = vmatprep.subr.mxu0 0.0
    %1335 = vmatpush1.xpose.msra.mxu0 0.0
    %1336 = vmatprep.subr.mxu0 0.0
    %1337 = vmatpush1.xpose.msra.mxu0 0.0
    %1338 = vmatprep.subr.mxu0 0.0
    %1339 = vmatpush1.xpose.msra.mxu0 0.0
    %1340 = vmatprep.subr.mxu0 0.0
    %1341 = vmatpush1.xpose.msra.mxu0 0.0
    %1342 = vmatprep.subr.mxu0 0.0
    %1343 = vmatpush1.xpose.msra.mxu0 0.0
    %1344 = vmatprep.subr.mxu0 0.0
    %1345 = vmatpush1.xpose.msra.mxu0 0.0
    %1346 = vmatprep.subr.mxu0 0.0
    %1347 = vmatpush1.xpose.msra.mxu0 0.0
    %1348 = vmatprep.subr.mxu0 0.0
    %1349 = vmatpush1.xpose.msra.mxu0 0.0
    %1350 = vmatprep.subr.mxu0 0.0
    %1351 = vmatpush1.xpose.msra.mxu0 0.0
    %1352 = vmatprep.subr.mxu0 0.0
    %1353 = vmatpush1.xpose.msra.mxu0 0.0
    %1354 = vmatprep.subr.mxu0 0.0
    %1355 = vmatpush1.xpose.msra.mxu0 0.0
    %1356 = vmatprep.subr.mxu0 0.0
    %1357 = vmatpush1.xpose.msra.mxu0 0.0
    %1358 = vmatprep.subr.mxu0 0.0
    %1359 = vmatpush1.xpose.msra.mxu0 0.0
    %1360 = vmatprep.subr.mxu0 0.0
    %1361 = vmatpush1.xpose.msra.mxu0 0.0
    %1362 = vmatprep.subr.mxu0 0.0
    %1363 = vmatpush1.xpose.msra.mxu0 0.0
    %1364 = vmatprep.subr.mxu0 0.0
    %1365 = vmatpush1.xpose.msra.mxu0 0.0
    %1366 = vmatprep.subr.mxu0 0.0
    %1367 = vmatpush1.xpose.msra.mxu0 0.0
    %1368 = vmatprep.subr.mxu0 0.0
    %1369 = vmatpush1.xpose.msra.mxu0 0.0
    %1370 = vmatprep.subr.mxu0 0.0
    %1371 = vmatpush1.xpose.msra.mxu0 0.0
    %1372 = vmatprep.subr.mxu0 0.0
    %1373 = vmatpush1.xpose.msra.mxu0 0.0
    %1374 = vmatprep.subr.mxu0 0.0
    %1375 = vmatpush1.xpose.msra.mxu0 0.0
    %1376 = vmatprep.subr.mxu0 0.0
    %1377 = vmatpush1.xpose.msra.mxu0 0.0
    %1378 = vmatprep.subr.mxu0 0.0
    %1379 = vmatpush1.xpose.msra.mxu0 0.0
    %1380 = vmatprep.subr.mxu0 0.0
    %1381 = vmatpush1.xpose.msra.mxu0 0.0
    %1382 = vmatprep.mubr.f32.mxu0 0.0
    %1383 = vmatmul.mubr.f32.gmra.mrb[0].mxu0 %v1314
    %v1384 = vpop.f32.mrb[0].mxu0
    %v1385 = vadd.f32 0.0, %v1384
    %v1386 = vpop.f32.mrb[0].mxu0
    %1387 = vdwg.mxu0
    %v1388 = vmul.f32 %v1385, 0.25
    %v1389 = vsel %vm887, %v1388, -inf
    %1390 = vmax.xlane.f32.xlu0 %v1389
    %v1391 = vpop.xlane.xlu0 %1390
    %v1392 = vsub.f32 %v1388, %v1391
    %v1393 = vmul.f32 %v1392, 1.442695
    %v1394 = vpow.pop %v1393
    %v1395 = vsel %vm887, %v1394, 0.0
    %1396 = vadd.xlane.f32.xlu0 %v1395
    %v1397 = vpop.xlane.xlu0 %1396
    %v1398 = vrcp.pop %v1397
    %1399 = vrot.lane.b32.xlu0 %v807, 80
    %v1400 = vpop.permute.xlu0 %1399
    %v1403 = vsel %vm887, %v1394, 0
    %1405 = vmatprep.subr.mxu0 0.0
    %1406 = vmatpush1.msra.mxu0 %v1400
    %1407 = vmatprep.subr.mxu0 0.0
    %1408 = vmatpush1.msra.mxu0 0.0
    %1409 = vmatprep.subr.mxu0 0.0
    %1410 = vmatpush1.msra.mxu0 0.0
    %1411 = vmatprep.subr.mxu0 0.0
    %1412 = vmatpush1.msra.mxu0 0.0
    %1413 = vmatprep.subr.mxu0 0.0
    %1414 = vmatpush1.msra.mxu0 0.0
    %1415 = vmatprep.subr.mxu0 0.0
    %1416 = vmatpush1.msra.mxu0 0.0
    %1417 = vmatprep.subr.mxu0 0.0
    %1418 = vmatpush1.msra.mxu0 0.0
    %1419 = vmatprep.subr.mxu0 0.0
    %1420 = vmatpush1.msra.mxu0 0.0
    %1421 = vmatprep.subr.mxu0 0.0
    %1422 = vmatpush1.msra.mxu0 0.0
    %1423 = vmatprep.subr.mxu0 0.0
    %1424 = vmatpush1.msra.mxu0 0.0
    %1425 = vmatprep.subr.mxu0 0.0
    %1426 = vmatpush1.msra.mxu0 0.0
    %1427 = vmatprep.subr.mxu0 0.0
    %1428 = vmatpush1.msra.mxu0 0.0
    %1429 = vmatprep.subr.mxu0 0.0
    %1430 = vmatpush1.msra.mxu0 0.0
    %1431 = vmatprep.subr.mxu0 0.0
    %1432 = vmatpush1.msra.mxu0 0.0
    %1433 = vmatprep.subr.mxu0 0.0
    %1434 = vmatpush1.msra.mxu0 0.0
    %1435 = vmatprep.subr.mxu0 0.0
    %1436 = vmatpush1.msra.mxu0 0.0
    %1437 = vmatprep.subr.mxu0 0.0
    %1438 = vmatpush1.msra.mxu0 0.0
    %1439 = vmatprep.subr.mxu0 0.0
    %1440 = vmatpush1.msra.mxu0 0.0
    %1441 = vmatprep.subr.mxu0 0.0
    %1442 = vmatpush1.msra.mxu0 0.0
    %1443 = vmatprep.subr.mxu0 0.0
    %1444 = vmatpush1.msra.mxu0 0.0
    %1445 = vmatprep.subr.mxu0 0.0
    %1446 = vmatpush1.msra.mxu0 0.0
    %1447 = vmatprep.subr.mxu0 0.0
    %1448 = vmatpush1.msra.mxu0 0.0
    %1449 = vmatprep.subr.mxu0 0.0
    %1450 = vmatpush1.msra.mxu0 0.0
    %1451 = vmatprep.subr.mxu0 0.0
    %1452 = vmatpush1.msra.mxu0 0.0
    %1453 = vmatprep.subr.mxu0 0.0
    %1454 = vmatpush1.msra.mxu0 0.0
    %1455 = vmatprep.subr.mxu0 0.0
    %1456 = vmatpush1.msra.mxu0 0.0
    %1457 = vmatprep.subr.mxu0 0.0
    %1458 = vmatpush1.msra.mxu0 0.0
    %1459 = vmatprep.subr.mxu0 0.0
    %1460 = vmatpush1.msra.mxu0 0.0
    %1461 = vmatprep.subr.mxu0 0.0
    %1462 = vmatpush1.msra.mxu0 0.0
    %1463 = vmatprep.subr.mxu0 0.0
    %1464 = vmatpush1.msra.mxu0 0.0
    %1465 = vmatprep.subr.mxu0 0.0
    %1466 = vmatpush1.msra.mxu0 0.0
    %1467 = vmatprep.subr.mxu0 0.0
    %1468 = vmatpush1.msra.mxu0 0.0
    %1469 = vmatprep.mubr.f32.mxu0 0.0
    %1470 = vmatmul.mubr.f32.gmra.mrb[0].mxu0 %v1403
    %v1471 = vpop.f32.mrb[0].mxu0
    %v1472 = vadd.f32 0.0, %v1471
    %v1473 = vpop.f32.mrb[0].mxu0
    %1474 = vdwg.mxu0
    %v1475 = vmul.f32 %v1472, %v1398
    %1477 = vrot.lane.b32.xlu0 %v1475, 16
    %v1478 = vpop.permute.xlu0 %1477
    %v1480 = vsel %vm549, %v1309, %v1478
    %v1481 = vld [vmem:[%s69] sm:$0xff]
    %v1482 = vld [vmem:[%s69 + $0x8] sm:$0xff]
    %v1483 = vld [vmem:[%s69 + $0x10] sm:$0xff]
    %v1484 = vld [vmem:[%s69 + $0x18] sm:$0xff]
    %v1485 = vld [vmem:[#allocation37] sm:$0x1]
    %v1487 = vlaneseq
    %v1488 = vshrl.u32 %v1487, 7
    %v1489 = vsub.s32 0, %v1488
    %v1490 = vrot.slane %v1485, %v1489
    %v1493 = vsel %vm642, %v1145, 0
    %v1496 = vsel %vm642, %v1480, 0
    %1498 = vmatprep.subr.mxu0 0.0
    %1499 = vmatpush1.msra.mxu0 %v1481
    %1500 = vmatprep.subr.mxu0 0.0
    %1501 = vmatpush1.msra.mxu0 %v1482
    %1502 = vmatprep.subr.mxu0 0.0
    %1503 = vmatpush1.msra.mxu0 %v1483
    %1504 = vmatprep.subr.mxu0 0.0
    %1505 = vmatpush1.msra.mxu0 %v1484
    %1506 = vmatprep.subr.mxu0 0.0
    %1507 = vmatpush1.msra.mxu0 0.0
    %1508 = vmatprep.subr.mxu0 0.0
    %1509 = vmatpush1.msra.mxu0 0.0
    %1510 = vmatprep.subr.mxu0 0.0
    %1511 = vmatpush1.msra.mxu0 0.0
    %1512 = vmatprep.subr.mxu0 0.0
    %1513 = vmatpush1.msra.mxu0 0.0
    %1514 = vmatprep.subr.mxu0 0.0
    %1515 = vmatpush1.msra.mxu0 0.0
    %1516 = vmatprep.subr.mxu0 0.0
    %1517 = vmatpush1.msra.mxu0 0.0
    %1518 = vmatprep.subr.mxu0 0.0
    %1519 = vmatpush1.msra.mxu0 0.0
    %1520 = vmatprep.subr.mxu0 0.0
    %1521 = vmatpush1.msra.mxu0 0.0
    %1522 = vmatprep.subr.mxu0 0.0
    %1523 = vmatpush1.msra.mxu0 0.0
    %1524 = vmatprep.subr.mxu0 0.0
    %1525 = vmatpush1.msra.mxu0 0.0
    %1526 = vmatprep.subr.mxu0 0.0
    %1527 = vmatpush1.msra.mxu0 0.0
    %1528 = vmatprep.subr.mxu0 0.0
    %1529 = vmatpush1.msra.mxu0 0.0
    %1530 = vmatprep.subr.mxu0 0.0
    %1531 = vmatpush1.msra.mxu0 0.0
    %1532 = vmatprep.subr.mxu0 0.0
    %1533 = vmatpush1.msra.mxu0 0.0
    %1534 = vmatprep.subr.mxu0 0.0
    %1535 = vmatpush1.msra.mxu0 0.0
    %1536 = vmatprep.subr.mxu0 0.0
    %1537 = vmatpush1.msra.mxu0 0.0
    %1538 = vmatprep.subr.mxu0 0.0
    %1539 = vmatpush1.msra.mxu0 0.0
    %1540 = vmatprep.subr.mxu0 0.0
    %1541 = vmatpush1.msra.mxu0 0.0
    %1542 = vmatprep.subr.mxu0 0.0
    %1543 = vmatpush1.msra.mxu0 0.0
    %1544 = vmatprep.subr.mxu0 0.0
    %1545 = vmatpush1.msra.mxu0 0.0
    %1546 = vmatprep.subr.mxu0 0.0
    %1547 = vmatpush1.msra.mxu0 0.0
    %1548 = vmatprep.subr.mxu0 0.0
    %1549 = vmatpush1.msra.mxu0 0.0
    %1550 = vmatprep.subr.mxu0 0.0
    %1551 = vmatpush1.msra.mxu0 0.0
    %1552 = vmatprep.subr.mxu0 0.0
    %1553 = vmatpush1.msra.mxu0 0.0
    %1554 = vmatprep.subr.mxu0 0.0
    %1555 = vmatpush1.msra.mxu0 0.0
    %1556 = vmatprep.subr.mxu0 0.0
    %1557 = vmatpush1.msra.mxu0 0.0
    %1558 = vmatprep.subr.mxu0 0.0
    %1559 = vmatpush1.msra.mxu0 0.0
    %1560 = vmatprep.subr.mxu0 0.0
    %1561 = vmatpush1.msra.mxu0 0.0
    %1562 = vmatprep.mubr.f32.mxu0 0.0
    %1563 = vmatmul.mubr.f32.gmra.mrb[0].mxu0 %v1493
    %v1564 = vpop.f32.mrb[0].mxu0
    %v1565 = vadd.f32 %v1490, %v1564
    %v1566 = vpop.f32.mrb[0].mxu0
    %1567 = vmatprep.mubr.f32.mxu0 0.0
    %1568 = vmatmul.mubr.f32.gmra.mrb[0].mxu0 %v1496
    %v1569 = vpop.f32.mrb[0].mxu0
    %v1570 = vadd.f32 %v1490, %v1569
    %v1571 = vpop.f32.mrb[0].mxu0
    %1572 = vdwg.mxu0
    %v1573 = vadd.f32 %v623, %v1565
    %v1574 = vadd.f32 %v628, %v1570
    %v1575 = vld [vmem:[#allocation31] sm:$0x1]
    %v1576 = vld [vmem:[#allocation30] sm:$0x1]
    %v1577 = vsel %vm642, %v1573, 0.0
    %1578 = vadd.xlane.f32.xlu0 %v1577
    %v1579 = vpop.xlane.xlu0 %1578
    %v1580 = vsel %vm642, %v1574, 0.0
    %1581 = vadd.xlane.f32.xlu0 %v1580
    %v1582 = vpop.xlane.xlu0 %1581
    %v1583 = vrcp.pop 32.0
    %v1584 = vmul.f32 %v1579, %v1583
    %v1585 = vmul.f32 %v1582, %v1583
    %v1586 = vsub.f32 %v1573, %v1584
    %v1587 = vsub.f32 %v1574, %v1585
    %v1588 = vmul.f32 %v1586, %v1586
    %v1589 = vmul.f32 %v1587, %v1587
    %v1590 = vsel %vm642, %v1588, 0.0
    %1591 = vadd.xlane.f32.xlu0 %v1590
    %v1592 = vpop.xlane.xlu0 %1591
    %v1593 = vsel %vm642, %v1589, 0.0
    %1594 = vadd.xlane.f32.xlu0 %v1593
    %v1595 = vpop.xlane.xlu0 %1594
    %v1596 = vmul.f32 %v1592, %v1583
    %v1597 = vmul.f32 %v1595, %v1583
    %v1598 = vadd.f32 %v1596, 1e-05
    %v1599 = vadd.f32 %v1597, 1e-05
    %v1600 = vrsqrt.pop %v1598
    %v1601 = vrsqrt.pop %v1599
    %v1602 = vmul.f32 %v1586, %v1600
    %v1603 = vmul.f32 %v1587, %v1601
    %v1605 = vlaneseq
    %v1606 = vshrl.u32 %v1605, 7
    %v1607 = vsub.s32 0, %v1606
    %v1608 = vrot.slane %v1575, %v1607
    %v1610 = vmul.f32 %v1602, %v1608
    %v1611 = vmul.f32 %v1603, %v1608
    %v1613 = vlaneseq
    %v1614 = vshrl.u32 %v1613, 7
    %v1615 = vsub.s32 0, %v1614
    %v1616 = vrot.slane %v1576, %v1615
    %v1618 = vadd.f32 %v1610, %v1616
    %v1619 = vadd.f32 %v1611, %v1616
    %v1620 = vld [vmem:[%s73] sm:$0xff]
    %v1621 = vld [vmem:[%s73 + $0x8] sm:$0xff]
    %v1622 = vld [vmem:[%s73 + $0x10] sm:$0xff]
    %v1623 = vld [vmem:[%s73 + $0x18] sm:$0xff]
    %v1624 = vld [vmem:[#allocation27] sm:$0x1]
    %v1626 = vlaneseq
    %v1627 = vshrl.u32 %v1626, 7
    %v1628 = vsub.s32 0, %v1627
    %v1629 = vrot.slane %v1624, %v1628
    %v1632 = vsel %vm642, %v1618, 0
    %v1635 = vsel %vm642, %v1619, 0
    %1637 = vmatprep.subr.mxu0 0.0
    %1638 = vmatpush1.msra.mxu0 %v1620
    %1639 = vmatprep.subr.mxu0 0.0
    %1640 = vmatpush1.msra.mxu0 %v1621
    %1641 = vmatprep.subr.mxu0 0.0
    %1642 = vmatpush1.msra.mxu0 %v1622
    %1643 = vmatprep.subr.mxu0 0.0
    %1644 = vmatpush1.msra.mxu0 %v1623
    %1645 = vmatprep.subr.mxu0 0.0
    %1646 = vmatpush1.msra.mxu0 0.0
    %1647 = vmatprep.subr.mxu0 0.0
    %1648 = vmatpush1.msra.mxu0 0.0
    %1649 = vmatprep.subr.mxu0 0.0
    %1650 = vmatpush1.msra.mxu0 0.0
    %1651 = vmatprep.subr.mxu0 0.0
    %1652 = vmatpush1.msra.mxu0 0.0
    %1653 = vmatprep.subr.mxu0 0.0
    %1654 = vmatpush1.msra.mxu0 0.0
    %1655 = vmatprep.subr.mxu0 0.0
    %1656 = vmatpush1.msra.mxu0 0.0
    %1657 = vmatprep.subr.mxu0 0.0
    %1658 = vmatpush1.msra.mxu0 0.0
    %1659 = vmatprep.subr.mxu0 0.0
    %1660 = vmatpush1.msra.mxu0 0.0
    %1661 = vmatprep.subr.mxu0 0.0
    %1662 = vmatpush1.msra.mxu0 0.0
    %1663 = vmatprep.subr.mxu0 0.0
    %1664 = vmatpush1.msra.mxu0 0.0
    %1665 = vmatprep.subr.mxu0 0.0
    %1666 = vmatpush1.msra.mxu0 0.0
    %1667 = vmatprep.subr.mxu0 0.0
    %1668 = vmatpush1.msra.mxu0 0.0
    %1669 = vmatprep.subr.mxu0 0.0
    %1670 = vmatpush1.msra.mxu0 0.0
    %1671 = vmatprep.subr.mxu0 0.0
    %1672 = vmatpush1.msra.mxu0 0.0
    %1673 = vmatprep.subr.mxu0 0.0
    %1674 = vmatpush1.msra.mxu0 0.0
    %1675 = vmatprep.subr.mxu0 0.0
    %1676 = vmatpush1.msra.mxu0 0.0
    %1677 = vmatprep.subr.mxu0 0.0
    %1678 = vmatpush1.msra.mxu0 0.0
    %1679 = vmatprep.subr.mxu0 0.0
    %1680 = vmatpush1.msra.mxu0 0.0
    %1681 = vmatprep.subr.mxu0 0.0
    %1682 = vmatpush1.msra.mxu0 0.0
    %1683 = vmatprep.subr.mxu0 0.0
    %1684 = vmatpush1.msra.mxu0 0.0
    %1685 = vmatprep.subr.mxu0 0.0
    %1686 = vmatpush1.msra.mxu0 0.0
    %1687 = vmatprep.subr.mxu0 0.0
    %1688 = vmatpush1.msra.mxu0 0.0
    %1689 = vmatprep.subr.mxu0 0.0
    %1690 = vmatpush1.msra.mxu0 0.0
    %1691 = vmatprep.subr.mxu0 0.0
    %1692 = vmatpush1.msra.mxu0 0.0
    %1693 = vmatprep.subr.mxu0 0.0
    %1694 = vmatpush1.msra.mxu0 0.0
    %1695 = vmatprep.subr.mxu0 0.0
    %1696 = vmatpush1.msra.mxu0 0.0
    %1697 = vmatprep.subr.mxu0 0.0
    %1698 = vmatpush1.msra.mxu0 0.0
    %1699 = vmatprep.subr.mxu0 0.0
    %1700 = vmatpush1.msra.mxu0 0.0
    %1701 = vmatprep.mubr.f32.mxu0 0.0
    %1702 = vmatmul.mubr.f32.gmra.mrb[0].mxu0 %v1632
    %v1703 = vpop.f32.mrb[0].mxu0
    %v1704 = vadd.f32 %v1629, %v1703
    %v1705 = vpop.f32.mrb[0].mxu0
    %1706 = vmatprep.mubr.f32.mxu0 0.0
    %1707 = vmatmul.mubr.f32.gmra.mrb[0].mxu0 %v1635
    %v1708 = vpop.f32.mrb[0].mxu0
    %v1709 = vadd.f32 %v1629, %v1708
    %v1710 = vpop.f32.mrb[0].mxu0
    %1711 = vdwg.mxu0
    %v1712 = vmax.f32 %v1704, 0.0
    %v1713 = vmax.f32 %v1709, 0.0
    %v1714 = vld [vmem:[%s75] sm:$0xff]
    %v1715 = vld [vmem:[%s75 + $0x8] sm:$0xff]
    %v1716 = vld [vmem:[%s75 + $0x10] sm:$0xff]
    %v1717 = vld [vmem:[%s75 + $0x18] sm:$0xff]
    %v1718 = vld [vmem:[%s75 + $0x20] sm:$0xff]
    %v1719 = vld [vmem:[%s75 + $0x28] sm:$0xff]
    %v1720 = vld [vmem:[%s75 + $0x30] sm:$0xff]
    %v1721 = vld [vmem:[%s75 + $0x38] sm:$0xff]
    %v1722 = vld [vmem:[#allocation28] sm:$0x1]
    %v1724 = vlaneseq
    %v1725 = vshrl.u32 %v1724, 7
    %v1726 = vsub.s32 0, %v1725
    %v1727 = vrot.slane %v1722, %v1726
    %vm1729 = vcmask 523264
    %v1731 = vsel %vm1729, %v1712, 0
    %v1734 = vsel %vm1729, %v1713, 0
    %1736 = vmatprep.subr.mxu0 0.0
    %1737 = vmatpush1.msra.mxu0 %v1714
    %1738 = vmatprep.subr.mxu0 0.0
    %1739 = vmatpush1.msra.mxu0 %v1715
    %1740 = vmatprep.subr.mxu0 0.0
    %1741 = vmatpush1.msra.mxu0 %v1716
    %1742 = vmatprep.subr.mxu0 0.0
    %1743 = vmatpush1.msra.mxu0 %v1717
    %1744 = vmatprep.subr.mxu0 0.0
    %1745 = vmatpush1.msra.mxu0 %v1718
    %1746 = vmatprep.subr.mxu0 0.0
    %1747 = vmatpush1.msra.mxu0 %v1719
    %1748 = vmatprep.subr.mxu0 0.0
    %1749 = vmatpush1.msra.mxu0 %v1720
    %1750 = vmatprep.subr.mxu0 0.0
    %1751 = vmatpush1.msra.mxu0 %v1721
    %1752 = vmatprep.subr.mxu0 0.0
    %1753 = vmatpush1.msra.mxu0 0.0
    %1754 = vmatprep.subr.mxu0 0.0
    %1755 = vmatpush1.msra.mxu0 0.0
    %1756 = vmatprep.subr.mxu0 0.0
    %1757 = vmatpush1.msra.mxu0 0.0
    %1758 = vmatprep.subr.mxu0 0.0
    %1759 = vmatpush1.msra.mxu0 0.0
    %1760 = vmatprep.subr.mxu0 0.0
    %1761 = vmatpush1.msra.mxu0 0.0
    %1762 = vmatprep.subr.mxu0 0.0
    %1763 = vmatpush1.msra.mxu0 0.0
    %1764 = vmatprep.subr.mxu0 0.0
    %1765 = vmatpush1.msra.mxu0 0.0
    %1766 = vmatprep.subr.mxu0 0.0
    %1767 = vmatpush1.msra.mxu0 0.0
    %1768 = vmatprep.subr.mxu0 0.0
    %1769 = vmatpush1.msra.mxu0 0.0
    %1770 = vmatprep.subr.mxu0 0.0
    %1771 = vmatpush1.msra.mxu0 0.0
    %1772 = vmatprep.subr.mxu0 0.0
    %1773 = vmatpush1.msra.mxu0 0.0
    %1774 = vmatprep.subr.mxu0 0.0
    %1775 = vmatpush1.msra.mxu0 0.0
    %1776 = vmatprep.subr.mxu0 0.0
    %1777 = vmatpush1.msra.mxu0 0.0
    %1778 = vmatprep.subr.mxu0 0.0
    %1779 = vmatpush1.msra.mxu0 0.0
    %1780 = vmatprep.subr.mxu0 0.0
    %1781 = vmatpush1.msra.mxu0 0.0
    %1782 = vmatprep.subr.mxu0 0.0
    %1783 = vmatpush1.msra.mxu0 0.0
    %1784 = vmatprep.subr.mxu0 0.0
    %1785 = vmatpush1.msra.mxu0 0.0
    %1786 = vmatprep.subr.mxu0 0.0
    %1787 = vmatpush1.msra.mxu0 0.0
    %1788 = vmatprep.subr.mxu0 0.0
    %1789 = vmatpush1.msra.mxu0 0.0
    %1790 = vmatprep.subr.mxu0 0.0
    %1791 = vmatpush1.msra.mxu0 0.0
    %1792 = vmatprep.subr.mxu0 0.0
    %1793 = vmatpush1.msra.mxu0 0.0
    %1794 = vmatprep.subr.mxu0 0.0
    %1795 = vmatpush1.msra.mxu0 0.0
    %1796 = vmatprep.subr.mxu0 0.0
    %1797 = vmatpush1.msra.mxu0 0.0
    %1798 = vmatprep.subr.mxu0 0.0
    %1799 = vmatpush1.msra.mxu0 0.0
    %1800 = vmatprep.mubr.f32.mxu0 0.0
    %1801 = vmatmul.mubr.f32.gmra.mrb[0].mxu0 %v1731
    %v1802 = vpop.f32.mrb[0].mxu0
    %v1803 = vadd.f32 %v1727, %v1802
    %v1804 = vpop.f32.mrb[0].mxu0
    %1805 = vmatprep.mubr.f32.mxu0 0.0
    %1806 = vmatmul.mubr.f32.gmra.mrb[0].mxu0 %v1734
    %v1807 = vpop.f32.mrb[0].mxu0
    %v1808 = vadd.f32 %v1727, %v1807
    %v1809 = vpop.f32.mrb[0].mxu0
    %1810 = vdwg.mxu0
    %v1811 = vadd.f32 %v1618, %v1803
    %v1812 = vadd.f32 %v1619, %v1808
    %v1813 = vld [vmem:[#allocation34] sm:$0x1]
    %v1814 = vld [vmem:[#allocation33] sm:$0x1]
    %v1815 = vsel %vm642, %v1811, 0.0
    %1816 = vadd.xlane.f32.xlu0 %v1815
    %v1817 = vpop.xlane.xlu0 %1816
    %v1818 = vsel %vm642, %v1812, 0.0
    %1819 = vadd.xlane.f32.xlu0 %v1818
    %v1820 = vpop.xlane.xlu0 %1819
    %v1821 = vmul.f32 %v1817, %v1583
    %v1822 = vmul.f32 %v1820, %v1583
    %v1823 = vsub.f32 %v1811, %v1821
    %v1824 = vsub.f32 %v1812, %v1822
    %v1825 = vmul.f32 %v1823, %v1823
    %v1826 = vmul.f32 %v1824, %v1824
    %v1827 = vsel %vm642, %v1825, 0.0
    %1828 = vadd.xlane.f32.xlu0 %v1827
    %v1829 = vpop.xlane.xlu0 %1828
    %v1830 = vsel %vm642, %v1826, 0.0
    %1831 = vadd.xlane.f32.xlu0 %v1830
    %v1832 = vpop.xlane.xlu0 %1831
    %v1833 = vmul.f32 %v1829, %v1583
    %v1834 = vmul.f32 %v1832, %v1583
    %v1835 = vadd.f32 %v1833, 1e-05
    %v1836 = vadd.f32 %v1834, 1e-05
    %v1837 = vrsqrt.pop %v1835
    %v1838 = vrsqrt.pop %v1836
    %v1839 = vmul.f32 %v1823, %v1837
    %v1840 = vmul.f32 %v1824, %v1838
    %v1842 = vlaneseq
    %v1843 = vshrl.u32 %v1842, 7
    %v1844 = vsub.s32 0, %v1843
    %v1845 = vrot.slane %v1813, %v1844
    %v1847 = vmul.f32 %v1839, %v1845
    %v1848 = vmul.f32 %v1840, %v1845
    %v1850 = vlaneseq
    %v1851 = vshrl.u32 %v1850, 7
    %v1852 = vsub.s32 0, %v1851
    %v1853 = vrot.slane %v1814, %v1852
    %v1855 = vadd.f32 %v1847, %v1853
    %v1856 = vadd.f32 %v1848, %v1853
    %v1857 = vld [vmem:[#allocation42] sm:$0x1]
    %v1858 = vld [vmem:[#allocation40] sm:$0x1]
    %v1859 = vsel %vm642, %v1855, 0.0
    %1860 = vadd.xlane.f32.xlu0 %v1859
    %v1861 = vpop.xlane.xlu0 %1860
    %v1862 = vsel %vm642, %v1856, 0.0
    %1863 = vadd.xlane.f32.xlu0 %v1862
    %v1864 = vpop.xlane.xlu0 %1863
    %v1865 = vmul.f32 %v1861, %v1583
    %v1866 = vmul.f32 %v1864, %v1583
    %v1867 = vsub.f32 %v1855, %v1865
    %v1868 = vsub.f32 %v1856, %v1866
    %v1869 = vmul.f32 %v1867, %v1867
    %v1870 = vmul.f32 %v1868, %v1868
    %v1871 = vsel %vm642, %v1869, 0.0
    %1872 = vadd.xlane.f32.xlu0 %v1871
    %v1873 = vpop.xlane.xlu0 %1872
    %v1874 = vsel %vm642, %v1870, 0.0
    %1875 = vadd.xlane.f32.xlu0 %v1874
    %v1876 = vpop.xlane.xlu0 %1875
    %v1877 = vmul.f32 %v1873, %v1583
    %v1878 = vmul.f32 %v1876, %v1583
    %v1879 = vadd.f32 %v1877, 1e-05
    %v1880 = vadd.f32 %v1878, 1e-05
    %v1881 = vrsqrt.pop %v1879
    %v1882 = vrsqrt.pop %v1880
    %v1883 = vmul.f32 %v1867, %v1881
    %v1884 = vmul.f32 %v1868, %v1882
    %v1886 = vlaneseq
    %v1887 = vshrl.u32 %v1886, 7
    %v1888 = vsub.s32 0, %v1887
    %v1889 = vrot.slane %v1857, %v1888
    %v1891 = vmul.f32 %v1883, %v1889
    %v1892 = vmul.f32 %v1884, %v1889
    %v1894 = vlaneseq
    %v1895 = vshrl.u32 %v1894, 7
    %v1896 = vsub.s32 0, %v1895
    %v1897 = vrot.slane %v1858, %v1896
    %v1899 = vadd.f32 %v1891, %v1897
    %v1900 = vadd.f32 %v1892, %v1897
    %v1901 = vld [vmem:[%s93] sm:$0xff]
    %v1902 = vld [vmem:[%s93 + $0x8] sm:$0xff]
    %1903 = vset.pattern.permute.xlu0 0
    %1904 = vperm.xlu0 %1903, %v1901
    %v1905 = vpop.permute.xlu0 %1904
    %1906 = vset.pattern.permute.xlu0 0
    %1907 = vperm.xlu0 %1906, %v1902
    %v1908 = vpop.permute.xlu0 %1907
    %vm1909 = vcmp.eq.s32.totalorder %v1905, %v533
    %vm1910 = vcmp.eq.s32.totalorder %v1908, %v533
    %v1911 = vsel %vm1909, 1, 0
    %v1912 = vsel %vm1910, 1, 0
    %v1913 = vcvt.s32.f32 %v1911
    %v1914 = vcvt.s32.f32 %v1912
    %v1915 = vld [vmem:[%s91] sm:$0xff]
    %v1916 = vld [vmem:[%s91 + $0x8] sm:$0xff]
    %v1918 = vsel %vm549, %v1913, 0
    %v1921 = vsel %vm549, %v1914, 0
    %1923 = vmatprep.subr.mxu0 0.0
    %1924 = vmatpush1.msra.mxu0 %v1915
    %1925 = vmatprep.subr.mxu0 0.0
    %1926 = vmatpush1.msra.mxu0 %v1916
    %1927 = vmatprep.subr.mxu0 0.0
    %1928 = vmatpush1.msra.mxu0 0.0
    %1929 = vmatprep.subr.mxu0 0.0
    %1930 = vmatpush1.msra.mxu0 0.0
    %1931 = vmatprep.subr.mxu0 0.0
    %1932 = vmatpush1.msra.mxu0 0.0
    %1933 = vmatprep.subr.mxu0 0.0
    %1934 = vmatpush1.msra.mxu0 0.0
    %1935 = vmatprep.subr.mxu0 0.0
    %1936 = vmatpush1.msra.mxu0 0.0
    %1937 = vmatprep.subr.mxu0 0.0
    %1938 = vmatpush1.msra.mxu0 0.0
    %1939 = vmatprep.subr.mxu0 0.0
    %1940 = vmatpush1.msra.mxu0 0.0
    %1941 = vmatprep.subr.mxu0 0.0
    %1942 = vmatpush1.msra.mxu0 0.0
    %1943 = vmatprep.subr.mxu0 0.0
    %1944 = vmatpush1.msra.mxu0 0.0
    %1945 = vmatprep.subr.mxu0 0.0
    %1946 = vmatpush1.msra.mxu0 0.0
    %1947 = vmatprep.subr.mxu0 0.0
    %1948 = vmatpush1.msra.mxu0 0.0
    %1949 = vmatprep.subr.mxu0 0.0
    %1950 = vmatpush1.msra.mxu0 0.0
    %1951 = vmatprep.subr.mxu0 0.0
    %1952 = vmatpush1.msra.mxu0 0.0
    %1953 = vmatprep.subr.mxu0 0.0
    %1954 = vmatpush1.msra.mxu0 0.0
    %1955 = vmatprep.subr.mxu0 0.0
    %1956 = vmatpush1.msra.mxu0 0.0
    %1957 = vmatprep.subr.mxu0 0.0
    %1958 = vmatpush1.msra.mxu0 0.0
    %1959 = vmatprep.subr.mxu0 0.0
    %1960 = vmatpush1.msra.mxu0 0.0
    %1961 = vmatprep.subr.mxu0 0.0
    %1962 = vmatpush1.msra.mxu0 0.0
    %1963 = vmatprep.subr.mxu0 0.0
    %1964 = vmatpush1.msra.mxu0 0.0
    %1965 = vmatprep.subr.mxu0 0.0
    %1966 = vmatpush1.msra.mxu0 0.0
    %1967 = vmatprep.subr.mxu0 0.0
    %1968 = vmatpush1.msra.mxu0 0.0
    %1969 = vmatprep.subr.mxu0 0.0
    %1970 = vmatpush1.msra.mxu0 0.0
    %1971 = vmatprep.subr.mxu0 0.0
    %1972 = vmatpush1.msra.mxu0 0.0
    %1973 = vmatprep.subr.mxu0 0.0
    %1974 = vmatpush1.msra.mxu0 0.0
    %1975 = vmatprep.subr.mxu0 0.0
    %1976 = vmatpush1.msra.mxu0 0.0
    %1977 = vmatprep.subr.mxu0 0.0
    %1978 = vmatpush1.msra.mxu0 0.0
    %1979 = vmatprep.subr.mxu0 0.0
    %1980 = vmatpush1.msra.mxu0 0.0
    %1981 = vmatprep.subr.mxu0 0.0
    %1982 = vmatpush1.msra.mxu0 0.0
    %1983 = vmatprep.subr.mxu0 0.0
    %1984 = vmatpush1.msra.mxu0 0.0
    %1985 = vmatprep.subr.mxu0 0.0
    %1986 = vmatpush1.msra.mxu0 0.0
    %1987 = vmatprep.mubr.f32.mxu0 0.0
    %1988 = vmatmul.mubr.f32.gmra.mrb[0].mxu0 %v1918
    %v1989 = vpop.f32.mrb[0].mxu0
    %v1990 = vadd.f32 %v548, %v1989
    %v1991 = vpop.f32.mrb[0].mxu0
    %1992 = vmatprep.mubr.f32.mxu0 0.0
    %1993 = vmatmul.mubr.f32.gmra.mrb[0].mxu0 %v1921
    %v1994 = vpop.f32.mrb[0].mxu0
    %v1995 = vadd.f32 %v548, %v1994
    %v1996 = vpop.f32.mrb[0].mxu0
    %1997 = vdwg.mxu0
    %v1998 = vld [vmem:[%s39] sm:$0xff]
    %v1999 = vld [vmem:[%s39 + $0x8] sm:$0xff]
    %v2000 = vld [vmem:[%s39 + $0x10] sm:$0xff]
    %v2001 = vld [vmem:[%s39 + $0x18] sm:$0xff]
    %v2002 = vld [vmem:[#allocation22] sm:$0x1]
    %v2004 = vlaneseq
    %v2005 = vshrl.u32 %v2004, 7
    %v2006 = vsub.s32 0, %v2005
    %v2007 = vrot.slane %v2002, %v2006
    %v2010 = vsel %vm642, %v1990, 0
    %v2013 = vsel %vm642, %v1995, 0
    %2015 = vmatprep.subr.mxu0 0.0
    %2016 = vmatpush1.msra.mxu0 %v1998
    %2017 = vmatprep.subr.mxu0 0.0
    %2018 = vmatpush1.msra.mxu0 %v1999
    %2019 = vmatprep.subr.mxu0 0.0
    %2020 = vmatpush1.msra.mxu0 %v2000
    %2021 = vmatprep.subr.mxu0 0.0
    %2022 = vmatpush1.msra.mxu0 %v2001
    %2023 = vmatprep.subr.mxu0 0.0
    %2024 = vmatpush1.msra.mxu0 0.0
    %2025 = vmatprep.subr.mxu0 0.0
    %2026 = vmatpush1.msra.mxu0 0.0
    %2027 = vmatprep.subr.mxu0 0.0
    %2028 = vmatpush1.msra.mxu0 0.0
    %2029 = vmatprep.subr.mxu0 0.0
    %2030 = vmatpush1.msra.mxu0 0.0
    %2031 = vmatprep.subr.mxu0 0.0
    %2032 = vmatpush1.msra.mxu0 0.0
    %2033 = vmatprep.subr.mxu0 0.0
    %2034 = vmatpush1.msra.mxu0 0.0
    %2035 = vmatprep.subr.mxu0 0.0
    %2036 = vmatpush1.msra.mxu0 0.0
    %2037 = vmatprep.subr.mxu0 0.0
    %2038 = vmatpush1.msra.mxu0 0.0
    %2039 = vmatprep.subr.mxu0 0.0
    %2040 = vmatpush1.msra.mxu0 0.0
    %2041 = vmatprep.subr.mxu0 0.0
    %2042 = vmatpush1.msra.mxu0 0.0
    %2043 = vmatprep.subr.mxu0 0.0
    %2044 = vmatpush1.msra.mxu0 0.0
    %2045 = vmatprep.subr.mxu0 0.0
    %2046 = vmatpush1.msra.mxu0 0.0
    %2047 = vmatprep.subr.mxu0 0.0
    %2048 = vmatpush1.msra.mxu0 0.0
    %2049 = vmatprep.subr.mxu0 0.0
    %2050 = vmatpush1.msra.mxu0 0.0
    %2051 = vmatprep.subr.mxu0 0.0
    %2052 = vmatpush1.msra.mxu0 0.0
    %2053 = vmatprep.subr.mxu0 0.0
    %2054 = vmatpush1.msra.mxu0 0.0
    %2055 = vmatprep.subr.mxu0 0.0
    %2056 = vmatpush1.msra.mxu0 0.0
    %2057 = vmatprep.subr.mxu0 0.0
    %2058 = vmatpush1.msra.mxu0 0.0
    %2059 = vmatprep.subr.mxu0 0.0
    %2060 = vmatpush1.msra.mxu0 0.0
    %2061 = vmatprep.subr.mxu0 0.0
    %2062 = vmatpush1.msra.mxu0 0.0
    %2063 = vmatprep.subr.mxu0 0.0
    %2064 = vmatpush1.msra.mxu0 0.0
    %2065 = vmatprep.subr.mxu0 0.0
    %2066 = vmatpush1.msra.mxu0 0.0
    %2067 = vmatprep.subr.mxu0 0.0
    %2068 = vmatpush1.msra.mxu0 0.0
    %2069 = vmatprep.subr.mxu0 0.0
    %2070 = vmatpush1.msra.mxu0 0.0
    %2071 = vmatprep.subr.mxu0 0.0
    %2072 = vmatpush1.msra.mxu0 0.0
    %2073 = vmatprep.subr.mxu0 0.0
    %2074 = vmatpush1.msra.mxu0 0.0
    %2075 = vmatprep.subr.mxu0 0.0
    %2076 = vmatpush1.msra.mxu0 0.0
    %2077 = vmatprep.subr.mxu0 0.0
    %2078 = vmatpush1.msra.mxu0 0.0
    %2079 = vmatprep.mubr.f32.mxu0 0.0
    %2080 = vmatmul.mubr.f32.gmra.mrb[0].mxu0 %v2010
    %v2081 = vpop.f32.mrb[0].mxu0
    %v2082 = vadd.f32 %v2007, %v2081
    %v2083 = vpop.f32.mrb[0].mxu0
    %2084 = vmatprep.mubr.f32.mxu0 0.0
    %2085 = vmatmul.mubr.f32.gmra.mrb[0].mxu0 %v2013
    %v2086 = vpop.f32.mrb[0].mxu0
    %v2087 = vadd.f32 %v2007, %v2086
    %v2088 = vpop.f32.mrb[0].mxu0
    %2089 = vdwg.mxu0
    %v2090 = vld [vmem:[%s35] sm:$0xff]
    %v2091 = vld [vmem:[%s35 + $0x8] sm:$0xff]
    %v2092 = vld [vmem:[%s35 + $0x10] sm:$0xff]
    %v2093 = vld [vmem:[%s35 + $0x18] sm:$0xff]
    %v2094 = vld [vmem:[#allocation19] sm:$0x1]
    %v2096 = vlaneseq
    %v2097 = vshrl.u32 %v2096, 7
    %v2098 = vsub.s32 0, %v2097
    %v2099 = vrot.slane %v2094, %v2098
    %2101 = vmatprep.subr.mxu0 0.0
    %2102 = vmatpush1.msra.mxu0 %v2090
    %2103 = vmatprep.subr.mxu0 0.0
    %2104 = vmatpush1.msra.mxu0 %v2091
    %2105 = vmatprep.subr.mxu0 0.0
    %2106 = vmatpush1.msra.mxu0 %v2092
    %2107 = vmatprep.subr.mxu0 0.0
    %2108 = vmatpush1.msra.mxu0 %v2093
    %2109 = vmatprep.subr.mxu0 0.0
    %2110 = vmatpush1.msra.mxu0 0.0
    %2111 = vmatprep.subr.mxu0 0.0
    %2112 = vmatpush1.msra.mxu0 0.0
    %2113 = vmatprep.subr.mxu0 0.0
    %2114 = vmatpush1.msra.mxu0 0.0
    %2115 = vmatprep.subr.mxu0 0.0
    %2116 = vmatpush1.msra.mxu0 0.0
    %2117 = vmatprep.subr.mxu0 0.0
    %2118 = vmatpush1.msra.mxu0 0.0
    %2119 = vmatprep.subr.mxu0 0.0
    %2120 = vmatpush1.msra.mxu0 0.0
    %2121 = vmatprep.subr.mxu0 0.0
    %2122 = vmatpush1.msra.mxu0 0.0
    %2123 = vmatprep.subr.mxu0 0.0
    %2124 = vmatpush1.msra.mxu0 0.0
    %2125 = vmatprep.subr.mxu0 0.0
    %2126 = vmatpush1.msra.mxu0 0.0
    %2127 = vmatprep.subr.mxu0 0.0
    %2128 = vmatpush1.msra.mxu0 0.0
    %2129 = vmatprep.subr.mxu0 0.0
    %2130 = vmatpush1.msra.mxu0 0.0
    %2131 = vmatprep.subr.mxu0 0.0
    %2132 = vmatpush1.msra.mxu0 0.0
    %2133 = vmatprep.subr.mxu0 0.0
    %2134 = vmatpush1.msra.mxu0 0.0
    %2135 = vmatprep.subr.mxu0 0.0
    %2136 = vmatpush1.msra.mxu0 0.0
    %2137 = vmatprep.subr.mxu0 0.0
    %2138 = vmatpush1.msra.mxu0 0.0
    %2139 = vmatprep.subr.mxu0 0.0
    %2140 = vmatpush1.msra.mxu0 0.0
    %2141 = vmatprep.subr.mxu0 0.0
    %2142 = vmatpush1.msra.mxu0 0.0
    %2143 = vmatprep.subr.mxu0 0.0
    %2144 = vmatpush1.msra.mxu0 0.0
    %2145 = vmatprep.subr.mxu0 0.0
    %2146 = vmatpush1.msra.mxu0 0.0
    %2147 = vmatprep.subr.mxu0 0.0
    %2148 = vmatpush1.msra.mxu0 0.0
    %2149 = vmatprep.subr.mxu0 0.0
    %2150 = vmatpush1.msra.mxu0 0.0
    %2151 = vmatprep.subr.mxu0 0.0
    %2152 = vmatpush1.msra.mxu0 0.0
    %2153 = vmatprep.subr.mxu0 0.0
    %2154 = vmatpush1.msra.mxu0 0.0
    %2155 = vmatprep.subr.mxu0 0.0
    %2156 = vmatpush1.msra.mxu0 0.0
    %2157 = vmatprep.subr.mxu0 0.0
    %2158 = vmatpush1.msra.mxu0 0.0
    %2159 = vmatprep.subr.mxu0 0.0
    %2160 = vmatpush1.msra.mxu0 0.0
    %2161 = vmatprep.subr.mxu0 0.0
    %2162 = vmatpush1.msra.mxu0 0.0
    %2163 = vmatprep.subr.mxu0 0.0
    %2164 = vmatpush1.msra.mxu0 0.0
    %2165 = vmatprep.mubr.f32.mxu0 0.0
    %2166 = vmatmul.mubr.f32.gmra.mrb[0].mxu0 %v2010
    %v2167 = vpop.f32.mrb[0].mxu0
    %v2168 = vadd.f32 %v2099, %v2167
    %v2169 = vpop.f32.mrb[0].mxu0
    %2170 = vmatprep.mubr.f32.mxu0 0.0
    %2171 = vmatmul.mubr.f32.gmra.mrb[0].mxu0 %v2013
    %v2172 = vpop.f32.mrb[0].mxu0
    %v2173 = vadd.f32 %v2099, %v2172
    %v2174 = vpop.f32.mrb[0].mxu0
    %2175 = vdwg.mxu0
    %v2177 = vsel %vm549, %v2082, 0
    %v2180 = vsel %vm549, %v2168, 0
    %2182 = vmatprep.subr.mxu0 0.0
    %2183 = vmatpush1.xpose.msra.mxu0 %v2180
    %2184 = vmatprep.subr.mxu0 0.0
    %2185 = vmatpush1.xpose.msra.mxu0 0.0
    %2186 = vmatprep.subr.mxu0 0.0
    %2187 = vmatpush1.xpose.msra.mxu0 0.0
    %2188 = vmatprep.subr.mxu0 0.0
    %2189 = vmatpush1.xpose.msra.mxu0 0.0
    %2190 = vmatprep.subr.mxu0 0.0
    %2191 = vmatpush1.xpose.msra.mxu0 0.0
    %2192 = vmatprep.subr.mxu0 0.0
    %2193 = vmatpush1.xpose.msra.mxu0 0.0
    %2194 = vmatprep.subr.mxu0 0.0
    %2195 = vmatpush1.xpose.msra.mxu0 0.0
    %2196 = vmatprep.subr.mxu0 0.0
    %2197 = vmatpush1.xpose.msra.mxu0 0.0
    %2198 = vmatprep.subr.mxu0 0.0
    %2199 = vmatpush1.xpose.msra.mxu0 0.0
    %2200 = vmatprep.subr.mxu0 0.0
    %2201 = vmatpush1.xpose.msra.mxu0 0.0
    %2202 = vmatprep.subr.mxu0 0.0
    %2203 = vmatpush1.xpose.msra.mxu0 0.0
    %2204 = vmatprep.subr.mxu0 0.0
    %2205 = vmatpush1.xpose.msra.mxu0 0.0
    %2206 = vmatprep.subr.mxu0 0.0
    %2207 = vmatpush1.xpose.msra.mxu0 0.0
    %2208 = vmatprep.subr.mxu0 0.0
    %2209 = vmatpush1.xpose.msra.mxu0 0.0
    %2210 = vmatprep.subr.mxu0 0.0
    %2211 = vmatpush1.xpose.msra.mxu0 0.0
    %2212 = vmatprep.subr.mxu0 0.0
    %2213 = vmatpush1.xpose.msra.mxu0 0.0
    %2214 = vmatprep.subr.mxu0 0.0
    %2215 = vmatpush1.xpose.msra.mxu0 0.0
    %2216 = vmatprep.subr.mxu0 0.0
    %2217 = vmatpush1.xpose.msra.mxu0 0.0
    %2218 = vmatprep.subr.mxu0 0.0
    %2219 = vmatpush1.xpose.msra.mxu0 0.0
    %2220 = vmatprep.subr.mxu0 0.0
    %2221 = vmatpush1.xpose.msra.mxu0 0.0
    %2222 = vmatprep.subr.mxu0 0.0
    %2223 = vmatpush1.xpose.msra.mxu0 0.0
    %2224 = vmatprep.subr.mxu0 0.0
    %2225 = vmatpush1.xpose.msra.mxu0 0.0
    %2226 = vmatprep.subr.mxu0 0.0
    %2227 = vmatpush1.xpose.msra.mxu0 0.0
    %2228 = vmatprep.subr.mxu0 0.0
    %2229 = vmatpush1.xpose.msra.mxu0 0.0
    %2230 = vmatprep.subr.mxu0 0.0
    %2231 = vmatpush1.xpose.msra.mxu0 0.0
    %2232 = vmatprep.subr.mxu0 0.0
    %2233 = vmatpush1.xpose.msra.mxu0 0.0
    %2234 = vmatprep.subr.mxu0 0.0
    %2235 = vmatpush1.xpose.msra.mxu0 0.0
    %2236 = vmatprep.subr.mxu0 0.0
    %2237 = vmatpush1.xpose.msra.mxu0 0.0
    %2238 = vmatprep.subr.mxu0 0.0
    %2239 = vmatpush1.xpose.msra.mxu0 0.0
    %2240 = vmatprep.subr.mxu0 0.0
    %2241 = vmatpush1.xpose.msra.mxu0 0.0
    %2242 = vmatprep.subr.mxu0 0.0
    %2243 = vmatpush1.xpose.msra.mxu0 0.0
    %2244 = vmatprep.subr.mxu0 0.0
    %2245 = vmatpush1.xpose.msra.mxu0 0.0
    %2246 = vmatprep.mubr.f32.mxu0 0.0
    %2247 = vmatmul.mubr.f32.gmra.mrb[0].mxu0 %v2177
    %v2248 = vpop.f32.mrb[0].mxu0
    %v2249 = vadd.f32 0.0, %v2248
    %v2250 = vpop.f32.mrb[0].mxu0
    %2251 = vdwg.mxu0
    %v2252 = vmul.f32 %v2249, 0.25
    %v2253 = vsel %vm887, %v2252, -inf
    %2254 = vmax.xlane.f32.xlu0 %v2253
    %v2255 = vpop.xlane.xlu0 %2254
    %v2256 = vsub.f32 %v2252, %v2255
    %v2257 = vmul.f32 %v2256, 1.442695
    %v2258 = vpow.pop %v2257
    %v2259 = vsel %vm887, %v2258, 0.0
    %2260 = vadd.xlane.f32.xlu0 %v2259
    %v2261 = vpop.xlane.xlu0 %2260
    %v2262 = vrcp.pop %v2261
    %2263 = vrot.lane.b32.xlu0 %v2168, 96
    %v2264 = vpop.permute.xlu0 %2263
    %v2267 = vsel %vm887, %v2258, 0
    %2269 = vmatprep.subr.mxu0 0.0
    %2270 = vmatpush1.msra.mxu0 %v2264
    %2271 = vmatprep.subr.mxu0 0.0
    %2272 = vmatpush1.msra.mxu0 0.0
    %2273 = vmatprep.subr.mxu0 0.0
    %2274 = vmatpush1.msra.mxu0 0.0
    %2275 = vmatprep.subr.mxu0 0.0
    %2276 = vmatpush1.msra.mxu0 0.0
    %2277 = vmatprep.subr.mxu0 0.0
    %2278 = vmatpush1.msra.mxu0 0.0
    %2279 = vmatprep.subr.mxu0 0.0
    %2280 = vmatpush1.msra.mxu0 0.0
    %2281 = vmatprep.subr.mxu0 0.0
    %2282 = vmatpush1.msra.mxu0 0.0
    %2283 = vmatprep.subr.mxu0 0.0
    %2284 = vmatpush1.msra.mxu0 0.0
    %2285 = vmatprep.subr.mxu0 0.0
    %2286 = vmatpush1.msra.mxu0 0.0
    %2287 = vmatprep.subr.mxu0 0.0
    %2288 = vmatpush1.msra.mxu0 0.0
    %2289 = vmatprep.subr.mxu0 0.0
    %2290 = vmatpush1.msra.mxu0 0.0
    %2291 = vmatprep.subr.mxu0 0.0
    %2292 = vmatpush1.msra.mxu0 0.0
    %2293 = vmatprep.subr.mxu0 0.0
    %2294 = vmatpush1.msra.mxu0 0.0
    %2295 = vmatprep.subr.mxu0 0.0
    %2296 = vmatpush1.msra.mxu0 0.0
    %2297 = vmatprep.subr.mxu0 0.0
    %2298 = vmatpush1.msra.mxu0 0.0
    %2299 = vmatprep.subr.mxu0 0.0
    %2300 = vmatpush1.msra.mxu0 0.0
    %2301 = vmatprep.subr.mxu0 0.0
    %2302 = vmatpush1.msra.mxu0 0.0
    %2303 = vmatprep.subr.mxu0 0.0
    %2304 = vmatpush1.msra.mxu0 0.0
    %2305 = vmatprep.subr.mxu0 0.0
    %2306 = vmatpush1.msra.mxu0 0.0
    %2307 = vmatprep.subr.mxu0 0.0
    %2308 = vmatpush1.msra.mxu0 0.0
    %2309 = vmatprep.subr.mxu0 0.0
    %2310 = vmatpush1.msra.mxu0 0.0
    %2311 = vmatprep.subr.mxu0 0.0
    %2312 = vmatpush1.msra.mxu0 0.0
    %2313 = vmatprep.subr.mxu0 0.0
    %2314 = vmatpush1.msra.mxu0 0.0
    %2315 = vmatprep.subr.mxu0 0.0
    %2316 = vmatpush1.msra.mxu0 0.0
    %2317 = vmatprep.subr.mxu0 0.0
    %2318 = vmatpush1.msra.mxu0 0.0
    %2319 = vmatprep.subr.mxu0 0.0
    %2320 = vmatpush1.msra.mxu0 0.0
    %2321 = vmatprep.subr.mxu0 0.0
    %2322 = vmatpush1.msra.mxu0 0.0
    %2323 = vmatprep.subr.mxu0 0.0
    %2324 = vmatpush1.msra.mxu0 0.0
    %2325 = vmatprep.subr.mxu0 0.0
    %2326 = vmatpush1.msra.mxu0 0.0
    %2327 = vmatprep.subr.mxu0 0.0
    %2328 = vmatpush1.msra.mxu0 0.0
    %2329 = vmatprep.subr.mxu0 0.0
    %2330 = vmatpush1.msra.mxu0 0.0
    %2331 = vmatprep.subr.mxu0 0.0
    %2332 = vmatpush1.msra.mxu0 0.0
    %2333 = vmatprep.mubr.f32.mxu0 0.0
    %2334 = vmatmul.mubr.f32.gmra.mrb[0].mxu0 %v2267
    %v2335 = vpop.f32.mrb[0].mxu0
    %v2336 = vadd.f32 0.0, %v2335
    %v2337 = vpop.f32.mrb[0].mxu0
    %2338 = vdwg.mxu0
    %v2339 = vmul.f32 %v2336, %v2262
    %2340 = vrot.lane.b32.xlu0 %v2082, 112
    %v2341 = vpop.permute.xlu0 %2340
    %2342 = vrot.lane.b32.xlu0 %v2168, 112
    %v2343 = vpop.permute.xlu0 %2342
    %v2344 = vsel %vm549, %v2341, 0
    %v2346 = vsel %vm549, %v2343, 0
    %2348 = vmatprep.subr.mxu0 0.0
    %2349 = vmatpush1.xpose.msra.mxu0 %v2346
    %2350 = vmatprep.subr.mxu0 0.0
    %2351 = vmatpush1.xpose.msra.mxu0 0.0
    %2352 = vmatprep.subr.mxu0 0.0
    %2353 = vmatpush1.xpose.msra.mxu0 0.0
    %2354 = vmatprep.subr.mxu0 0.0
    %2355 = vmatpush1.xpose.msra.mxu0 0.0
    %2356 = vmatprep.subr.mxu0 0.0
    %2357 = vmatpush1.xpose.msra.mxu0 0.0
    %2358 = vmatprep.subr.mxu0 0.0
    %2359 = vmatpush1.xpose.msra.mxu0 0.0
    %2360 = vmatprep.subr.mxu0 0.0
    %2361 = vmatpush1.xpose.msra.mxu0 0.0
    %2362 = vmatprep.subr.mxu0 0.0
    %2363 = vmatpush1.xpose.msra.mxu0 0.0
    %2364 = vmatprep.subr.mxu0 0.0
    %2365 = vmatpush1.xpose.msra.mxu0 0.0
    %2366 = vmatprep.subr.mxu0 0.0
    %2367 = vmatpush1.xpose.msra.mxu0 0.0
    %2368 = vmatprep.subr.mxu0 0.0
    %2369 = vmatpush1.xpose.msra.mxu0 0.0
    %2370 = vmatprep.subr.mxu0 0.0
    %2371 = vmatpush1.xpose.msra.mxu0 0.0
    %2372 = vmatprep.subr.mxu0 0.0
    %2373 = vmatpush1.xpose.msra.mxu0 0.0
    %2374 = vmatprep.subr.mxu0 0.0
    %2375 = vmatpush1.xpose.msra.mxu0 0.0
    %2376 = vmatprep.subr.mxu0 0.0
    %2377 = vmatpush1.xpose.msra.mxu0 0.0
    %2378 = vmatprep.subr.mxu0 0.0
    %2379 = vmatpush1.xpose.msra.mxu0 0.0
    %2380 = vmatprep.subr.mxu0 0.0
    %2381 = vmatpush1.xpose.msra.mxu0 0.0
    %2382 = vmatprep.subr.mxu0 0.0
    %2383 = vmatpush1.xpose.msra.mxu0 0.0
    %2384 = vmatprep.subr.mxu0 0.0
    %2385 = vmatpush1.xpose.msra.mxu0 0.0
    %2386 = vmatprep.subr.mxu0 0.0
    %2387 = vmatpush1.xpose.msra.mxu0 0.0
    %2388 = vmatprep.subr.mxu0 0.0
    %2389 = vmatpush1.xpose.msra.mxu0 0.0
    %2390 = vmatprep.subr.mxu0 0.0
    %2391 = vmatpush1.xpose.msra.mxu0 0.0
    %2392 = vmatprep.subr.mxu0 0.0
    %2393 = vmatpush1.xpose.msra.mxu0 0.0
    %2394 = vmatprep.subr.mxu0 0.0
    %2395 = vmatpush1.xpose.msra.mxu0 0.0
    %2396 = vmatprep.subr.mxu0 0.0
    %2397 = vmatpush1.xpose.msra.mxu0 0.0
    %2398 = vmatprep.subr.mxu0 0.0
    %2399 = vmatpush1.xpose.msra.mxu0 0.0
    %2400 = vmatprep.subr.mxu0 0.0
    %2401 = vmatpush1.xpose.msra.mxu0 0.0
    %2402 = vmatprep.subr.mxu0 0.0
    %2403 = vmatpush1.xpose.msra.mxu0 0.0
    %2404 = vmatprep.subr.mxu0 0.0
    %2405 = vmatpush1.xpose.msra.mxu0 0.0
    %2406 = vmatprep.subr.mxu0 0.0
    %2407 = vmatpush1.xpose.msra.mxu0 0.0
    %2408 = vmatprep.subr.mxu0 0.0
    %2409 = vmatpush1.xpose.msra.mxu0 0.0
    %2410 = vmatprep.subr.mxu0 0.0
    %2411 = vmatpush1.xpose.msra.mxu0 0.0
    %2412 = vmatprep.mubr.f32.mxu0 0.0
    %2413 = vmatmul.mubr.f32.gmra.mrb[0].mxu0 %v2344
    %v2414 = vpop.f32.mrb[0].mxu0
    %v2415 = vadd.f32 0.0, %v2414
    %v2416 = vpop.f32.mrb[0].mxu0
    %2417 = vdwg.mxu0
    %v2418 = vmul.f32 %v2415, 0.25
    %v2419 = vsel %vm887, %v2418, -inf
    %2420 = vmax.xlane.f32.xlu0 %v2419
    %v2421 = vpop.xlane.xlu0 %2420
    %v2422 = vsub.f32 %v2418, %v2421
    %v2423 = vmul.f32 %v2422, 1.442695
    %v2424 = vpow.pop %v2423
    %v2425 = vsel %vm887, %v2424, 0.0
    %2426 = vadd.xlane.f32.xlu0 %v2425
    %v2427 = vpop.xlane.xlu0 %2426
    %v2428 = vrcp.pop %v2427
    %2429 = vrot.lane.b32.xlu0 %v2168, 80
    %v2430 = vpop.permute.xlu0 %2429
    %v2433 = vsel %vm887, %v2424, 0
    %2435 = vmatprep.subr.mxu0 0.0
    %2436 = vmatpush1.msra.mxu0 %v2430
    %2437 = vmatprep.subr.mxu0 0.0
    %2438 = vmatpush1.msra.mxu0 0.0
    %2439 = vmatprep.subr.mxu0 0.0
    %2440 = vmatpush1.msra.mxu0 0.0
    %2441 = vmatprep.subr.mxu0 0.0
    %2442 = vmatpush1.msra.mxu0 0.0
    %2443 = vmatprep.subr.mxu0 0.0
    %2444 = vmatpush1.msra.mxu0 0.0
    %2445 = vmatprep.subr.mxu0 0.0
    %2446 = vmatpush1.msra.mxu0 0.0
    %2447 = vmatprep.subr.mxu0 0.0
    %2448 = vmatpush1.msra.mxu0 0.0
    %2449 = vmatprep.subr.mxu0 0.0
    %2450 = vmatpush1.msra.mxu0 0.0
    %2451 = vmatprep.subr.mxu0 0.0
    %2452 = vmatpush1.msra.mxu0 0.0
    %2453 = vmatprep.subr.mxu0 0.0
    %2454 = vmatpush1.msra.mxu0 0.0
    %2455 = vmatprep.subr.mxu0 0.0
    %2456 = vmatpush1.msra.mxu0 0.0
    %2457 = vmatprep.subr.mxu0 0.0
    %2458 = vmatpush1.msra.mxu0 0.0
    %2459 = vmatprep.subr.mxu0 0.0
    %2460 = vmatpush1.msra.mxu0 0.0
    %2461 = vmatprep.subr.mxu0 0.0
    %2462 = vmatpush1.msra.mxu0 0.0
    %2463 = vmatprep.subr.mxu0 0.0
    %2464 = vmatpush1.msra.mxu0 0.0
    %2465 = vmatprep.subr.mxu0 0.0
    %2466 = vmatpush1.msra.mxu0 0.0
    %2467 = vmatprep.subr.mxu0 0.0
    %2468 = vmatpush1.msra.mxu0 0.0
    %2469 = vmatprep.subr.mxu0 0.0
    %2470 = vmatpush1.msra.mxu0 0.0
    %2471 = vmatprep.subr.mxu0 0.0
    %2472 = vmatpush1.msra.mxu0 0.0
    %2473 = vmatprep.subr.mxu0 0.0
    %2474 = vmatpush1.msra.mxu0 0.0
    %2475 = vmatprep.subr.mxu0 0.0
    %2476 = vmatpush1.msra.mxu0 0.0
    %2477 = vmatprep.subr.mxu0 0.0
    %2478 = vmatpush1.msra.mxu0 0.0
    %2479 = vmatprep.subr.mxu0 0.0
    %2480 = vmatpush1.msra.mxu0 0.0
    %2481 = vmatprep.subr.mxu0 0.0
    %2482 = vmatpush1.msra.mxu0 0.0
    %2483 = vmatprep.subr.mxu0 0.0
    %2484 = vmatpush1.msra.mxu0 0.0
    %2485 = vmatprep.subr.mxu0 0.0
    %2486 = vmatpush1.msra.mxu0 0.0
    %2487 = vmatprep.subr.mxu0 0.0
    %2488 = vmatpush1.msra.mxu0 0.0
    %2489 = vmatprep.subr.mxu0 0.0
    %2490 = vmatpush1.msra.mxu0 0.0
    %2491 = vmatprep.subr.mxu0 0.0
    %2492 = vmatpush1.msra.mxu0 0.0
    %2493 = vmatprep.subr.mxu0 0.0
    %2494 = vmatpush1.msra.mxu0 0.0
    %2495 = vmatprep.subr.mxu0 0.0
    %2496 = vmatpush1.msra.mxu0 0.0
    %2497 = vmatprep.subr.mxu0 0.0
    %2498 = vmatpush1.msra.mxu0 0.0
    %2499 = vmatprep.mubr.f32.mxu0 0.0
    %2500 = vmatmul.mubr.f32.gmra.mrb[0].mxu0 %v2433
    %v2501 = vpop.f32.mrb[0].mxu0
    %v2502 = vadd.f32 0.0, %v2501
    %v2503 = vpop.f32.mrb[0].mxu0
    %2504 = vdwg.mxu0
    %v2505 = vmul.f32 %v2502, %v2428
    %2507 = vrot.lane.b32.xlu0 %v2505, 16
    %v2508 = vpop.permute.xlu0 %2507
    %v2510 = vsel %vm549, %v2339, %v2508
    %v2512 = vsel %vm549, %v2087, 0
    %v2515 = vsel %vm549, %v2173, 0
    %2517 = vmatprep.subr.mxu0 0.0
    %2518 = vmatpush1.xpose.msra.mxu0 %v2515
    %2519 = vmatprep.subr.mxu0 0.0
    %2520 = vmatpush1.xpose.msra.mxu0 0.0
    %2521 = vmatprep.subr.mxu0 0.0
    %2522 = vmatpush1.xpose.msra.mxu0 0.0
    %2523 = vmatprep.subr.mxu0 0.0
    %2524 = vmatpush1.xpose.msra.mxu0 0.0
    %2525 = vmatprep.subr.mxu0 0.0
    %2526 = vmatpush1.xpose.msra.mxu0 0.0
    %2527 = vmatprep.subr.mxu0 0.0
    %2528 = vmatpush1.xpose.msra.mxu0 0.0
    %2529 = vmatprep.subr.mxu0 0.0
    %2530 = vmatpush1.xpose.msra.mxu0 0.0
    %2531 = vmatprep.subr.mxu0 0.0
    %2532 = vmatpush1.xpose.msra.mxu0 0.0
    %2533 = vmatprep.subr.mxu0 0.0
    %2534 = vmatpush1.xpose.msra.mxu0 0.0
    %2535 = vmatprep.subr.mxu0 0.0
    %2536 = vmatpush1.xpose.msra.mxu0 0.0
    %2537 = vmatprep.subr.mxu0 0.0
    %2538 = vmatpush1.xpose.msra.mxu0 0.0
    %2539 = vmatprep.subr.mxu0 0.0
    %2540 = vmatpush1.xpose.msra.mxu0 0.0
    %2541 = vmatprep.subr.mxu0 0.0
    %2542 = vmatpush1.xpose.msra.mxu0 0.0
    %2543 = vmatprep.subr.mxu0 0.0
    %2544 = vmatpush1.xpose.msra.mxu0 0.0
    %2545 = vmatprep.subr.mxu0 0.0
    %2546 = vmatpush1.xpose.msra.mxu0 0.0
    %2547 = vmatprep.subr.mxu0 0.0
    %2548 = vmatpush1.xpose.msra.mxu0 0.0
    %2549 = vmatprep.subr.mxu0 0.0
    %2550 = vmatpush1.xpose.msra.mxu0 0.0
    %2551 = vmatprep.subr.mxu0 0.0
    %2552 = vmatpush1.xpose.msra.mxu0 0.0
    %2553 = vmatprep.subr.mxu0 0.0
    %2554 = vmatpush1.xpose.msra.mxu0 0.0
    %2555 = vmatprep.subr.mxu0 0.0
    %2556 = vmatpush1.xpose.msra.mxu0 0.0
    %2557 = vmatprep.subr.mxu0 0.0
    %2558 = vmatpush1.xpose.msra.mxu0 0.0
    %2559 = vmatprep.subr.mxu0 0.0
    %2560 = vmatpush1.xpose.msra.mxu0 0.0
    %2561 = vmatprep.subr.mxu0 0.0
    %2562 = vmatpush1.xpose.msra.mxu0 0.0
    %2563 = vmatprep.subr.mxu0 0.0
    %2564 = vmatpush1.xpose.msra.mxu0 0.0
    %2565 = vmatprep.subr.mxu0 0.0
    %2566 = vmatpush1.xpose.msra.mxu0 0.0
    %2567 = vmatprep.subr.mxu0 0.0
    %2568 = vmatpush1.xpose.msra.mxu0 0.0
    %2569 = vmatprep.subr.mxu0 0.0
    %2570 = vmatpush1.xpose.msra.mxu0 0.0
    %2571 = vmatprep.subr.mxu0 0.0
    %2572 = vmatpush1.xpose.msra.mxu0 0.0
    %2573 = vmatprep.subr.mxu0 0.0
    %2574 = vmatpush1.xpose.msra.mxu0 0.0
    %2575 = vmatprep.subr.mxu0 0.0
    %2576 = vmatpush1.xpose.msra.mxu0 0.0
    %2577 = vmatprep.subr.mxu0 0.0
    %2578 = vmatpush1.xpose.msra.mxu0 0.0
    %2579 = vmatprep.subr.mxu0 0.0
    %2580 = vmatpush1.xpose.msra.mxu0 0.0
    %2581 = vmatprep.mubr.f32.mxu0 0.0
    %2582 = vmatmul.mubr.f32.gmra.mrb[0].mxu0 %v2512
    %v2583 = vpop.f32.mrb[0].mxu0
    %v2584 = vadd.f32 0.0, %v2583
    %v2585 = vpop.f32.mrb[0].mxu0
    %2586 = vdwg.mxu0
    %v2587 = vmul.f32 %v2584, 0.25
    %v2588 = vsel %vm887, %v2587, -inf
    %2589 = vmax.xlane.f32.xlu0 %v2588
    %v2590 = vpop.xlane.xlu0 %2589
    %v2591 = vsub.f32 %v2587, %v2590
    %v2592 = vmul.f32 %v2591, 1.442695
    %v2593 = vpow.pop %v2592
    %v2594 = vsel %vm887, %v2593, 0.0
    %2595 = vadd.xlane.f32.xlu0 %v2594
    %v2596 = vpop.xlane.xlu0 %2595
    %v2597 = vrcp.pop %v2596
    %2598 = vrot.lane.b32.xlu0 %v2173, 96
    %v2599 = vpop.permute.xlu0 %2598
    %v2602 = vsel %vm887, %v2593, 0
    %2604 = vmatprep.subr.mxu0 0.0
    %2605 = vmatpush1.msra.mxu0 %v2599
    %2606 = vmatprep.subr.mxu0 0.0
    %2607 = vmatpush1.msra.mxu0 0.0
    %2608 = vmatprep.subr.mxu0 0.0
    %2609 = vmatpush1.msra.mxu0 0.0
    %2610 = vmatprep.subr.mxu0 0.0
    %2611 = vmatpush1.msra.mxu0 0.0
    %2612 = vmatprep.subr.mxu0 0.0
    %2613 = vmatpush1.msra.mxu0 0.0
    %2614 = vmatprep.subr.mxu0 0.0
    %2615 = vmatpush1.msra.mxu0 0.0
    %2616 = vmatprep.subr.mxu0 0.0
    %2617 = vmatpush1.msra.mxu0 0.0
    %2618 = vmatprep.subr.mxu0 0.0
    %2619 = vmatpush1.msra.mxu0 0.0
    %2620 = vmatprep.subr.mxu0 0.0
    %2621 = vmatpush1.msra.mxu0 0.0
    %2622 = vmatprep.subr.mxu0 0.0
    %2623 = vmatpush1.msra.mxu0 0.0
    %2624 = vmatprep.subr.mxu0 0.0
    %2625 = vmatpush1.msra.mxu0 0.0
    %2626 = vmatprep.subr.mxu0 0.0
    %2627 = vmatpush1.msra.mxu0 0.0
    %2628 = vmatprep.subr.mxu0 0.0
    %2629 = vmatpush1.msra.mxu0 0.0
    %2630 = vmatprep.subr.mxu0 0.0
    %2631 = vmatpush1.msra.mxu0 0.0
    %2632 = vmatprep.subr.mxu0 0.0
    %2633 = vmatpush1.msra.mxu0 0.0
    %2634 = vmatprep.subr.mxu0 0.0
    %2635 = vmatpush1.msra.mxu0 0.0
    %2636 = vmatprep.subr.mxu0 0.0
    %2637 = vmatpush1.msra.mxu0 0.0
    %2638 = vmatprep.subr.mxu0 0.0
    %2639 = vmatpush1.msra.mxu0 0.0
    %2640 = vmatprep.subr.mxu0 0.0
    %2641 = vmatpush1.msra.mxu0 0.0
    %2642 = vmatprep.subr.mxu0 0.0
    %2643 = vmatpush1.msra.mxu0 0.0
    %2644 = vmatprep.subr.mxu0 0.0
    %2645 = vmatpush1.msra.mxu0 0.0
    %2646 = vmatprep.subr.mxu0 0.0
    %2647 = vmatpush1.msra.mxu0 0.0
    %2648 = vmatprep.subr.mxu0 0.0
    %2649 = vmatpush1.msra.mxu0 0.0
    %2650 = vmatprep.subr.mxu0 0.0
    %2651 = vmatpush1.msra.mxu0 0.0
    %2652 = vmatprep.subr.mxu0 0.0
    %2653 = vmatpush1.msra.mxu0 0.0
    %2654 = vmatprep.subr.mxu0 0.0
    %2655 = vmatpush1.msra.mxu0 0.0
    %2656 = vmatprep.subr.mxu0 0.0
    %2657 = vmatpush1.msra.mxu0 0.0
    %2658 = vmatprep.subr.mxu0 0.0
    %2659 = vmatpush1.msra.mxu0 0.0
    %2660 = vmatprep.subr.mxu0 0.0
    %2661 = vmatpush1.msra.mxu0 0.0
    %2662 = vmatprep.subr.mxu0 0.0
    %2663 = vmatpush1.msra.mxu0 0.0
    %2664 = vmatprep.subr.mxu0 0.0
    %2665 = vmatpush1.msra.mxu0 0.0
    %2666 = vmatprep.subr.mxu0 0.0
    %2667 = vmatpush1.msra.mxu0 0.0
    %2668 = vmatprep.mubr.f32.mxu0 0.0
    %2669 = vmatmul.mubr.f32.gmra.mrb[0].mxu0 %v2602
    %v2670 = vpop.f32.mrb[0].mxu0
    %v2671 = vadd.f32 0.0, %v2670
    %v2672 = vpop.f32.mrb[0].mxu0
    %2673 = vdwg.mxu0
    %v2674 = vmul.f32 %v2671, %v2597
    %2675 = vrot.lane.b32.xlu0 %v2087, 112
    %v2676 = vpop.permute.xlu0 %2675
    %2677 = vrot.lane.b32.xlu0 %v2173, 112
    %v2678 = vpop.permute.xlu0 %2677
    %v2679 = vsel %vm549, %v2676, 0
    %v2681 = vsel %vm549, %v2678, 0
    %2683 = vmatprep.subr.mxu0 0.0
    %2684 = vmatpush1.xpose.msra.mxu0 %v2681
    %2685 = vmatprep.subr.mxu0 0.0
    %2686 = vmatpush1.xpose.msra.mxu0 0.0
    %2687 = vmatprep.subr.mxu0 0.0
    %2688 = vmatpush1.xpose.msra.mxu0 0.0
    %2689 = vmatprep.subr.mxu0 0.0
    %2690 = vmatpush1.xpose.msra.mxu0 0.0
    %2691 = vmatprep.subr.mxu0 0.0
    %2692 = vmatpush1.xpose.msra.mxu0 0.0
    %2693 = vmatprep.subr.mxu0 0.0
    %2694 = vmatpush1.xpose.msra.mxu0 0.0
    %2695 = vmatprep.subr.mxu0 0.0
    %2696 = vmatpush1.xpose.msra.mxu0 0.0
    %2697 = vmatprep.subr.mxu0 0.0
    %2698 = vmatpush1.xpose.msra.mxu0 0.0
    %2699 = vmatprep.subr.mxu0 0.0
    %2700 = vmatpush1.xpose.msra.mxu0 0.0
    %2701 = vmatprep.subr.mxu0 0.0
    %2702 = vmatpush1.xpose.msra.mxu0 0.0
    %2703 = vmatprep.subr.mxu0 0.0
    %2704 = vmatpush1.xpose.msra.mxu0 0.0
    %2705 = vmatprep.subr.mxu0 0.0
    %2706 = vmatpush1.xpose.msra.mxu0 0.0
    %2707 = vmatprep.subr.mxu0 0.0
    %2708 = vmatpush1.xpose.msra.mxu0 0.0
    %2709 = vmatprep.subr.mxu0 0.0
    %2710 = vmatpush1.xpose.msra.mxu0 0.0
    %2711 = vmatprep.subr.mxu0 0.0
    %2712 = vmatpush1.xpose.msra.mxu0 0.0
    %2713 = vmatprep.subr.mxu0 0.0
    %2714 = vmatpush1.xpose.msra.mxu0 0.0
    %2715 = vmatprep.subr.mxu0 0.0
    %2716 = vmatpush1.xpose.msra.mxu0 0.0
    %2717 = vmatprep.subr.mxu0 0.0
    %2718 = vmatpush1.xpose.msra.mxu0 0.0
    %2719 = vmatprep.subr.mxu0 0.0
    %2720 = vmatpush1.xpose.msra.mxu0 0.0
    %2721 = vmatprep.subr.mxu0 0.0
    %2722 = vmatpush1.xpose.msra.mxu0 0.0
    %2723 = vmatprep.subr.mxu0 0.0
    %2724 = vmatpush1.xpose.msra.mxu0 0.0
    %2725 = vmatprep.subr.mxu0 0.0
    %2726 = vmatpush1.xpose.msra.mxu0 0.0
    %2727 = vmatprep.subr.mxu0 0.0
    %2728 = vmatpush1.xpose.msra.mxu0 0.0
    %2729 = vmatprep.subr.mxu0 0.0
    %2730 = vmatpush1.xpose.msra.mxu0 0.0
    %2731 = vmatprep.subr.mxu0 0.0
    %2732 = vmatpush1.xpose.msra.mxu0 0.0
    %2733 = vmatprep.subr.mxu0 0.0
    %2734 = vmatpush1.xpose.msra.mxu0 0.0
    %2735 = vmatprep.subr.mxu0 0.0
    %2736 = vmatpush1.xpose.msra.mxu0 0.0
    %2737 = vmatprep.subr.mxu0 0.0
    %2738 = vmatpush1.xpose.msra.mxu0 0.0
    %2739 = vmatprep.subr.mxu0 0.0
    %2740 = vmatpush1.xpose.msra.mxu0 0.0
    %2741 = vmatprep.subr.mxu0 0.0
    %2742 = vmatpush1.xpose.msra.mxu0 0.0
    %2743 = vmatprep.subr.mxu0 0.0
    %2744 = vmatpush1.xpose.msra.mxu0 0.0
    %2745 = vmatprep.subr.mxu0 0.0
    %2746 = vmatpush1.xpose.msra.mxu0 0.0
    %2747 = vmatprep.mubr.f32.mxu0 0.0
    %2748 = vmatmul.mubr.f32.gmra.mrb[0].mxu0 %v2679
    %v2749 = vpop.f32.mrb[0].mxu0
    %v2750 = vadd.f32 0.0, %v2749
    %v2751 = vpop.f32.mrb[0].mxu0
    %2752 = vdwg.mxu0
    %v2753 = vmul.f32 %v2750, 0.25
    %v2754 = vsel %vm887, %v2753, -inf
    %2755 = vmax.xlane.f32.xlu0 %v2754
    %v2756 = vpop.xlane.xlu0 %2755
    %v2757 = vsub.f32 %v2753, %v2756
    %v2758 = vmul.f32 %v2757, 1.442695
    %v2759 = vpow.pop %v2758
    %v2760 = vsel %vm887, %v2759, 0.0
    %2761 = vadd.xlane.f32.xlu0 %v2760
    %v2762 = vpop.xlane.xlu0 %2761
    %v2763 = vrcp.pop %v2762
    %2764 = vrot.lane.b32.xlu0 %v2173, 80
    %v2765 = vpop.permute.xlu0 %2764
    %v2768 = vsel %vm887, %v2759, 0
    %2770 = vmatprep.subr.mxu0 0.0
    %2771 = vmatpush1.msra.mxu0 %v2765
    %2772 = vmatprep.subr.mxu0 0.0
    %2773 = vmatpush1.msra.mxu0 0.0
    %2774 = vmatprep.subr.mxu0 0.0
    %2775 = vmatpush1.msra.mxu0 0.0
    %2776 = vmatprep.subr.mxu0 0.0
    %2777 = vmatpush1.msra.mxu0 0.0
    %2778 = vmatprep.subr.mxu0 0.0
    %2779 = vmatpush1.msra.mxu0 0.0
    %2780 = vmatprep.subr.mxu0 0.0
    %2781 = vmatpush1.msra.mxu0 0.0
    %2782 = vmatprep.subr.mxu0 0.0
    %2783 = vmatpush1.msra.mxu0 0.0
    %2784 = vmatprep.subr.mxu0 0.0
    %2785 = vmatpush1.msra.mxu0 0.0
    %2786 = vmatprep.subr.mxu0 0.0
    %2787 = vmatpush1.msra.mxu0 0.0
    %2788 = vmatprep.subr.mxu0 0.0
    %2789 = vmatpush1.msra.mxu0 0.0
    %2790 = vmatprep.subr.mxu0 0.0
    %2791 = vmatpush1.msra.mxu0 0.0
    %2792 = vmatprep.subr.mxu0 0.0
    %2793 = vmatpush1.msra.mxu0 0.0
    %2794 = vmatprep.subr.mxu0 0.0
    %2795 = vmatpush1.msra.mxu0 0.0
    %2796 = vmatprep.subr.mxu0 0.0
    %2797 = vmatpush1.msra.mxu0 0.0
    %2798 = vmatprep.subr.mxu0 0.0
    %2799 = vmatpush1.msra.mxu0 0.0
    %2800 = vmatprep.subr.mxu0 0.0
    %2801 = vmatpush1.msra.mxu0 0.0
    %2802 = vmatprep.subr.mxu0 0.0
    %2803 = vmatpush1.msra.mxu0 0.0
    %2804 = vmatprep.subr.mxu0 0.0
    %2805 = vmatpush1.msra.mxu0 0.0
    %2806 = vmatprep.subr.mxu0 0.0
    %2807 = vmatpush1.msra.mxu0 0.0
    %2808 = vmatprep.subr.mxu0 0.0
    %2809 = vmatpush1.msra.mxu0 0.0
    %2810 = vmatprep.subr.mxu0 0.0
    %2811 = vmatpush1.msra.mxu0 0.0
    %2812 = vmatprep.subr.mxu0 0.0
    %2813 = vmatpush1.msra.mxu0 0.0
    %2814 = vmatprep.subr.mxu0 0.0
    %2815 = vmatpush1.msra.mxu0 0.0
    %2816 = vmatprep.subr.mxu0 0.0
    %2817 = vmatpush1.msra.mxu0 0.0
    %2818 = vmatprep.subr.mxu0 0.0
    %2819 = vmatpush1.msra.mxu0 0.0
    %2820 = vmatprep.subr.mxu0 0.0
    %2821 = vmatpush1.msra.mxu0 0.0
    %2822 = vmatprep.subr.mxu0 0.0
    %2823 = vmatpush1.msra.mxu0 0.0
    %2824 = vmatprep.subr.mxu0 0.0
    %2825 = vmatpush1.msra.mxu0 0.0
    %2826 = vmatprep.subr.mxu0 0.0
    %2827 = vmatpush1.msra.mxu0 0.0
    %2828 = vmatprep.subr.mxu0 0.0
    %2829 = vmatpush1.msra.mxu0 0.0
    %2830 = vmatprep.subr.mxu0 0.0
    %2831 = vmatpush1.msra.mxu0 0.0
    %2832 = vmatprep.subr.mxu0 0.0
    %2833 = vmatpush1.msra.mxu0 0.0
    %2834 = vmatprep.mubr.f32.mxu0 0.0
    %2835 = vmatmul.mubr.f32.gmra.mrb[0].mxu0 %v2768
    %v2836 = vpop.f32.mrb[0].mxu0
    %v2837 = vadd.f32 0.0, %v2836
    %v2838 = vpop.f32.mrb[0].mxu0
    %2839 = vdwg.mxu0
    %v2840 = vmul.f32 %v2837, %v2763
    %2842 = vrot.lane.b32.xlu0 %v2840, 16
    %v2843 = vpop.permute.xlu0 %2842
    %v2845 = vsel %vm549, %v2674, %v2843
    %v2846 = vld [vmem:[%s37] sm:$0xff]
    %v2847 = vld [vmem:[%s37 + $0x8] sm:$0xff]
    %v2848 = vld [vmem:[%s37 + $0x10] sm:$0xff]
    %v2849 = vld [vmem:[%s37 + $0x18] sm:$0xff]
    %v2850 = vld [vmem:[#allocation21] sm:$0x1]
    %v2852 = vlaneseq
    %v2853 = vshrl.u32 %v2852, 7
    %v2854 = vsub.s32 0, %v2853
    %v2855 = vrot.slane %v2850, %v2854
    %v2858 = vsel %vm642, %v2510, 0
    %v2861 = vsel %vm642, %v2845, 0
    %2863 = vmatprep.subr.mxu0 0.0
    %2864 = vmatpush1.msra.mxu0 %v2846
    %2865 = vmatprep.subr.mxu0 0.0
    %2866 = vmatpush1.msra.mxu0 %v2847
    %2867 = vmatprep.subr.mxu0 0.0
    %2868 = vmatpush1.msra.mxu0 %v2848
    %2869 = vmatprep.subr.mxu0 0.0
    %2870 = vmatpush1.msra.mxu0 %v2849
    %2871 = vmatprep.subr.mxu0 0.0
    %2872 = vmatpush1.msra.mxu0 0.0
    %2873 = vmatprep.subr.mxu0 0.0
    %2874 = vmatpush1.msra.mxu0 0.0
    %2875 = vmatprep.subr.mxu0 0.0
    %2876 = vmatpush1.msra.mxu0 0.0
    %2877 = vmatprep.subr.mxu0 0.0
    %2878 = vmatpush1.msra.mxu0 0.0
    %2879 = vmatprep.subr.mxu0 0.0
    %2880 = vmatpush1.msra.mxu0 0.0
    %2881 = vmatprep.subr.mxu0 0.0
    %2882 = vmatpush1.msra.mxu0 0.0
    %2883 = vmatprep.subr.mxu0 0.0
    %2884 = vmatpush1.msra.mxu0 0.0
    %2885 = vmatprep.subr.mxu0 0.0
    %2886 = vmatpush1.msra.mxu0 0.0
    %2887 = vmatprep.subr.mxu0 0.0
    %2888 = vmatpush1.msra.mxu0 0.0
    %2889 = vmatprep.subr.mxu0 0.0
    %2890 = vmatpush1.msra.mxu0 0.0
    %2891 = vmatprep.subr.mxu0 0.0
    %2892 = vmatpush1.msra.mxu0 0.0
    %2893 = vmatprep.subr.mxu0 0.0
    %2894 = vmatpush1.msra.mxu0 0.0
    %2895 = vmatprep.subr.mxu0 0.0
    %2896 = vmatpush1.msra.mxu0 0.0
    %2897 = vmatprep.subr.mxu0 0.0
    %2898 = vmatpush1.msra.mxu0 0.0
    %2899 = vmatprep.subr.mxu0 0.0
    %2900 = vmatpush1.msra.mxu0 0.0
    %2901 = vmatprep.subr.mxu0 0.0
    %2902 = vmatpush1.msra.mxu0 0.0
    %2903 = vmatprep.subr.mxu0 0.0
    %2904 = vmatpush1.msra.mxu0 0.0
    %2905 = vmatprep.subr.mxu0 0.0
    %2906 = vmatpush1.msra.mxu0 0.0
    %2907 = vmatprep.subr.mxu0 0.0
    %2908 = vmatpush1.msra.mxu0 0.0
    %2909 = vmatprep.subr.mxu0 0.0
    %2910 = vmatpush1.msra.mxu0 0.0
    %2911 = vmatprep.subr.mxu0 0.0
    %2912 = vmatpush1.msra.mxu0 0.0
    %2913 = vmatprep.subr.mxu0 0.0
    %2914 = vmatpush1.msra.mxu0 0.0
    %2915 = vmatprep.subr.mxu0 0.0
    %2916 = vmatpush1.msra.mxu0 0.0
    %2917 = vmatprep.subr.mxu0 0.0
    %2918 = vmatpush1.msra.mxu0 0.0
    %2919 = vmatprep.subr.mxu0 0.0
    %2920 = vmatpush1.msra.mxu0 0.0
    %2921 = vmatprep.subr.mxu0 0.0
    %2922 = vmatpush1.msra.mxu0 0.0
    %2923 = vmatprep.subr.mxu0 0.0
    %2924 = vmatpush1.msra.mxu0 0.0
    %2925 = vmatprep.subr.mxu0 0.0
    %2926 = vmatpush1.msra.mxu0 0.0
    %2927 = vmatprep.mubr.f32.mxu0 0.0
    %2928 = vmatmul.mubr.f32.gmra.mrb[0].mxu0 %v2858
    %v2929 = vpop.f32.mrb[0].mxu0
    %v2930 = vadd.f32 %v2855, %v2929
    %v2931 = vpop.f32.mrb[0].mxu0
    %2932 = vmatprep.mubr.f32.mxu0 0.0
    %2933 = vmatmul.mubr.f32.gmra.mrb[0].mxu0 %v2861
    %v2934 = vpop.f32.mrb[0].mxu0
    %v2935 = vadd.f32 %v2855, %v2934
    %v2936 = vpop.f32.mrb[0].mxu0
    %2937 = vdwg.mxu0
    %v2938 = vadd.f32 %v1990, %v2930
    %v2939 = vadd.f32 %v1995, %v2935
    %v2940 = vld [vmem:[#allocation12] sm:$0x1]
    %v2941 = vld [vmem:[#allocation10] sm:$0x1]
    %v2942 = vsel %vm642, %v2938, 0.0
    %2943 = vadd.xlane.f32.xlu0 %v2942
    %v2944 = vpop.xlane.xlu0 %2943
    %v2945 = vsel %vm642, %v2939, 0.0
    %2946 = vadd.xlane.f32.xlu0 %v2945
    %v2947 = vpop.xlane.xlu0 %2946
    %v2948 = vmul.f32 %v2944, %v1583
    %v2949 = vmul.f32 %v2947, %v1583
    %v2950 = vsub.f32 %v2938, %v2948
    %v2951 = vsub.f32 %v2939, %v2949
    %v2952 = vmul.f32 %v2950, %v2950
    %v2953 = vmul.f32 %v2951, %v2951
    %v2954 = vsel %vm642, %v2952, 0.0
    %2955 = vadd.xlane.f32.xlu0 %v2954
    %v2956 = vpop.xlane.xlu0 %2955
    %v2957 = vsel %vm642, %v2953, 0.0
    %2958 = vadd.xlane.f32.xlu0 %v2957
    %v2959 = vpop.xlane.xlu0 %2958
    %v2960 = vmul.f32 %v2956, %v1583
    %v2961 = vmul.f32 %v2959, %v1583
    %v2962 = vadd.f32 %v2960, 1e-05
    %v2963 = vadd.f32 %v2961, 1e-05
    %v2964 = vrsqrt.pop %v2962
    %v2965 = vrsqrt.pop %v2963
    %v2966 = vmul.f32 %v2950, %v2964
    %v2967 = vmul.f32 %v2951, %v2965
    %v2969 = vlaneseq
    %v2970 = vshrl.u32 %v2969, 7
    %v2971 = vsub.s32 0, %v2970
    %v2972 = vrot.slane %v2940, %v2971
    %v2974 = vmul.f32 %v2966, %v2972
    %v2975 = vmul.f32 %v2967, %v2972
    %v2977 = vlaneseq
    %v2978 = vshrl.u32 %v2977, 7
    %v2979 = vsub.s32 0, %v2978
    %v2980 = vrot.slane %v2941, %v2979
    %v2982 = vadd.f32 %v2974, %v2980
    %v2983 = vadd.f32 %v2975, %v2980
    %v2984 = vld [vmem:[%s15] sm:$0xff]
    %v2985 = vld [vmem:[%s15 + $0x8] sm:$0xff]
    %v2986 = vld [vmem:[%s15 + $0x10] sm:$0xff]
    %v2987 = vld [vmem:[%s15 + $0x18] sm:$0xff]
    %v2988 = vld [vmem:[#allocation9] sm:$0x1]
    %v2990 = vlaneseq
    %v2991 = vshrl.u32 %v2990, 7
    %v2992 = vsub.s32 0, %v2991
    %v2993 = vrot.slane %v2988, %v2992
    %v2996 = vsel %vm642, %v2982, 0
    %v2999 = vsel %vm642, %v2983, 0
    %3001 = vmatprep.subr.mxu0 0.0
    %3002 = vmatpush1.msra.mxu0 %v2984
    %3003 = vmatprep.subr.mxu0 0.0
    %3004 = vmatpush1.msra.mxu0 %v2985
    %3005 = vmatprep.subr.mxu0 0.0
    %3006 = vmatpush1.msra.mxu0 %v2986
    %3007 = vmatprep.subr.mxu0 0.0
    %3008 = vmatpush1.msra.mxu0 %v2987
    %3009 = vmatprep.subr.mxu0 0.0
    %3010 = vmatpush1.msra.mxu0 0.0
    %3011 = vmatprep.subr.mxu0 0.0
    %3012 = vmatpush1.msra.mxu0 0.0
    %3013 = vmatprep.subr.mxu0 0.0
    %3014 = vmatpush1.msra.mxu0 0.0
    %3015 = vmatprep.subr.mxu0 0.0
    %3016 = vmatpush1.msra.mxu0 0.0
    %3017 = vmatprep.subr.mxu0 0.0
    %3018 = vmatpush1.msra.mxu0 0.0
    %3019 = vmatprep.subr.mxu0 0.0
    %3020 = vmatpush1.msra.mxu0 0.0
    %3021 = vmatprep.subr.mxu0 0.0
    %3022 = vmatpush1.msra.mxu0 0.0
    %3023 = vmatprep.subr.mxu0 0.0
    %3024 = vmatpush1.msra.mxu0 0.0
    %3025 = vmatprep.subr.mxu0 0.0
    %3026 = vmatpush1.msra.mxu0 0.0
    %3027 = vmatprep.subr.mxu0 0.0
    %3028 = vmatpush1.msra.mxu0 0.0
    %3029 = vmatprep.subr.mxu0 0.0
    %3030 = vmatpush1.msra.mxu0 0.0
    %3031 = vmatprep.subr.mxu0 0.0
    %3032 = vmatpush1.msra.mxu0 0.0
    %3033 = vmatprep.subr.mxu0 0.0
    %3034 = vmatpush1.msra.mxu0 0.0
    %3035 = vmatprep.subr.mxu0 0.0
    %3036 = vmatpush1.msra.mxu0 0.0
    %3037 = vmatprep.subr.mxu0 0.0
    %3038 = vmatpush1.msra.mxu0 0.0
    %3039 = vmatprep.subr.mxu0 0.0
    %3040 = vmatpush1.msra.mxu0 0.0
    %3041 = vmatprep.subr.mxu0 0.0
    %3042 = vmatpush1.msra.mxu0 0.0
    %3043 = vmatprep.subr.mxu0 0.0
    %3044 = vmatpush1.msra.mxu0 0.0
    %3045 = vmatprep.subr.mxu0 0.0
    %3046 = vmatpush1.msra.mxu0 0.0
    %3047 = vmatprep.subr.mxu0 0.0
    %3048 = vmatpush1.msra.mxu0 0.0
    %3049 = vmatprep.subr.mxu0 0.0
    %3050 = vmatpush1.msra.mxu0 0.0
    %3051 = vmatprep.subr.mxu0 0.0
    %3052 = vmatpush1.msra.mxu0 0.0
    %3053 = vmatprep.subr.mxu0 0.0
    %3054 = vmatpush1.msra.mxu0 0.0
    %3055 = vmatprep.subr.mxu0 0.0
    %3056 = vmatpush1.msra.mxu0 0.0
    %3057 = vmatprep.subr.mxu0 0.0
    %3058 = vmatpush1.msra.mxu0 0.0
    %3059 = vmatprep.subr.mxu0 0.0
    %3060 = vmatpush1.msra.mxu0 0.0
    %3061 = vmatprep.subr.mxu0 0.0
    %3062 = vmatpush1.msra.mxu0 0.0
    %3063 = vmatprep.subr.mxu0 0.0
    %3064 = vmatpush1.msra.mxu0 0.0
    %3065 = vmatprep.mubr.f32.mxu0 0.0
    %3066 = vmatmul.mubr.f32.gmra.mrb[0].mxu0 %v2996
    %v3067 = vpop.f32.mrb[0].mxu0
    %v3068 = vadd.f32 %v2993, %v3067
    %v3069 = vpop.f32.mrb[0].mxu0
    %3070 = vmatprep.mubr.f32.mxu0 0.0
    %3071 = vmatmul.mubr.f32.gmra.mrb[0].mxu0 %v2999
    %v3072 = vpop.f32.mrb[0].mxu0
    %v3073 = vadd.f32 %v2993, %v3072
    %v3074 = vpop.f32.mrb[0].mxu0
    %3075 = vdwg.mxu0
    %v3076 = vld [vmem:[%s11] sm:$0xff]
    %v3077 = vld [vmem:[%s11 + $0x8] sm:$0xff]
    %v3078 = vld [vmem:[%s11 + $0x10] sm:$0xff]
    %v3079 = vld [vmem:[%s11 + $0x18] sm:$0xff]
    %v3080 = vld [vmem:[#allocation6] sm:$0x1]
    %v3082 = vlaneseq
    %v3083 = vshrl.u32 %v3082, 7
    %v3084 = vsub.s32 0, %v3083
    %v3085 = vrot.slane %v3080, %v3084
    %v3088 = vsel %vm642, %v1899, 0
    %v3091 = vsel %vm642, %v1900, 0
    %3093 = vmatprep.subr.mxu0 0.0
    %3094 = vmatpush1.msra.mxu0 %v3076
    %3095 = vmatprep.subr.mxu0 0.0
    %3096 = vmatpush1.msra.mxu0 %v3077
    %3097 = vmatprep.subr.mxu0 0.0
    %3098 = vmatpush1.msra.mxu0 %v3078
    %3099 = vmatprep.subr.mxu0 0.0
    %3100 = vmatpush1.msra.mxu0 %v3079
    %3101 = vmatprep.subr.mxu0 0.0
    %3102 = vmatpush1.msra.mxu0 0.0
    %3103 = vmatprep.subr.mxu0 0.0
    %3104 = vmatpush1.msra.mxu0 0.0
    %3105 = vmatprep.subr.mxu0 0.0
    %3106 = vmatpush1.msra.mxu0 0.0
    %3107 = vmatprep.subr.mxu0 0.0
    %3108 = vmatpush1.msra.mxu0 0.0
    %3109 = vmatprep.subr.mxu0 0.0
    %3110 = vmatpush1.msra.mxu0 0.0
    %3111 = vmatprep.subr.mxu0 0.0
    %3112 = vmatpush1.msra.mxu0 0.0
    %3113 = vmatprep.subr.mxu0 0.0
    %3114 = vmatpush1.msra.mxu0 0.0
    %3115 = vmatprep.subr.mxu0 0.0
    %3116 = vmatpush1.msra.mxu0 0.0
    %3117 = vmatprep.subr.mxu0 0.0
    %3118 = vmatpush1.msra.mxu0 0.0
    %3119 = vmatprep.subr.mxu0 0.0
    %3120 = vmatpush1.msra.mxu0 0.0
    %3121 = vmatprep.subr.mxu0 0.0
    %3122 = vmatpush1.msra.mxu0 0.0
    %3123 = vmatprep.subr.mxu0 0.0
    %3124 = vmatpush1.msra.mxu0 0.0
    %3125 = vmatprep.subr.mxu0 0.0
    %3126 = vmatpush1.msra.mxu0 0.0
    %3127 = vmatprep.subr.mxu0 0.0
    %3128 = vmatpush1.msra.mxu0 0.0
    %3129 = vmatprep.subr.mxu0 0.0
    %3130 = vmatpush1.msra.mxu0 0.0
    %3131 = vmatprep.subr.mxu0 0.0
    %3132 = vmatpush1.msra.mxu0 0.0
    %3133 = vmatprep.subr.mxu0 0.0
    %3134 = vmatpush1.msra.mxu0 0.0
    %3135 = vmatprep.subr.mxu0 0.0
    %3136 = vmatpush1.msra.mxu0 0.0
    %3137 = vmatprep.subr.mxu0 0.0
    %3138 = vmatpush1.msra.mxu0 0.0
    %3139 = vmatprep.subr.mxu0 0.0
    %3140 = vmatpush1.msra.mxu0 0.0
    %3141 = vmatprep.subr.mxu0 0.0
    %3142 = vmatpush1.msra.mxu0 0.0
    %3143 = vmatprep.subr.mxu0 0.0
    %3144 = vmatpush1.msra.mxu0 0.0
    %3145 = vmatprep.subr.mxu0 0.0
    %3146 = vmatpush1.msra.mxu0 0.0
    %3147 = vmatprep.subr.mxu0 0.0
    %3148 = vmatpush1.msra.mxu0 0.0
    %3149 = vmatprep.subr.mxu0 0.0
    %3150 = vmatpush1.msra.mxu0 0.0
    %3151 = vmatprep.subr.mxu0 0.0
    %3152 = vmatpush1.msra.mxu0 0.0
    %3153 = vmatprep.subr.mxu0 0.0
    %3154 = vmatpush1.msra.mxu0 0.0
    %3155 = vmatprep.subr.mxu0 0.0
    %3156 = vmatpush1.msra.mxu0 0.0
    %3157 = vmatprep.mubr.f32.mxu0 0.0
    %3158 = vmatmul.mubr.f32.gmra.mrb[0].mxu0 %v3088
    %v3159 = vpop.f32.mrb[0].mxu0
    %v3160 = vadd.f32 %v3085, %v3159
    %v3161 = vpop.f32.mrb[0].mxu0
    %3162 = vmatprep.mubr.f32.mxu0 0.0
    %3163 = vmatmul.mubr.f32.gmra.mrb[0].mxu0 %v3091
    %v3164 = vpop.f32.mrb[0].mxu0
    %v3165 = vadd.f32 %v3085, %v3164
    %v3166 = vpop.f32.mrb[0].mxu0
    %3167 = vdwg.mxu0
    %v3169 = vsel %vm549, %v3068, 0
    %v3172 = vsel %vm549, %v3160, 0
    %3174 = vmatprep.subr.mxu0 0.0
    %3175 = vmatpush1.xpose.msra.mxu0 %v3172
    %3176 = vmatprep.subr.mxu0 0.0
    %3177 = vmatpush1.xpose.msra.mxu0 0.0
    %3178 = vmatprep.subr.mxu0 0.0
    %3179 = vmatpush1.xpose.msra.mxu0 0.0
    %3180 = vmatprep.subr.mxu0 0.0
    %3181 = vmatpush1.xpose.msra.mxu0 0.0
    %3182 = vmatprep.subr.mxu0 0.0
    %3183 = vmatpush1.xpose.msra.mxu0 0.0
    %3184 = vmatprep.subr.mxu0 0.0
    %3185 = vmatpush1.xpose.msra.mxu0 0.0
    %3186 = vmatprep.subr.mxu0 0.0
    %3187 = vmatpush1.xpose.msra.mxu0 0.0
    %3188 = vmatprep.subr.mxu0 0.0
    %3189 = vmatpush1.xpose.msra.mxu0 0.0
    %3190 = vmatprep.subr.mxu0 0.0
    %3191 = vmatpush1.xpose.msra.mxu0 0.0
    %3192 = vmatprep.subr.mxu0 0.0
    %3193 = vmatpush1.xpose.msra.mxu0 0.0
    %3194 = vmatprep.subr.mxu0 0.0
    %3195 = vmatpush1.xpose.msra.mxu0 0.0
    %3196 = vmatprep.subr.mxu0 0.0
    %3197 = vmatpush1.xpose.msra.mxu0 0.0
    %3198 = vmatprep.subr.mxu0 0.0
    %3199 = vmatpush1.xpose.msra.mxu0 0.0
    %3200 = vmatprep.subr.mxu0 0.0
    %3201 = vmatpush1.xpose.msra.mxu0 0.0
    %3202 = vmatprep.subr.mxu0 0.0
    %3203 = vmatpush1.xpose.msra.mxu0 0.0
    %3204 = vmatprep.subr.mxu0 0.0
    %3205 = vmatpush1.xpose.msra.mxu0 0.0
    %3206 = vmatprep.subr.mxu0 0.0
    %3207 = vmatpush1.xpose.msra.mxu0 0.0
    %3208 = vmatprep.subr.mxu0 0.0
    %3209 = vmatpush1.xpose.msra.mxu0 0.0
    %3210 = vmatprep.subr.mxu0 0.0
    %3211 = vmatpush1.xpose.msra.mxu0 0.0
    %3212 = vmatprep.subr.mxu0 0.0
    %3213 = vmatpush1.xpose.msra.mxu0 0.0
    %3214 = vmatprep.subr.mxu0 0.0
    %3215 = vmatpush1.xpose.msra.mxu0 0.0
    %3216 = vmatprep.subr.mxu0 0.0
    %3217 = vmatpush1.xpose.msra.mxu0 0.0
    %3218 = vmatprep.subr.mxu0 0.0
    %3219 = vmatpush1.xpose.msra.mxu0 0.0
    %3220 = vmatprep.subr.mxu0 0.0
    %3221 = vmatpush1.xpose.msra.mxu0 0.0
    %3222 = vmatprep.subr.mxu0 0.0
    %3223 = vmatpush1.xpose.msra.mxu0 0.0
    %3224 = vmatprep.subr.mxu0 0.0
    %3225 = vmatpush1.xpose.msra.mxu0 0.0
    %3226 = vmatprep.subr.mxu0 0.0
    %3227 = vmatpush1.xpose.msra.mxu0 0.0
    %3228 = vmatprep.subr.mxu0 0.0
    %3229 = vmatpush1.xpose.msra.mxu0 0.0
    %3230 = vmatprep.subr.mxu0 0.0
    %3231 = vmatpush1.xpose.msra.mxu0 0.0
    %3232 = vmatprep.subr.mxu0 0.0
    %3233 = vmatpush1.xpose.msra.mxu0 0.0
    %3234 = vmatprep.subr.mxu0 0.0
    %3235 = vmatpush1.xpose.msra.mxu0 0.0
    %3236 = vmatprep.subr.mxu0 0.0
    %3237 = vmatpush1.xpose.msra.mxu0 0.0
    %3238 = vmatprep.mubr.f32.mxu0 0.0
    %3239 = vmatmul.mubr.f32.gmra.mrb[0].mxu0 %v3169
    %v3240 = vpop.f32.mrb[0].mxu0
    %v3241 = vadd.f32 0.0, %v3240
    %v3242 = vpop.f32.mrb[0].mxu0
    %3243 = vdwg.mxu0
    %v3244 = vmul.f32 %v3241, 0.25
    %v3245 = vsel %vm887, %v3244, -inf
    %3246 = vmax.xlane.f32.xlu0 %v3245
    %v3247 = vpop.xlane.xlu0 %3246
    %v3248 = vsub.f32 %v3244, %v3247
    %v3249 = vmul.f32 %v3248, 1.442695
    %v3250 = vpow.pop %v3249
    %v3251 = vsel %vm887, %v3250, 0.0
    %3252 = vadd.xlane.f32.xlu0 %v3251
    %v3253 = vpop.xlane.xlu0 %3252
    %v3254 = vrcp.pop %v3253
    %3255 = vrot.lane.b32.xlu0 %v3160, 96
    %v3256 = vpop.permute.xlu0 %3255
    %v3259 = vsel %vm887, %v3250, 0
    %3261 = vmatprep.subr.mxu0 0.0
    %3262 = vmatpush1.msra.mxu0 %v3256
    %3263 = vmatprep.subr.mxu0 0.0
    %3264 = vmatpush1.msra.mxu0 0.0
    %3265 = vmatprep.subr.mxu0 0.0
    %3266 = vmatpush1.msra.mxu0 0.0
    %3267 = vmatprep.subr.mxu0 0.0
    %3268 = vmatpush1.msra.mxu0 0.0
    %3269 = vmatprep.subr.mxu0 0.0
    %3270 = vmatpush1.msra.mxu0 0.0
    %3271 = vmatprep.subr.mxu0 0.0
    %3272 = vmatpush1.msra.mxu0 0.0
    %3273 = vmatprep.subr.mxu0 0.0
    %3274 = vmatpush1.msra.mxu0 0.0
    %3275 = vmatprep.subr.mxu0 0.0
    %3276 = vmatpush1.msra.mxu0 0.0
    %3277 = vmatprep.subr.mxu0 0.0
    %3278 = vmatpush1.msra.mxu0 0.0
    %3279 = vmatprep.subr.mxu0 0.0
    %3280 = vmatpush1.msra.mxu0 0.0
    %3281 = vmatprep.subr.mxu0 0.0
    %3282 = vmatpush1.msra.mxu0 0.0
    %3283 = vmatprep.subr.mxu0 0.0
    %3284 = vmatpush1.msra.mxu0 0.0
    %3285 = vmatprep.subr.mxu0 0.0
    %3286 = vmatpush1.msra.mxu0 0.0
    %3287 = vmatprep.subr.mxu0 0.0
    %3288 = vmatpush1.msra.mxu0 0.0
    %3289 = vmatprep.subr.mxu0 0.0
    %3290 = vmatpush1.msra.mxu0 0.0
    %3291 = vmatprep.subr.mxu0 0.0
    %3292 = vmatpush1.msra.mxu0 0.0
    %3293 = vmatprep.subr.mxu0 0.0
    %3294 = vmatpush1.msra.mxu0 0.0
    %3295 = vmatprep.subr.mxu0 0.0
    %3296 = vmatpush1.msra.mxu0 0.0
    %3297 = vmatprep.subr.mxu0 0.0
    %3298 = vmatpush1.msra.mxu0 0.0
    %3299 = vmatprep.subr.mxu0 0.0
    %3300 = vmatpush1.msra.mxu0 0.0
    %3301 = vmatprep.subr.mxu0 0.0
    %3302 = vmatpush1.msra.mxu0 0.0
    %3303 = vmatprep.subr.mxu0 0.0
    %3304 = vmatpush1.msra.mxu0 0.0
    %3305 = vmatprep.subr.mxu0 0.0
    %3306 = vmatpush1.msra.mxu0 0.0
    %3307 = vmatprep.subr.mxu0 0.0
    %3308 = vmatpush1.msra.mxu0 0.0
    %3309 = vmatprep.subr.mxu0 0.0
    %3310 = vmatpush1.msra.mxu0 0.0
    %3311 = vmatprep.subr.mxu0 0.0
    %3312 = vmatpush1.msra.mxu0 0.0
    %3313 = vmatprep.subr.mxu0 0.0
    %3314 = vmatpush1.msra.mxu0 0.0
    %3315 = vmatprep.subr.mxu0 0.0
    %3316 = vmatpush1.msra.mxu0 0.0
    %3317 = vmatprep.subr.mxu0 0.0
    %3318 = vmatpush1.msra.mxu0 0.0
    %3319 = vmatprep.subr.mxu0 0.0
    %3320 = vmatpush1.msra.mxu0 0.0
    %3321 = vmatprep.subr.mxu0 0.0
    %3322 = vmatpush1.msra.mxu0 0.0
    %3323 = vmatprep.subr.mxu0 0.0
    %3324 = vmatpush1.msra.mxu0 0.0
    %3325 = vmatprep.mubr.f32.mxu0 0.0
    %3326 = vmatmul.mubr.f32.gmra.mrb[0].mxu0 %v3259
    %v3327 = vpop.f32.mrb[0].mxu0
    %v3328 = vadd.f32 0.0, %v3327
    %v3329 = vpop.f32.mrb[0].mxu0
    %3330 = vdwg.mxu0
    %v3331 = vmul.f32 %v3328, %v3254
    %3332 = vrot.lane.b32.xlu0 %v3068, 112
    %v3333 = vpop.permute.xlu0 %3332
    %3334 = vrot.lane.b32.xlu0 %v3160, 112
    %v3335 = vpop.permute.xlu0 %3334
    %v3336 = vsel %vm549, %v3333, 0
    %v3338 = vsel %vm549, %v3335, 0
    %3340 = vmatprep.subr.mxu0 0.0
    %3341 = vmatpush1.xpose.msra.mxu0 %v3338
    %3342 = vmatprep.subr.mxu0 0.0
    %3343 = vmatpush1.xpose.msra.mxu0 0.0
    %3344 = vmatprep.subr.mxu0 0.0
    %3345 = vmatpush1.xpose.msra.mxu0 0.0
    %3346 = vmatprep.subr.mxu0 0.0
    %3347 = vmatpush1.xpose.msra.mxu0 0.0
    %3348 = vmatprep.subr.mxu0 0.0
    %3349 = vmatpush1.xpose.msra.mxu0 0.0
    %3350 = vmatprep.subr.mxu0 0.0
    %3351 = vmatpush1.xpose.msra.mxu0 0.0
    %3352 = vmatprep.subr.mxu0 0.0
    %3353 = vmatpush1.xpose.msra.mxu0 0.0
    %3354 = vmatprep.subr.mxu0 0.0
    %3355 = vmatpush1.xpose.msra.mxu0 0.0
    %3356 = vmatprep.subr.mxu0 0.0
    %3357 = vmatpush1.xpose.msra.mxu0 0.0
    %3358 = vmatprep.subr.mxu0 0.0
    %3359 = vmatpush1.xpose.msra.mxu0 0.0
    %3360 = vmatprep.subr.mxu0 0.0
    %3361 = vmatpush1.xpose.msra.mxu0 0.0
    %3362 = vmatprep.subr.mxu0 0.0
    %3363 = vmatpush1.xpose.msra.mxu0 0.0
    %3364 = vmatprep.subr.mxu0 0.0
    %3365 = vmatpush1.xpose.msra.mxu0 0.0
    %3366 = vmatprep.subr.mxu0 0.0
    %3367 = vmatpush1.xpose.msra.mxu0 0.0
    %3368 = vmatprep.subr.mxu0 0.0
    %3369 = vmatpush1.xpose.msra.mxu0 0.0
    %3370 = vmatprep.subr.mxu0 0.0
    %3371 = vmatpush1.xpose.msra.mxu0 0.0
    %3372 = vmatprep.subr.mxu0 0.0
    %3373 = vmatpush1.xpose.msra.mxu0 0.0
    %3374 = vmatprep.subr.mxu0 0.0
    %3375 = vmatpush1.xpose.msra.mxu0 0.0
    %3376 = vmatprep.subr.mxu0 0.0
    %3377 = vmatpush1.xpose.msra.mxu0 0.0
    %3378 = vmatprep.subr.mxu0 0.0
    %3379 = vmatpush1.xpose.msra.mxu0 0.0
    %3380 = vmatprep.subr.mxu0 0.0
    %3381 = vmatpush1.xpose.msra.mxu0 0.0
    %3382 = vmatprep.subr.mxu0 0.0
    %3383 = vmatpush1.xpose.msra.mxu0 0.0
    %3384 = vmatprep.subr.mxu0 0.0
    %3385 = vmatpush1.xpose.msra.mxu0 0.0
    %3386 = vmatprep.subr.mxu0 0.0
    %3387 = vmatpush1.xpose.msra.mxu0 0.0
    %3388 = vmatprep.subr.mxu0 0.0
    %3389 = vmatpush1.xpose.msra.mxu0 0.0
    %3390 = vmatprep.subr.mxu0 0.0
    %3391 = vmatpush1.xpose.msra.mxu0 0.0
    %3392 = vmatprep.subr.mxu0 0.0
    %3393 = vmatpush1.xpose.msra.mxu0 0.0
    %3394 = vmatprep.subr.mxu0 0.0
    %3395 = vmatpush1.xpose.msra.mxu0 0.0
    %3396 = vmatprep.subr.mxu0 0.0
    %3397 = vmatpush1.xpose.msra.mxu0 0.0
    %3398 = vmatprep.subr.mxu0 0.0
    %3399 = vmatpush1.xpose.msra.mxu0 0.0
    %3400 = vmatprep.subr.mxu0 0.0
    %3401 = vmatpush1.xpose.msra.mxu0 0.0
    %3402 = vmatprep.subr.mxu0 0.0
    %3403 = vmatpush1.xpose.msra.mxu0 0.0
    %3404 = vmatprep.mubr.f32.mxu0 0.0
    %3405 = vmatmul.mubr.f32.gmra.mrb[0].mxu0 %v3336
    %v3406 = vpop.f32.mrb[0].mxu0
    %v3407 = vadd.f32 0.0, %v3406
    %v3408 = vpop.f32.mrb[0].mxu0
    %3409 = vdwg.mxu0
    %v3410 = vmul.f32 %v3407, 0.25
    %v3411 = vsel %vm887, %v3410, -inf
    %3412 = vmax.xlane.f32.xlu0 %v3411
    %v3413 = vpop.xlane.xlu0 %3412
    %v3414 = vsub.f32 %v3410, %v3413
    %v3415 = vmul.f32 %v3414, 1.442695
    %v3416 = vpow.pop %v3415
    %v3417 = vsel %vm887, %v3416, 0.0
    %3418 = vadd.xlane.f32.xlu0 %v3417
    %v3419 = vpop.xlane.xlu0 %3418
    %v3420 = vrcp.pop %v3419
    %3421 = vrot.lane.b32.xlu0 %v3160, 80
    %v3422 = vpop.permute.xlu0 %3421
    %v3425 = vsel %vm887, %v3416, 0
    %3427 = vmatprep.subr.mxu0 0.0
    %3428 = vmatpush1.msra.mxu0 %v3422
    %3429 = vmatprep.subr.mxu0 0.0
    %3430 = vmatpush1.msra.mxu0 0.0
    %3431 = vmatprep.subr.mxu0 0.0
    %3432 = vmatpush1.msra.mxu0 0.0
    %3433 = vmatprep.subr.mxu0 0.0
    %3434 = vmatpush1.msra.mxu0 0.0
    %3435 = vmatprep.subr.mxu0 0.0
    %3436 = vmatpush1.msra.mxu0 0.0
    %3437 = vmatprep.subr.mxu0 0.0
    %3438 = vmatpush1.msra.mxu0 0.0
    %3439 = vmatprep.subr.mxu0 0.0
    %3440 = vmatpush1.msra.mxu0 0.0
    %3441 = vmatprep.subr.mxu0 0.0
    %3442 = vmatpush1.msra.mxu0 0.0
    %3443 = vmatprep.subr.mxu0 0.0
    %3444 = vmatpush1.msra.mxu0 0.0
    %3445 = vmatprep.subr.mxu0 0.0
    %3446 = vmatpush1.msra.mxu0 0.0
    %3447 = vmatprep.subr.mxu0 0.0
    %3448 = vmatpush1.msra.mxu0 0.0
    %3449 = vmatprep.subr.mxu0 0.0
    %3450 = vmatpush1.msra.mxu0 0.0
    %3451 = vmatprep.subr.mxu0 0.0
    %3452 = vmatpush1.msra.mxu0 0.0
    %3453 = vmatprep.subr.mxu0 0.0
    %3454 = vmatpush1.msra.mxu0 0.0
    %3455 = vmatprep.subr.mxu0 0.0
    %3456 = vmatpush1.msra.mxu0 0.0
    %3457 = vmatprep.subr.mxu0 0.0
    %3458 = vmatpush1.msra.mxu0 0.0
    %3459 = vmatprep.subr.mxu0 0.0
    %3460 = vmatpush1.msra.mxu0 0.0
    %3461 = vmatprep.subr.mxu0 0.0
    %3462 = vmatpush1.msra.mxu0 0.0
    %3463 = vmatprep.subr.mxu0 0.0
    %3464 = vmatpush1.msra.mxu0 0.0
    %3465 = vmatprep.subr.mxu0 0.0
    %3466 = vmatpush1.msra.mxu0 0.0
    %3467 = vmatprep.subr.mxu0 0.0
    %3468 = vmatpush1.msra.mxu0 0.0
    %3469 = vmatprep.subr.mxu0 0.0
    %3470 = vmatpush1.msra.mxu0 0.0
    %3471 = vmatprep.subr.mxu0 0.0
    %3472 = vmatpush1.msra.mxu0 0.0
    %3473 = vmatprep.subr.mxu0 0.0
    %3474 = vmatpush1.msra.mxu0 0.0
    %3475 = vmatprep.subr.mxu0 0.0
    %3476 = vmatpush1.msra.mxu0 0.0
    %3477 = vmatprep.subr.mxu0 0.0
    %3478 = vmatpush1.msra.mxu0 0.0
    %3479 = vmatprep.subr.mxu0 0.0
    %3480 = vmatpush1.msra.mxu0 0.0
    %3481 = vmatprep.subr.mxu0 0.0
    %3482 = vmatpush1.msra.mxu0 0.0
    %3483 = vmatprep.subr.mxu0 0.0
    %3484 = vmatpush1.msra.mxu0 0.0
    %3485 = vmatprep.subr.mxu0 0.0
    %3486 = vmatpush1.msra.mxu0 0.0
    %3487 = vmatprep.subr.mxu0 0.0
    %3488 = vmatpush1.msra.mxu0 0.0
    %3489 = vmatprep.subr.mxu0 0.0
    %3490 = vmatpush1.msra.mxu0 0.0
    %3491 = vmatprep.mubr.f32.mxu0 0.0
    %3492 = vmatmul.mubr.f32.gmra.mrb[0].mxu0 %v3425
    %v3493 = vpop.f32.mrb[0].mxu0
    %v3494 = vadd.f32 0.0, %v3493
    %v3495 = vpop.f32.mrb[0].mxu0
    %3496 = vdwg.mxu0
    %v3497 = vmul.f32 %v3494, %v3420
    %3499 = vrot.lane.b32.xlu0 %v3497, 16
    %v3500 = vpop.permute.xlu0 %3499
    %v3502 = vsel %vm549, %v3331, %v3500
    %v3504 = vsel %vm549, %v3073, 0
    %v3507 = vsel %vm549, %v3165, 0
    %3509 = vmatprep.subr.mxu0 0.0
    %3510 = vmatpush1.xpose.msra.mxu0 %v3507
    %3511 = vmatprep.subr.mxu0 0.0
    %3512 = vmatpush1.xpose.msra.mxu0 0.0
    %3513 = vmatprep.subr.mxu0 0.0
    %3514 = vmatpush1.xpose.msra.mxu0 0.0
    %3515 = vmatprep.subr.mxu0 0.0
    %3516 = vmatpush1.xpose.msra.mxu0 0.0
    %3517 = vmatprep.subr.mxu0 0.0
    %3518 = vmatpush1.xpose.msra.mxu0 0.0
    %3519 = vmatprep.subr.mxu0 0.0
    %3520 = vmatpush1.xpose.msra.mxu0 0.0
    %3521 = vmatprep.subr.mxu0 0.0
    %3522 = vmatpush1.xpose.msra.mxu0 0.0
    %3523 = vmatprep.subr.mxu0 0.0
    %3524 = vmatpush1.xpose.msra.mxu0 0.0
    %3525 = vmatprep.subr.mxu0 0.0
    %3526 = vmatpush1.xpose.msra.mxu0 0.0
    %3527 = vmatprep.subr.mxu0 0.0
    %3528 = vmatpush1.xpose.msra.mxu0 0.0
    %3529 = vmatprep.subr.mxu0 0.0
    %3530 = vmatpush1.xpose.msra.mxu0 0.0
    %3531 = vmatprep.subr.mxu0 0.0
    %3532 = vmatpush1.xpose.msra.mxu0 0.0
    %3533 = vmatprep.subr.mxu0 0.0
    %3534 = vmatpush1.xpose.msra.mxu0 0.0
    %3535 = vmatprep.subr.mxu0 0.0
    %3536 = vmatpush1.xpose.msra.mxu0 0.0
    %3537 = vmatprep.subr.mxu0 0.0
    %3538 = vmatpush1.xpose.msra.mxu0 0.0
    %3539 = vmatprep.subr.mxu0 0.0
    %3540 = vmatpush1.xpose.msra.mxu0 0.0
    %3541 = vmatprep.subr.mxu0 0.0
    %3542 = vmatpush1.xpose.msra.mxu0 0.0
    %3543 = vmatprep.subr.mxu0 0.0
    %3544 = vmatpush1.xpose.msra.mxu0 0.0
    %3545 = vmatprep.subr.mxu0 0.0
    %3546 = vmatpush1.xpose.msra.mxu0 0.0
    %3547 = vmatprep.subr.mxu0 0.0
    %3548 = vmatpush1.xpose.msra.mxu0 0.0
    %3549 = vmatprep.subr.mxu0 0.0
    %3550 = vmatpush1.xpose.msra.mxu0 0.0
    %3551 = vmatprep.subr.mxu0 0.0
    %3552 = vmatpush1.xpose.msra.mxu0 0.0
    %3553 = vmatprep.subr.mxu0 0.0
    %3554 = vmatpush1.xpose.msra.mxu0 0.0
    %3555 = vmatprep.subr.mxu0 0.0
    %3556 = vmatpush1.xpose.msra.mxu0 0.0
    %3557 = vmatprep.subr.mxu0 0.0
    %3558 = vmatpush1.xpose.msra.mxu0 0.0
    %3559 = vmatprep.subr.mxu0 0.0
    %3560 = vmatpush1.xpose.msra.mxu0 0.0
    %3561 = vmatprep.subr.mxu0 0.0
    %3562 = vmatpush1.xpose.msra.mxu0 0.0
    %3563 = vmatprep.subr.mxu0 0.0
    %3564 = vmatpush1.xpose.msra.mxu0 0.0
    %3565 = vmatprep.subr.mxu0 0.0
    %3566 = vmatpush1.xpose.msra.mxu0 0.0
    %3567 = vmatprep.subr.mxu0 0.0
    %3568 = vmatpush1.xpose.msra.mxu0 0.0
    %3569 = vmatprep.subr.mxu0 0.0
    %3570 = vmatpush1.xpose.msra.mxu0 0.0
    %3571 = vmatprep.subr.mxu0 0.0
    %3572 = vmatpush1.xpose.msra.mxu0 0.0
    %3573 = vmatprep.mubr.f32.mxu0 0.0
    %3574 = vmatmul.mubr.f32.gmra.mrb[0].mxu0 %v3504
    %v3575 = vpop.f32.mrb[0].mxu0
    %v3576 = vadd.f32 0.0, %v3575
    %v3577 = vpop.f32.mrb[0].mxu0
    %3578 = vdwg.mxu0
    %v3579 = vmul.f32 %v3576, 0.25
    %v3580 = vsel %vm887, %v3579, -inf
    %3581 = vmax.xlane.f32.xlu0 %v3580
    %v3582 = vpop.xlane.xlu0 %3581
    %v3583 = vsub.f32 %v3579, %v3582
    %v3584 = vmul.f32 %v3583, 1.442695
    %v3585 = vpow.pop %v3584
    %v3586 = vsel %vm887, %v3585, 0.0
    %3587 = vadd.xlane.f32.xlu0 %v3586
    %v3588 = vpop.xlane.xlu0 %3587
    %v3589 = vrcp.pop %v3588
    %3590 = vrot.lane.b32.xlu0 %v3165, 96
    %v3591 = vpop.permute.xlu0 %3590
    %v3594 = vsel %vm887, %v3585, 0
    %3596 = vmatprep.subr.mxu0 0.0
    %3597 = vmatpush1.msra.mxu0 %v3591
    %3598 = vmatprep.subr.mxu0 0.0
    %3599 = vmatpush1.msra.mxu0 0.0
    %3600 = vmatprep.subr.mxu0 0.0
    %3601 = vmatpush1.msra.mxu0 0.0
    %3602 = vmatprep.subr.mxu0 0.0
    %3603 = vmatpush1.msra.mxu0 0.0
    %3604 = vmatprep.subr.mxu0 0.0
    %3605 = vmatpush1.msra.mxu0 0.0
    %3606 = vmatprep.subr.mxu0 0.0
    %3607 = vmatpush1.msra.mxu0 0.0
    %3608 = vmatprep.subr.mxu0 0.0
    %3609 = vmatpush1.msra.mxu0 0.0
    %3610 = vmatprep.subr.mxu0 0.0
    %3611 = vmatpush1.msra.mxu0 0.0
    %3612 = vmatprep.subr.mxu0 0.0
    %3613 = vmatpush1.msra.mxu0 0.0
    %3614 = vmatprep.subr.mxu0 0.0
    %3615 = vmatpush1.msra.mxu0 0.0
    %3616 = vmatprep.subr.mxu0 0.0
    %3617 = vmatpush1.msra.mxu0 0.0
    %3618 = vmatprep.subr.mxu0 0.0
    %3619 = vmatpush1.msra.mxu0 0.0
    %3620 = vmatprep.subr.mxu0 0.0
    %3621 = vmatpush1.msra.mxu0 0.0
    %3622 = vmatprep.subr.mxu0 0.0
    %3623 = vmatpush1.msra.mxu0 0.0
    %3624 = vmatprep.subr.mxu0 0.0
    %3625 = vmatpush1.msra.mxu0 0.0
    %3626 = vmatprep.subr.mxu0 0.0
    %3627 = vmatpush1.msra.mxu0 0.0
    %3628 = vmatprep.subr.mxu0 0.0
    %3629 = vmatpush1.msra.mxu0 0.0
    %3630 = vmatprep.subr.mxu0 0.0
    %3631 = vmatpush1.msra.mxu0 0.0
    %3632 = vmatprep.subr.mxu0 0.0
    %3633 = vmatpush1.msra.mxu0 0.0
    %3634 = vmatprep.subr.mxu0 0.0
    %3635 = vmatpush1.msra.mxu0 0.0
    %3636 = vmatprep.subr.mxu0 0.0
    %3637 = vmatpush1.msra.mxu0 0.0
    %3638 = vmatprep.subr.mxu0 0.0
    %3639 = vmatpush1.msra.mxu0 0.0
    %3640 = vmatprep.subr.mxu0 0.0
    %3641 = vmatpush1.msra.mxu0 0.0
    %3642 = vmatprep.subr.mxu0 0.0
    %3643 = vmatpush1.msra.mxu0 0.0
    %3644 = vmatprep.subr.mxu0 0.0
    %3645 = vmatpush1.msra.mxu0 0.0
    %3646 = vmatprep.subr.mxu0 0.0
    %3647 = vmatpush1.msra.mxu0 0.0
    %3648 = vmatprep.subr.mxu0 0.0
    %3649 = vmatpush1.msra.mxu0 0.0
    %3650 = vmatprep.subr.mxu0 0.0
    %3651 = vmatpush1.msra.mxu0 0.0
    %3652 = vmatprep.subr.mxu0 0.0
    %3653 = vmatpush1.msra.mxu0 0.0
    %3654 = vmatprep.subr.mxu0 0.0
    %3655 = vmatpush1.msra.mxu0 0.0
    %3656 = vmatprep.subr.mxu0 0.0
    %3657 = vmatpush1.msra.mxu0 0.0
    %3658 = vmatprep.subr.mxu0 0.0
    %3659 = vmatpush1.msra.mxu0 0.0
    %3660 = vmatprep.mubr.f32.mxu0 0.0
    %3661 = vmatmul.mubr.f32.gmra.mrb[0].mxu0 %v3594
    %v3662 = vpop.f32.mrb[0].mxu0
    %v3663 = vadd.f32 0.0, %v3662
    %v3664 = vpop.f32.mrb[0].mxu0
    %3665 = vdwg.mxu0
    %v3666 = vmul.f32 %v3663, %v3589
    %3667 = vrot.lane.b32.xlu0 %v3073, 112
    %v3668 = vpop.permute.xlu0 %3667
    %3669 = vrot.lane.b32.xlu0 %v3165, 112
    %v3670 = vpop.permute.xlu0 %3669
    %v3671 = vsel %vm549, %v3668, 0
    %v3673 = vsel %vm549, %v3670, 0
    %3675 = vmatprep.subr.mxu0 0.0
    %3676 = vmatpush1.xpose.msra.mxu0 %v3673
    %3677 = vmatprep.subr.mxu0 0.0
    %3678 = vmatpush1.xpose.msra.mxu0 0.0
    %3679 = vmatprep.subr.mxu0 0.0
    %3680 = vmatpush1.xpose.msra.mxu0 0.0
    %3681 = vmatprep.subr.mxu0 0.0
    %3682 = vmatpush1.xpose.msra.mxu0 0.0
    %3683 = vmatprep.subr.mxu0 0.0
    %3684 = vmatpush1.xpose.msra.mxu0 0.0
    %3685 = vmatprep.subr.mxu0 0.0
    %3686 = vmatpush1.xpose.msra.mxu0 0.0
    %3687 = vmatprep.subr.mxu0 0.0
    %3688 = vmatpush1.xpose.msra.mxu0 0.0
    %3689 = vmatprep.subr.mxu0 0.0
    %3690 = vmatpush1.xpose.msra.mxu0 0.0
    %3691 = vmatprep.subr.mxu0 0.0
    %3692 = vmatpush1.xpose.msra.mxu0 0.0
    %3693 = vmatprep.subr.mxu0 0.0
    %3694 = vmatpush1.xpose.msra.mxu0 0.0
    %3695 = vmatprep.subr.mxu0 0.0
    %3696 = vmatpush1.xpose.msra.mxu0 0.0
    %3697 = vmatprep.subr.mxu0 0.0
    %3698 = vmatpush1.xpose.msra.mxu0 0.0
    %3699 = vmatprep.subr.mxu0 0.0
    %3700 = vmatpush1.xpose.msra.mxu0 0.0
    %3701 = vmatprep.subr.mxu0 0.0
    %3702 = vmatpush1.xpose.msra.mxu0 0.0
    %3703 = vmatprep.subr.mxu0 0.0
    %3704 = vmatpush1.xpose.msra.mxu0 0.0
    %3705 = vmatprep.subr.mxu0 0.0
    %3706 = vmatpush1.xpose.msra.mxu0 0.0
    %3707 = vmatprep.subr.mxu0 0.0
    %3708 = vmatpush1.xpose.msra.mxu0 0.0
    %3709 = vmatprep.subr.mxu0 0.0
    %3710 = vmatpush1.xpose.msra.mxu0 0.0
    %3711 = vmatprep.subr.mxu0 0.0
    %3712 = vmatpush1.xpose.msra.mxu0 0.0
    %3713 = vmatprep.subr.mxu0 0.0
    %3714 = vmatpush1.xpose.msra.mxu0 0.0
    %3715 = vmatprep.subr.mxu0 0.0
    %3716 = vmatpush1.xpose.msra.mxu0 0.0
    %3717 = vmatprep.subr.mxu0 0.0
    %3718 = vmatpush1.xpose.msra.mxu0 0.0
    %3719 = vmatprep.subr.mxu0 0.0
    %3720 = vmatpush1.xpose.msra.mxu0 0.0
    %3721 = vmatprep.subr.mxu0 0.0
    %3722 = vmatpush1.xpose.msra.mxu0 0.0
    %3723 = vmatprep.subr.mxu0 0.0
    %3724 = vmatpush1.xpose.msra.mxu0 0.0
    %3725 = vmatprep.subr.mxu0 0.0
    %3726 = vmatpush1.xpose.msra.mxu0 0.0
    %3727 = vmatprep.subr.mxu0 0.0
    %3728 = vmatpush1.xpose.msra.mxu0 0.0
    %3729 = vmatprep.subr.mxu0 0.0
    %3730 = vmatpush1.xpose.msra.mxu0 0.0
    %3731 = vmatprep.subr.mxu0 0.0
    %3732 = vmatpush1.xpose.msra.mxu0 0.0
    %3733 = vmatprep.subr.mxu0 0.0
    %3734 = vmatpush1.xpose.msra.mxu0 0.0
    %3735 = vmatprep.subr.mxu0 0.0
    %3736 = vmatpush1.xpose.msra.mxu0 0.0
    %3737 = vmatprep.subr.mxu0 0.0
    %3738 = vmatpush1.xpose.msra.mxu0 0.0
    %3739 = vmatprep.mubr.f32.mxu0 0.0
    %3740 = vmatmul.mubr.f32.gmra.mrb[0].mxu0 %v3671
    %v3741 = vpop.f32.mrb[0].mxu0
    %v3742 = vadd.f32 0.0, %v3741
    %v3743 = vpop.f32.mrb[0].mxu0
    %3744 = vdwg.mxu0
    %v3745 = vmul.f32 %v3742, 0.25
    %v3746 = vsel %vm887, %v3745, -inf
    %3747 = vmax.xlane.f32.xlu0 %v3746
    %v3748 = vpop.xlane.xlu0 %3747
    %v3749 = vsub.f32 %v3745, %v3748
    %v3750 = vmul.f32 %v3749, 1.442695
    %v3751 = vpow.pop %v3750
    %v3752 = vsel %vm887, %v3751, 0.0
    %3753 = vadd.xlane.f32.xlu0 %v3752
    %v3754 = vpop.xlane.xlu0 %3753
    %v3755 = vrcp.pop %v3754
    %3756 = vrot.lane.b32.xlu0 %v3165, 80
    %v3757 = vpop.permute.xlu0 %3756
    %v3760 = vsel %vm887, %v3751, 0
    %3762 = vmatprep.subr.mxu0 0.0
    %3763 = vmatpush1.msra.mxu0 %v3757
    %3764 = vmatprep.subr.mxu0 0.0
    %3765 = vmatpush1.msra.mxu0 0.0
    %3766 = vmatprep.subr.mxu0 0.0
    %3767 = vmatpush1.msra.mxu0 0.0
    %3768 = vmatprep.subr.mxu0 0.0
    %3769 = vmatpush1.msra.mxu0 0.0
    %3770 = vmatprep.subr.mxu0 0.0
    %3771 = vmatpush1.msra.mxu0 0.0
    %3772 = vmatprep.subr.mxu0 0.0
    %3773 = vmatpush1.msra.mxu0 0.0
    %3774 = vmatprep.subr.mxu0 0.0
    %3775 = vmatpush1.msra.mxu0 0.0
    %3776 = vmatprep.subr.mxu0 0.0
    %3777 = vmatpush1.msra.mxu0 0.0
    %3778 = vmatprep.subr.mxu0 0.0
    %3779 = vmatpush1.msra.mxu0 0.0
    %3780 = vmatprep.subr.mxu0 0.0
    %3781 = vmatpush1.msra.mxu0 0.0
    %3782 = vmatprep.subr.mxu0 0.0
    %3783 = vmatpush1.msra.mxu0 0.0
    %3784 = vmatprep.subr.mxu0 0.0
    %3785 = vmatpush1.msra.mxu0 0.0
    %3786 = vmatprep.subr.mxu0 0.0
    %3787 = vmatpush1.msra.mxu0 0.0
    %3788 = vmatprep.subr.mxu0 0.0
    %3789 = vmatpush1.msra.mxu0 0.0
    %3790 = vmatprep.subr.mxu0 0.0
    %3791 = vmatpush1.msra.mxu0 0.0
    %3792 = vmatprep.subr.mxu0 0.0
    %3793 = vmatpush1.msra.mxu0 0.0
    %3794 = vmatprep.subr.mxu0 0.0
    %3795 = vmatpush1.msra.mxu0 0.0
    %3796 = vmatprep.subr.mxu0 0.0
    %3797 = vmatpush1.msra.mxu0 0.0
    %3798 = vmatprep.subr.mxu0 0.0
    %3799 = vmatpush1.msra.mxu0 0.0
    %3800 = vmatprep.subr.mxu0 0.0
    %3801 = vmatpush1.msra.mxu0 0.0
    %3802 = vmatprep.subr.mxu0 0.0
    %3803 = vmatpush1.msra.mxu0 0.0
    %3804 = vmatprep.subr.mxu0 0.0
    %3805 = vmatpush1.msra.mxu0 0.0
    %3806 = vmatprep.subr.mxu0 0.0
    %3807 = vmatpush1.msra.mxu0 0.0
    %3808 = vmatprep.subr.mxu0 0.0
    %3809 = vmatpush1.msra.mxu0 0.0
    %3810 = vmatprep.subr.mxu0 0.0
    %3811 = vmatpush1.msra.mxu0 0.0
    %3812 = vmatprep.subr.mxu0 0.0
    %3813 = vmatpush1.msra.mxu0 0.0
    %3814 = vmatprep.subr.mxu0 0.0
    %3815 = vmatpush1.msra.mxu0 0.0
    %3816 = vmatprep.subr.mxu0 0.0
    %3817 = vmatpush1.msra.mxu0 0.0
    %3818 = vmatprep.subr.mxu0 0.0
    %3819 = vmatpush1.msra.mxu0 0.0
    %3820 = vmatprep.subr.mxu0 0.0
    %3821 = vmatpush1.msra.mxu0 0.0
    %3822 = vmatprep.subr.mxu0 0.0
    %3823 = vmatpush1.msra.mxu0 0.0
    %3824 = vmatprep.subr.mxu0 0.0
    %3825 = vmatpush1.msra.mxu0 0.0
    %3826 = vmatprep.mubr.f32.mxu0 0.0
    %3827 = vmatmul.mubr.f32.gmra.mrb[0].mxu0 %v3760
    %v3828 = vpop.f32.mrb[0].mxu0
    %v3829 = vadd.f32 0.0, %v3828
    %v3830 = vpop.f32.mrb[0].mxu0
    %3831 = vdwg.mxu0
    %v3832 = vmul.f32 %v3829, %v3755
    %3834 = vrot.lane.b32.xlu0 %v3832, 16
    %v3835 = vpop.permute.xlu0 %3834
    %v3837 = vsel %vm549, %v3666, %v3835
    %v3838 = vld [vmem:[%s13] sm:$0xff]
    %v3839 = vld [vmem:[%s13 + $0x8] sm:$0xff]
    %v3840 = vld [vmem:[%s13 + $0x10] sm:$0xff]
    %v3841 = vld [vmem:[%s13 + $0x18] sm:$0xff]
    %v3842 = vld [vmem:[#allocation7] sm:$0x1]
    %v3844 = vlaneseq
    %v3845 = vshrl.u32 %v3844, 7
    %v3846 = vsub.s32 0, %v3845
    %v3847 = vrot.slane %v3842, %v3846
    %v3850 = vsel %vm642, %v3502, 0
    %v3853 = vsel %vm642, %v3837, 0
    %3855 = vmatprep.subr.mxu0 0.0
    %3856 = vmatpush1.msra.mxu0 %v3838
    %3857 = vmatprep.subr.mxu0 0.0
    %3858 = vmatpush1.msra.mxu0 %v3839
    %3859 = vmatprep.subr.mxu0 0.0
    %3860 = vmatpush1.msra.mxu0 %v3840
    %3861 = vmatprep.subr.mxu0 0.0
    %3862 = vmatpush1.msra.mxu0 %v3841
    %3863 = vmatprep.subr.mxu0 0.0
    %3864 = vmatpush1.msra.mxu0 0.0
    %3865 = vmatprep.subr.mxu0 0.0
    %3866 = vmatpush1.msra.mxu0 0.0
    %3867 = vmatprep.subr.mxu0 0.0
    %3868 = vmatpush1.msra.mxu0 0.0
    %3869 = vmatprep.subr.mxu0 0.0
    %3870 = vmatpush1.msra.mxu0 0.0
    %3871 = vmatprep.subr.mxu0 0.0
    %3872 = vmatpush1.msra.mxu0 0.0
    %3873 = vmatprep.subr.mxu0 0.0
    %3874 = vmatpush1.msra.mxu0 0.0
    %3875 = vmatprep.subr.mxu0 0.0
    %3876 = vmatpush1.msra.mxu0 0.0
    %3877 = vmatprep.subr.mxu0 0.0
    %3878 = vmatpush1.msra.mxu0 0.0
    %3879 = vmatprep.subr.mxu0 0.0
    %3880 = vmatpush1.msra.mxu0 0.0
    %3881 = vmatprep.subr.mxu0 0.0
    %3882 = vmatpush1.msra.mxu0 0.0
    %3883 = vmatprep.subr.mxu0 0.0
    %3884 = vmatpush1.msra.mxu0 0.0
    %3885 = vmatprep.subr.mxu0 0.0
    %3886 = vmatpush1.msra.mxu0 0.0
    %3887 = vmatprep.subr.mxu0 0.0
    %3888 = vmatpush1.msra.mxu0 0.0
    %3889 = vmatprep.subr.mxu0 0.0
    %3890 = vmatpush1.msra.mxu0 0.0
    %3891 = vmatprep.subr.mxu0 0.0
    %3892 = vmatpush1.msra.mxu0 0.0
    %3893 = vmatprep.subr.mxu0 0.0
    %3894 = vmatpush1.msra.mxu0 0.0
    %3895 = vmatprep.subr.mxu0 0.0
    %3896 = vmatpush1.msra.mxu0 0.0
    %3897 = vmatprep.subr.mxu0 0.0
    %3898 = vmatpush1.msra.mxu0 0.0
    %3899 = vmatprep.subr.mxu0 0.0
    %3900 = vmatpush1.msra.mxu0 0.0
    %3901 = vmatprep.subr.mxu0 0.0
    %3902 = vmatpush1.msra.mxu0 0.0
    %3903 = vmatprep.subr.mxu0 0.0
    %3904 = vmatpush1.msra.mxu0 0.0
    %3905 = vmatprep.subr.mxu0 0.0
    %3906 = vmatpush1.msra.mxu0 0.0
    %3907 = vmatprep.subr.mxu0 0.0
    %3908 = vmatpush1.msra.mxu0 0.0
    %3909 = vmatprep.subr.mxu0 0.0
    %3910 = vmatpush1.msra.mxu0 0.0
    %3911 = vmatprep.subr.mxu0 0.0
    %3912 = vmatpush1.msra.mxu0 0.0
    %3913 = vmatprep.subr.mxu0 0.0
    %3914 = vmatpush1.msra.mxu0 0.0
    %3915 = vmatprep.subr.mxu0 0.0
    %3916 = vmatpush1.msra.mxu0 0.0
    %3917 = vmatprep.subr.mxu0 0.0
    %3918 = vmatpush1.msra.mxu0 0.0
    %3919 = vmatprep.mubr.f32.mxu0 0.0
    %3920 = vmatmul.mubr.f32.gmra.mrb[0].mxu0 %v3850
    %v3921 = vpop.f32.mrb[0].mxu0
    %v3922 = vadd.f32 %v3847, %v3921
    %v3923 = vpop.f32.mrb[0].mxu0
    %3924 = vmatprep.mubr.f32.mxu0 0.0
    %3925 = vmatmul.mubr.f32.gmra.mrb[0].mxu0 %v3853
    %v3926 = vpop.f32.mrb[0].mxu0
    %v3927 = vadd.f32 %v3847, %v3926
    %v3928 = vpop.f32.mrb[0].mxu0
    %3929 = vdwg.mxu0
    %v3930 = vadd.f32 %v2982, %v3922
    %v3931 = vadd.f32 %v2983, %v3927
    %v3932 = vld [vmem:[#allocation15] sm:$0x1]
    %v3933 = vld [vmem:[#allocation13] sm:$0x1]
    %v3934 = vsel %vm642, %v3930, 0.0
    %3935 = vadd.xlane.f32.xlu0 %v3934
    %v3936 = vpop.xlane.xlu0 %3935
    %v3937 = vsel %vm642, %v3931, 0.0
    %3938 = vadd.xlane.f32.xlu0 %v3937
    %v3939 = vpop.xlane.xlu0 %3938
    %v3940 = vmul.f32 %v3936, %v1583
    %v3941 = vmul.f32 %v3939, %v1583
    %v3942 = vsub.f32 %v3930, %v3940
    %v3943 = vsub.f32 %v3931, %v3941
    %v3944 = vmul.f32 %v3942, %v3942
    %v3945 = vmul.f32 %v3943, %v3943
    %v3946 = vsel %vm642, %v3944, 0.0
    %3947 = vadd.xlane.f32.xlu0 %v3946
    %v3948 = vpop.xlane.xlu0 %3947
    %v3949 = vsel %vm642, %v3945, 0.0
    %3950 = vadd.xlane.f32.xlu0 %v3949
    %v3951 = vpop.xlane.xlu0 %3950
    %v3952 = vmul.f32 %v3948, %v1583
    %v3953 = vmul.f32 %v3951, %v1583
    %v3954 = vadd.f32 %v3952, 1e-05
    %v3955 = vadd.f32 %v3953, 1e-05
    %v3956 = vrsqrt.pop %v3954
    %v3957 = vrsqrt.pop %v3955
    %v3958 = vmul.f32 %v3942, %v3956
    %v3959 = vmul.f32 %v3943, %v3957
    %v3961 = vlaneseq
    %v3962 = vshrl.u32 %v3961, 7
    %v3963 = vsub.s32 0, %v3962
    %v3964 = vrot.slane %v3932, %v3963
    %v3966 = vmul.f32 %v3958, %v3964
    %v3967 = vmul.f32 %v3959, %v3964
    %v3969 = vlaneseq
    %v3970 = vshrl.u32 %v3969, 7
    %v3971 = vsub.s32 0, %v3970
    %v3972 = vrot.slane %v3933, %v3971
    %v3974 = vadd.f32 %v3966, %v3972
    %v3975 = vadd.f32 %v3967, %v3972
    %v3976 = vld [vmem:[%s41] sm:$0xff]
    %v3977 = vld [vmem:[%s41 + $0x8] sm:$0xff]
    %v3978 = vld [vmem:[%s41 + $0x10] sm:$0xff]
    %v3979 = vld [vmem:[%s41 + $0x18] sm:$0xff]
    %v3980 = vld [vmem:[#allocation2] sm:$0x1]
    %v3982 = vlaneseq
    %v3983 = vshrl.u32 %v3982, 7
    %v3984 = vsub.s32 0, %v3983
    %v3985 = vrot.slane %v3980, %v3984
    %v3988 = vsel %vm642, %v3974, 0
    %v3991 = vsel %vm642, %v3975, 0
    %3993 = vmatprep.subr.mxu0 0.0
    %3994 = vmatpush1.msra.mxu0 %v3976
    %3995 = vmatprep.subr.mxu0 0.0
    %3996 = vmatpush1.msra.mxu0 %v3977
    %3997 = vmatprep.subr.mxu0 0.0
    %3998 = vmatpush1.msra.mxu0 %v3978
    %3999 = vmatprep.subr.mxu0 0.0
    %4000 = vmatpush1.msra.mxu0 %v3979
    %4001 = vmatprep.subr.mxu0 0.0
    %4002 = vmatpush1.msra.mxu0 0.0
    %4003 = vmatprep.subr.mxu0 0.0
    %4004 = vmatpush1.msra.mxu0 0.0
    %4005 = vmatprep.subr.mxu0 0.0
    %4006 = vmatpush1.msra.mxu0 0.0
    %4007 = vmatprep.subr.mxu0 0.0
    %4008 = vmatpush1.msra.mxu0 0.0
    %4009 = vmatprep.subr.mxu0 0.0
    %4010 = vmatpush1.msra.mxu0 0.0
    %4011 = vmatprep.subr.mxu0 0.0
    %4012 = vmatpush1.msra.mxu0 0.0
    %4013 = vmatprep.subr.mxu0 0.0
    %4014 = vmatpush1.msra.mxu0 0.0
    %4015 = vmatprep.subr.mxu0 0.0
    %4016 = vmatpush1.msra.mxu0 0.0
    %4017 = vmatprep.subr.mxu0 0.0
    %4018 = vmatpush1.msra.mxu0 0.0
    %4019 = vmatprep.subr.mxu0 0.0
    %4020 = vmatpush1.msra.mxu0 0.0
    %4021 = vmatprep.subr.mxu0 0.0
    %4022 = vmatpush1.msra.mxu0 0.0
    %4023 = vmatprep.subr.mxu0 0.0
    %4024 = vmatpush1.msra.mxu0 0.0
    %4025 = vmatprep.subr.mxu0 0.0
    %4026 = vmatpush1.msra.mxu0 0.0
    %4027 = vmatprep.subr.mxu0 0.0
    %4028 = vmatpush1.msra.mxu0 0.0
    %4029 = vmatprep.subr.mxu0 0.0
    %4030 = vmatpush1.msra.mxu0 0.0
    %4031 = vmatprep.subr.mxu0 0.0
    %4032 = vmatpush1.msra.mxu0 0.0
    %4033 = vmatprep.subr.mxu0 0.0
    %4034 = vmatpush1.msra.mxu0 0.0
    %4035 = vmatprep.subr.mxu0 0.0
    %4036 = vmatpush1.msra.mxu0 0.0
    %4037 = vmatprep.subr.mxu0 0.0
    %4038 = vmatpush1.msra.mxu0 0.0
    %4039 = vmatprep.subr.mxu0 0.0
    %4040 = vmatpush1.msra.mxu0 0.0
    %4041 = vmatprep.subr.mxu0 0.0
    %4042 = vmatpush1.msra.mxu0 0.0
    %4043 = vmatprep.subr.mxu0 0.0
    %4044 = vmatpush1.msra.mxu0 0.0
    %4045 = vmatprep.subr.mxu0 0.0
    %4046 = vmatpush1.msra.mxu0 0.0
    %4047 = vmatprep.subr.mxu0 0.0
    %4048 = vmatpush1.msra.mxu0 0.0
    %4049 = vmatprep.subr.mxu0 0.0
    %4050 = vmatpush1.msra.mxu0 0.0
    %4051 = vmatprep.subr.mxu0 0.0
    %4052 = vmatpush1.msra.mxu0 0.0
    %4053 = vmatprep.subr.mxu0 0.0
    %4054 = vmatpush1.msra.mxu0 0.0
    %4055 = vmatprep.subr.mxu0 0.0
    %4056 = vmatpush1.msra.mxu0 0.0
    %4057 = vmatprep.mubr.f32.mxu0 0.0
    %4058 = vmatmul.mubr.f32.gmra.mrb[0].mxu0 %v3988
    %v4059 = vpop.f32.mrb[0].mxu0
    %v4060 = vadd.f32 %v3985, %v4059
    %v4061 = vpop.f32.mrb[0].mxu0
    %4062 = vmatprep.mubr.f32.mxu0 0.0
    %4063 = vmatmul.mubr.f32.gmra.mrb[0].mxu0 %v3991
    %v4064 = vpop.f32.mrb[0].mxu0
    %v4065 = vadd.f32 %v3985, %v4064
    %v4066 = vpop.f32.mrb[0].mxu0
    %4067 = vdwg.mxu0
    %v4068 = vmax.f32 %v4060, 0.0
    %v4069 = vmax.f32 %v4065, 0.0
    %v4070 = vld [vmem:[%s43] sm:$0xff]
    %v4071 = vld [vmem:[%s43 + $0x8] sm:$0xff]
    %v4072 = vld [vmem:[%s43 + $0x10] sm:$0xff]
    %v4073 = vld [vmem:[%s43 + $0x18] sm:$0xff]
    %v4074 = vld [vmem:[%s43 + $0x20] sm:$0xff]
    %v4075 = vld [vmem:[%s43 + $0x28] sm:$0xff]
    %v4076 = vld [vmem:[%s43 + $0x30] sm:$0xff]
    %v4077 = vld [vmem:[%s43 + $0x38] sm:$0xff]
    %v4078 = vld [vmem:[#allocation4] sm:$0x1]
    %v4080 = vlaneseq
    %v4081 = vshrl.u32 %v4080, 7
    %v4082 = vsub.s32 0, %v4081
    %v4083 = vrot.slane %v4078, %v4082
    %v4086 = vsel %vm1729, %v4068, 0
    %v4089 = vsel %vm1729, %v4069, 0
    %4091 = vmatprep.subr.mxu0 0.0
    %4092 = vmatpush1.msra.mxu0 %v4070
    %4093 = vmatprep.subr.mxu0 0.0
    %4094 = vmatpush1.msra.mxu0 %v4071
    %4095 = vmatprep.subr.mxu0 0.0
    %4096 = vmatpush1.msra.mxu0 %v4072
    %4097 = vmatprep.subr.mxu0 0.0
    %4098 = vmatpush1.msra.mxu0 %v4073
    %4099 = vmatprep.subr.mxu0 0.0
    %4100 = vmatpush1.msra.mxu0 %v4074
    %4101 = vmatprep.subr.mxu0 0.0
    %4102 = vmatpush1.msra.mxu0 %v4075
    %4103 = vmatprep.subr.mxu0 0.0
    %4104 = vmatpush1.msra.mxu0 %v4076
    %4105 = vmatprep.subr.mxu0 0.0
    %4106 = vmatpush1.msra.mxu0 %v4077
    %4107 = vmatprep.subr.mxu0 0.0
    %4108 = vmatpush1.msra.mxu0 0.0
    %4109 = vmatprep.subr.mxu0 0.0
    %4110 = vmatpush1.msra.mxu0 0.0
    %4111 = vmatprep.subr.mxu0 0.0
    %4112 = vmatpush1.msra.mxu0 0.0
    %4113 = vmatprep.subr.mxu0 0.0
    %4114 = vmatpush1.msra.mxu0 0.0
    %4115 = vmatprep.subr.mxu0 0.0
    %4116 = vmatpush1.msra.mxu0 0.0
    %4117 = vmatprep.subr.mxu0 0.0
    %4118 = vmatpush1.msra.mxu0 0.0
    %4119 = vmatprep.subr.mxu0 0.0
    %4120 = vmatpush1.msra.mxu0 0.0
    %4121 = vmatprep.subr.mxu0 0.0
    %4122 = vmatpush1.msra.mxu0 0.0
    %4123 = vmatprep.subr.mxu0 0.0
    %4124 = vmatpush1.msra.mxu0 0.0
    %4125 = vmatprep.subr.mxu0 0.0
    %4126 = vmatpush1.msra.mxu0 0.0
    %4127 = vmatprep.subr.mxu0 0.0
    %4128 = vmatpush1.msra.mxu0 0.0
    %4129 = vmatprep.subr.mxu0 0.0
    %4130 = vmatpush1.msra.mxu0 0.0
    %4131 = vmatprep.subr.mxu0 0.0
    %4132 = vmatpush1.msra.mxu0 0.0
    %4133 = vmatprep.subr.mxu0 0.0
    %4134 = vmatpush1.msra.mxu0 0.0
    %4135 = vmatprep.subr.mxu0 0.0
    %4136 = vmatpush1.msra.mxu0 0.0
    %4137 = vmatprep.subr.mxu0 0.0
    %4138 = vmatpush1.msra.mxu0 0.0
    %4139 = vmatprep.subr.mxu0 0.0
    %4140 = vmatpush1.msra.mxu0 0.0
    %4141 = vmatprep.subr.mxu0 0.0
    %4142 = vmatpush1.msra.mxu0 0.0
    %4143 = vmatprep.subr.mxu0 0.0
    %4144 = vmatpush1.msra.mxu0 0.0
    %4145 = vmatprep.subr.mxu0 0.0
    %4146 = vmatpush1.msra.mxu0 0.0
    %4147 = vmatprep.subr.mxu0 0.0
    %4148 = vmatpush1.msra.mxu0 0.0
    %4149 = vmatprep.subr.mxu0 0.0
    %4150 = vmatpush1.msra.mxu0 0.0
    %4151 = vmatprep.subr.mxu0 0.0
    %4152 = vmatpush1.msra.mxu0 0.0
    %4153 = vmatprep.subr.mxu0 0.0
    %4154 = vmatpush1.msra.mxu0 0.0
    %4155 = vmatprep.mubr.f32.mxu0 0.0
    %4156 = vmatmul.mubr.f32.gmra.mrb[0].mxu0 %v4086
    %v4157 = vpop.f32.mrb[0].mxu0
    %v4158 = vadd.f32 %v4083, %v4157
    %v4159 = vpop.f32.mrb[0].mxu0
    %4160 = vmatprep.mubr.f32.mxu0 0.0
    %4161 = vmatmul.mubr.f32.gmra.mrb[0].mxu0 %v4089
    %v4162 = vpop.f32.mrb[0].mxu0
    %v4163 = vadd.f32 %v4083, %v4162
    %v4164 = vpop.f32.mrb[0].mxu0
    %4165 = vdwg.mxu0
    %v4166 = vadd.f32 %v3974, %v4158
    %v4167 = vadd.f32 %v3975, %v4163
    %v4168 = vld [vmem:[#allocation18] sm:$0x1]
    %v4169 = vld [vmem:[#allocation16] sm:$0x1]
    %v4170 = vsel %vm642, %v4166, 0.0
    %4171 = vadd.xlane.f32.xlu0 %v4170
    %v4172 = vpop.xlane.xlu0 %4171
    %v4173 = vsel %vm642, %v4167, 0.0
    %4174 = vadd.xlane.f32.xlu0 %v4173
    %v4175 = vpop.xlane.xlu0 %4174
    %v4176 = vmul.f32 %v4172, %v1583
    %v4177 = vmul.f32 %v4175, %v1583
    %v4178 = vsub.f32 %v4166, %v4176
    %v4179 = vsub.f32 %v4167, %v4177
    %v4180 = vmul.f32 %v4178, %v4178
    %v4181 = vmul.f32 %v4179, %v4179
    %v4182 = vsel %vm642, %v4180, 0.0
    %4183 = vadd.xlane.f32.xlu0 %v4182
    %v4184 = vpop.xlane.xlu0 %4183
    %v4185 = vsel %vm642, %v4181, 0.0
    %4186 = vadd.xlane.f32.xlu0 %v4185
    %v4187 = vpop.xlane.xlu0 %4186
    %v4188 = vmul.f32 %v4184, %v1583
    %v4189 = vmul.f32 %v4187, %v1583
    %v4190 = vadd.f32 %v4188, 1e-05
    %v4191 = vadd.f32 %v4189, 1e-05
    %v4192 = vrsqrt.pop %v4190
    %v4193 = vrsqrt.pop %v4191
    %v4194 = vmul.f32 %v4178, %v4192
    %v4195 = vmul.f32 %v4179, %v4193
    %v4197 = vlaneseq
    %v4198 = vshrl.u32 %v4197, 7
    %v4199 = vsub.s32 0, %v4198
    %v4200 = vrot.slane %v4168, %v4199
    %v4202 = vmul.f32 %v4194, %v4200
    %v4203 = vmul.f32 %v4195, %v4200
    %v4205 = vlaneseq
    %v4206 = vshrl.u32 %v4205, 7
    %v4207 = vsub.s32 0, %v4206
    %v4208 = vrot.slane %v4169, %v4207
    %v4210 = vadd.f32 %v4202, %v4208
    %v4211 = vadd.f32 %v4203, %v4208
    %v4212 = vld [vmem:[#allocation25] sm:$0x1]
    %v4213 = vld [vmem:[#allocation24] sm:$0x1]
    %v4214 = vsel %vm642, %v4210, 0.0
    %4215 = vadd.xlane.f32.xlu0 %v4214
    %v4216 = vpop.xlane.xlu0 %4215
    %v4217 = vsel %vm642, %v4211, 0.0
    %4218 = vadd.xlane.f32.xlu0 %v4217
    %v4219 = vpop.xlane.xlu0 %4218
    %v4220 = vmul.f32 %v4216, %v1583
    %v4221 = vmul.f32 %v4219, %v1583
    %v4222 = vsub.f32 %v4210, %v4220
    %v4223 = vsub.f32 %v4211, %v4221
    %v4224 = vmul.f32 %v4222, %v4222
    %v4225 = vmul.f32 %v4223, %v4223
    %v4226 = vsel %vm642, %v4224, 0.0
    %4227 = vadd.xlane.f32.xlu0 %v4226
    %v4228 = vpop.xlane.xlu0 %4227
    %v4229 = vsel %vm642, %v4225, 0.0
    %4230 = vadd.xlane.f32.xlu0 %v4229
    %v4231 = vpop.xlane.xlu0 %4230
    %v4232 = vmul.f32 %v4228, %v1583
    %v4233 = vmul.f32 %v4231, %v1583
    %v4234 = vadd.f32 %v4232, 1e-05
    %v4235 = vadd.f32 %v4233, 1e-05
    %v4236 = vrsqrt.pop %v4234
    %v4237 = vrsqrt.pop %v4235
    %v4238 = vmul.f32 %v4222, %v4236
    %v4239 = vmul.f32 %v4223, %v4237
    %v4241 = vlaneseq
    %v4242 = vshrl.u32 %v4241, 7
    %v4243 = vsub.s32 0, %v4242
    %v4244 = vrot.slane %v4212, %v4243
    %v4246 = vmul.f32 %v4238, %v4244
    %v4247 = vmul.f32 %v4239, %v4244
    %v4249 = vlaneseq
    %v4250 = vshrl.u32 %v4249, 7
    %v4251 = vsub.s32 0, %v4250
    %v4252 = vrot.slane %v4213, %v4251
    %v4254 = vadd.f32 %v4246, %v4252
    %v4255 = vadd.f32 %v4247, %v4252
    %v4256 = vld [vmem:[#allocation45] sm:$0xff]
    %v4257 = vld [vmem:[#allocation45 + $0x8] sm:$0xff]
    %v4258 = vld [vmem:[#allocation45 + $0x10] sm:$0xff]
    %v4259 = vld [vmem:[#allocation45 + $0x18] sm:$0xff]
    %v4260 = vld [vmem:[#allocation43] sm:$0x1]
    %v4262 = vlaneseq
    %v4263 = vshrl.u32 %v4262, 7
    %v4264 = vsub.s32 0, %v4263
    %v4265 = vrot.slane %v4260, %v4264
    %v4268 = vsel %vm642, %v4254, 0
    %v4271 = vsel %vm642, %v4255, 0
    %4273 = vmatprep.subr.mxu0 0.0
    %4274 = vmatpush1.msra.mxu0 %v4256
    %4275 = vmatprep.subr.mxu0 0.0
    %4276 = vmatpush1.msra.mxu0 %v4257
    %4277 = vmatprep.subr.mxu0 0.0
    %4278 = vmatpush1.msra.mxu0 %v4258
    %4279 = vmatprep.subr.mxu0 0.0
    %4280 = vmatpush1.msra.mxu0 %v4259
    %4281 = vmatprep.subr.mxu0 0.0
    %4282 = vmatpush1.msra.mxu0 0.0
    %4283 = vmatprep.subr.mxu0 0.0
    %4284 = vmatpush1.msra.mxu0 0.0
    %4285 = vmatprep.subr.mxu0 0.0
    %4286 = vmatpush1.msra.mxu0 0.0
    %4287 = vmatprep.subr.mxu0 0.0
    %4288 = vmatpush1.msra.mxu0 0.0
    %4289 = vmatprep.subr.mxu0 0.0
    %4290 = vmatpush1.msra.mxu0 0.0
    %4291 = vmatprep.subr.mxu0 0.0
    %4292 = vmatpush1.msra.mxu0 0.0
    %4293 = vmatprep.subr.mxu0 0.0
    %4294 = vmatpush1.msra.mxu0 0.0
    %4295 = vmatprep.subr.mxu0 0.0
    %4296 = vmatpush1.msra.mxu0 0.0
    %4297 = vmatprep.subr.mxu0 0.0
    %4298 = vmatpush1.msra.mxu0 0.0
    %4299 = vmatprep.subr.mxu0 0.0
    %4300 = vmatpush1.msra.mxu0 0.0
    %4301 = vmatprep.subr.mxu0 0.0
    %4302 = vmatpush1.msra.mxu0 0.0
    %4303 = vmatprep.subr.mxu0 0.0
    %4304 = vmatpush1.msra.mxu0 0.0
    %4305 = vmatprep.subr.mxu0 0.0
    %4306 = vmatpush1.msra.mxu0 0.0
    %4307 = vmatprep.subr.mxu0 0.0
    %4308 = vmatpush1.msra.mxu0 0.0
    %4309 = vmatprep.subr.mxu0 0.0
    %4310 = vmatpush1.msra.mxu0 0.0
    %4311 = vmatprep.subr.mxu0 0.0
    %4312 = vmatpush1.msra.mxu0 0.0
    %4313 = vmatprep.subr.mxu0 0.0
    %4314 = vmatpush1.msra.mxu0 0.0
    %4315 = vmatprep.subr.mxu0 0.0
    %4316 = vmatpush1.msra.mxu0 0.0
    %4317 = vmatprep.subr.mxu0 0.0
    %4318 = vmatpush1.msra.mxu0 0.0
    %4319 = vmatprep.subr.mxu0 0.0
    %4320 = vmatpush1.msra.mxu0 0.0
    %4321 = vmatprep.subr.mxu0 0.0
    %4322 = vmatpush1.msra.mxu0 0.0
    %4323 = vmatprep.subr.mxu0 0.0
    %4324 = vmatpush1.msra.mxu0 0.0
    %4325 = vmatprep.subr.mxu0 0.0
    %4326 = vmatpush1.msra.mxu0 0.0
    %4327 = vmatprep.subr.mxu0 0.0
    %4328 = vmatpush1.msra.mxu0 0.0
    %4329 = vmatprep.subr.mxu0 0.0
    %4330 = vmatpush1.msra.mxu0 0.0
    %4331 = vmatprep.subr.mxu0 0.0
    %4332 = vmatpush1.msra.mxu0 0.0
    %4333 = vmatprep.subr.mxu0 0.0
    %4334 = vmatpush1.msra.mxu0 0.0
    %4335 = vmatprep.subr.mxu0 0.0
    %4336 = vmatpush1.msra.mxu0 0.0
    %4337 = vmatprep.mubr.f32.mxu0 0.0
    %4338 = vmatmul.mubr.f32.gmra.mrb[0].mxu0 %v4268
    %v4339 = vpop.f32.mrb[0].mxu0
    %v4340 = vadd.f32 %v4265, %v4339
    %v4341 = vpop.f32.mrb[0].mxu0
    %4342 = vmatprep.mubr.f32.mxu0 0.0
    %4343 = vmatmul.mubr.f32.gmra.mrb[0].mxu0 %v4271
    %v4344 = vpop.f32.mrb[0].mxu0
    %v4345 = vadd.f32 %v4265, %v4344
    %v4346 = vpop.f32.mrb[0].mxu0
    %4347 = vdwg.mxu0
    %4348 = vst [vmem:[%s95] sm:$0xff] %v4340
    %4349 = vst [vmem:[%s95 + $0x8] sm:$0xff] %v4345
    // Predicated region
    $region306: #{transformer_forward.1} parent=1 // pred_check
      _
    $region307: #{transformer_forward.1} parent=1 // pred_check_branch
      %4351 = sbr.rel (0) target = $region309
    $region308: #{transformer_forward.1} parent=1 // pred_region
      _
    $region309: #{transformer_forward.1} parent=1 // pred_fallthru
      _
    // Predicated region
    $region310: #{transformer_forward.1} parent=1 // pred_check
      _
    $region311: #{transformer_forward.1} parent=1 // pred_check_branch
      %4353 = sbr.rel (0) target = $region313
    $region312: #{transformer_forward.1} parent=1 // pred_region
      _
    $region313: #{transformer_forward.1} parent=1 // pred_fallthru
      _
    %4354 = vsyncpa [#allocation3], 1
    %4355 = vsyncpa [#allocation5], 1
    %4356 = vsyncpa [#allocation8], 1
    %4357 = vsyncpa [#allocation11], 1
    %4358 = vsyncpa [#allocation14], 1
    %4359 = vsyncpa [#allocation17], 1
    %4360 = vsyncpa [#allocation20], 1
    %4361 = vsyncpa [#allocation23], 1
    %4362 = vsyncpa [#allocation26], 1
    %4363 = vsyncpa [#allocation29], 1
    %4364 = vsyncpa [#allocation32], 1
    %4365 = vsyncpa [#allocation35], 1
    %4366 = vsyncpa [#allocation38], 1
    %4367 = vsyncpa [#allocation41], 1
    %4368 = vsyncpa [#allocation44], 1

</llo_original>
